<compile_context>
chip_gen: v6e
topology: v6e:2x2x1
jax: 0.10.0
libtpu: 0.0.40
codegen_flags: <defaults>
</compile_context>

<pallas_src>
import jax
import jax.numpy as jnp
from jax import lax
from jax.experimental import pallas as pl
from jax.experimental.pallas import tpu as pltpu

_LN_EPS = 1e-5  # PyTorch nn.LayerNorm default


# ----------------------------- Pallas kernel -------------------------------

def _make_preprocessor_kernel(num_layers):
    """Kernel computing the full fused MLP stack for one row tile of x."""

    def kernel(x_ref, *refs):
        o_ref = refs[-1]
        p = refs[:-1]                      # 4 refs per layer: W, b, gamma, beta

        h = x_ref[...]                     # f32 row tile
        for l in range(num_layers):        # unrolled; all layers fused in-VMEM
            w_ref, b_ref, g_ref, be_ref = p[4 * l: 4 * l + 4]

            # Linear: bf16 operands on the MXU, f32 accumulation + f32 bias.
            z = jnp.dot(h.astype(jnp.bfloat16), w_ref[...],
                        preferred_element_type=jnp.float32)
            z = z + b_ref[...]

            # LayerNorm over the channel (lane) dim, biased variance (PyTorch),
            # one-pass stats: two independent XLU reductions, var = E[x^2]-mu^2.
            inv_h = 1.0 / z.shape[-1]
            s1 = jnp.sum(z, axis=-1, keepdims=True)
            s2 = jnp.sum(z * z, axis=-1, keepdims=True)
            mu = s1 * inv_h
            var = jnp.maximum(s2 * inv_h - mu * mu, 0.0)
            d = z - mu
            h = d * lax.rsqrt(var + _LN_EPS) * g_ref[...] + be_ref[...]

            # ReLU.
            h = jnp.maximum(h, 0.0)
            # Dropout: identity in eval mode (see TODO at top of file).

        o_ref[...] = h.astype(o_ref.dtype)

    return kernel


# ------------------------------ wrapper -------------------------------------

def preprocessor_forward(x, params, *, row_tile=512, out_dtype=jnp.float32):
    """Fused PreProcessor.forward.

    x:      [N, in_channels] float32
    params: list of (W [F_in, H], b [H], gamma [H], beta [H]) per layer
    """
    n, f_in = x.shape
    hidden = params[0][0].shape[1]
    num_layers = len(params)

    # --- host-side layout prep ----------------------------------------------
    # Lane-dense input: zero-pad in_channels up to a multiple of 128 (W0 rows
    # padded to match -> numerically a no-op, full vreg loads + full-K MXU pass).
    f_pad = max(128, ((f_in + 127) // 128) * 128)
    if f_pad != f_in:
        x = jnp.pad(x, ((0, 0), (0, f_pad - f_in)))

    # Keep >=4 grid steps when N allows it (so both v7x TCs get >=2 pipelined
    # steps); floor the tile at 128 rows.
    while row_tile > 128 and pl.cdiv(n, row_tile) < 4:
        row_tile //= 2
    n_pad = pl.cdiv(n, row_tile) * row_tile
    if n_pad != n:
        x = jnp.pad(x, ((0, n_pad - n), (0, 0)))   # ragged N: pad, slice at end

    # --- BlockSpecs / flattened params ---------------------------------------
    # Layer-invariant parameters use constant index maps -> DMA'd once and
    # VMEM-resident across the whole row-tile grid.  Weights travel as bf16
    # (MXU operand dtype), biases / LN params as f32 (1, H) lane-dense rows.
    in_specs = [pl.BlockSpec((row_tile, f_pad), lambda i: (i, 0))]
    flat_params = []
    for li, (w, b, g, be) in enumerate(params):
        w = w.astype(jnp.float32)
        if li == 0 and f_pad != f_in:
            w = jnp.pad(w, ((0, f_pad - f_in), (0, 0)))
        w = w.astype(jnp.bfloat16)
        flat_params.extend([
            w,
            b.reshape(1, hidden).astype(jnp.float32),
            g.reshape(1, hidden).astype(jnp.float32),
            be.reshape(1, hidden).astype(jnp.float32),
        ])
        in_specs.extend([
            pl.BlockSpec(w.shape, lambda i: (0, 0)),
            pl.BlockSpec((1, hidden), lambda i: (0, 0)),
            pl.BlockSpec((1, hidden), lambda i: (0, 0)),
            pl.BlockSpec((1, hidden), lambda i: (0, 0)),
        ])

    # --- VMEM budget (explicit; must fit v7x's 64 MiB) ------------------------
    param_bytes = sum(flat_params[4 * li].size * 2 + 3 * hidden * 4
                      for li in range(num_layers))
    act_bytes = 2 * row_tile * (f_pad + hidden) * 4          # double-buffered in/out
    tmp_bytes = 6 * row_tile * hidden * 4                    # f32 epilogue temporaries
    vmem_bytes = act_bytes + 2 * param_bytes + tmp_bytes
    vmem_bytes = int(min(64 << 20, max(2 * vmem_bytes, 16 << 20)))

    # --- cost estimate for the XLA scheduler ----------------------------------
    out_itemsize = jnp.dtype(out_dtype).itemsize
    flops = 2 * n_pad * (f_pad * hidden + (num_layers - 1) * hidden * hidden)
    flops += 8 * n_pad * hidden * num_layers                 # bias/LN/ReLU epilogue
    cost = pl.CostEstimate(
        flops=int(flops),
        transcendentals=int(n_pad * num_layers),             # one rsqrt per row/layer
        bytes_accessed=int(n_pad * f_pad * 4 + n_pad * hidden * out_itemsize
                           + param_bytes),
    )

    kernel = _make_preprocessor_kernel(num_layers)
    out = pl.pallas_call(
        kernel,
        out_shape=jax.ShapeDtypeStruct((n_pad, hidden), out_dtype),
        grid=(n_pad // row_tile,),
        in_specs=in_specs,
        out_specs=pl.BlockSpec((row_tile, hidden), lambda i: (i, 0)),
        compiler_params=pltpu.CompilerParams(
            # Row tiles are independent -> megacore-shardable on v7x.
            dimension_semantics=("parallel",),
            vmem_limit_bytes=vmem_bytes),
        cost_estimate=cost,
    )(x, *flat_params)

    return out[:n] if n_pad != n else out


# ------------------------------ JAX glue ------------------------------------

def init_preprocessor_params(key, in_channels, hidden_channels, num_layers):
    """Deterministic init: Linear like torch (uniform +-1/sqrt(fan_in)),
    LayerNorm gamma/beta perturbed so the affine path is actually tested."""
    params = []
    for layer in range(num_layers):
        fan_in = in_channels if layer == 0 else hidden_channels
        key, kw, kb, kg, kbe = jax.random.split(key, 5)
        limit = 1.0 / (fan_in ** 0.5)
        w = jax.random.uniform(kw, (fan_in, hidden_channels), jnp.float32,
                               -limit, limit)
        b = jax.random.uniform(kb, (hidden_channels,), jnp.float32,
                               -limit, limit)
        g = 1.0 + 0.1 * jax.random.normal(kg, (hidden_channels,), jnp.float32)
        be = 0.1 * jax.random.normal(kbe, (hidden_channels,), jnp.float32)
        params.append((w, b, g, be))
    return params


def _reference_forward(x, params, *, matmul_dtype=jnp.float32):
    """Pure-JAX reference (eval-mode PreProcessor).

    matmul_dtype=float32  -> exact PyTorch semantics.
    matmul_dtype=bfloat16 -> same operand rounding as the kernel's MXU path
                             (f32 accumulation), for the tight comparison.
    """
    h = x.astype(jnp.float32)
    for (w, b, g, be) in params:
        h = jnp.dot(h.astype(matmul_dtype), w.astype(matmul_dtype),
                    preferred_element_type=jnp.float32) + b
        mu = jnp.mean(h, axis=-1, keepdims=True)
        var = jnp.mean((h - mu) ** 2, axis=-1, keepdims=True)
        h = (h - mu) / jnp.sqrt(var + _LN_EPS) * g + be
        h = jax.nn.relu(h)
        # Dropout: identity in eval mode.
    return h


# ------------------------------- main ---------------------------------------

if __name__ == "__main__":
    N = 2048              # rows -> 4 grid steps of 512 (>=2 per v7x TensorCore)
    IN_CHANNELS = 64      # lane-padded to 128 inside the wrapper
    HIDDEN = 128          # lane-dense channel width (full 128-lane vregs)
    NUM_LAYERS = 2
    DROPOUT = 0.1         # inert in eval-mode forward

    key = jax.random.PRNGKey(0)
    kx, kp = jax.random.split(key)

    x = jax.random.normal(kx, (N, IN_CHANNELS), jnp.float32)
    params = init_preprocessor_params(kp, IN_CHANNELS, HIDDEN, NUM_LAYERS)

    out = preprocessor_forward(x, params)
    out = jax.block_until_ready(out)
    assert out.shape == (N, HIDDEN)

    # Tight check: reference with the same bf16 MXU operand rounding.
    ref_bf16 = jax.block_until_ready(
        _reference_forward(x, params, matmul_dtype=jnp.bfloat16))
    assert jnp.allclose(out, ref_bf16, atol=1e-3, rtol=1e-3), (
        float(jnp.max(jnp.abs(out - ref_bf16))))

    # Loose sanity check against exact f32 PyTorch semantics (bf16 operand
    # rounding is the only difference).
    ref_f32 = jax.block_until_ready(
        _reference_forward(x, params, matmul_dtype=jnp.float32))
    assert jnp.allclose(out, ref_f32, atol=1e-1, rtol=1e-1), (
        float(jnp.max(jnp.abs(out - ref_f32))))

    print("KERNEL_OK")
</pallas_src>

<mosaic_0001>
module attributes {stable_mosaic.version = 11 : i64} {
  func.func @kernel(%arg0: i32, %arg1: memref<512x128xf32, #tpu.memory_space<vmem>>, %arg2: memref<128x128xbf16, #tpu.memory_space<vmem>>, %arg3: memref<1x128xf32, #tpu.memory_space<vmem>>, %arg4: memref<1x128xf32, #tpu.memory_space<vmem>>, %arg5: memref<1x128xf32, #tpu.memory_space<vmem>>, %arg6: memref<128x128xbf16, #tpu.memory_space<vmem>>, %arg7: memref<1x128xf32, #tpu.memory_space<vmem>>, %arg8: memref<1x128xf32, #tpu.memory_space<vmem>>, %arg9: memref<1x128xf32, #tpu.memory_space<vmem>>, %arg10: memref<512x128xf32, #tpu.memory_space<vmem>>) attributes {dimension_semantics = [#tpu.dimension_semantics<parallel>], iteration_bounds = array<i64: 4>, scalar_prefetch = 0 : i64, scratch_operands = 0 : i64, tpu.core_type = #tpu.core_type<tc>, window_params = [{transform_indices = @transform_0, window_bounds = array<i64: 512, 128>}, {pipeline_mode = #tpu.pipeline_mode<synchronous>, transform_indices = @transform_1, window_bounds = array<i64: 128, 128>}, {pipeline_mode = #tpu.pipeline_mode<synchronous>, transform_indices = @transform_2, window_bounds = array<i64: 1, 128>}, {pipeline_mode = #tpu.pipeline_mode<synchronous>, transform_indices = @transform_3, window_bounds = array<i64: 1, 128>}, {pipeline_mode = #tpu.pipeline_mode<synchronous>, transform_indices = @transform_4, window_bounds = array<i64: 1, 128>}, {pipeline_mode = #tpu.pipeline_mode<synchronous>, transform_indices = @transform_5, window_bounds = array<i64: 128, 128>}, {pipeline_mode = #tpu.pipeline_mode<synchronous>, transform_indices = @transform_6, window_bounds = array<i64: 1, 128>}, {pipeline_mode = #tpu.pipeline_mode<synchronous>, transform_indices = @transform_7, window_bounds = array<i64: 1, 128>}, {pipeline_mode = #tpu.pipeline_mode<synchronous>, transform_indices = @transform_8, window_bounds = array<i64: 1, 128>}, {transform_indices = @transform_9, window_bounds = array<i64: 512, 128>}]} {
    %c0 = arith.constant 0 : index
    %c0_0 = arith.constant 0 : index
    %0 = vector.load %arg1[%c0, %c0_0] : memref<512x128xf32, #tpu.memory_space<vmem>>, vector<512x128xf32>
    %1 = arith.truncf %0 : vector<512x128xf32> to vector<512x128xbf16>
    %c0_1 = arith.constant 0 : index
    %c0_2 = arith.constant 0 : index
    %2 = vector.load %arg2[%c0_1, %c0_2] : memref<128x128xbf16, #tpu.memory_space<vmem>>, vector<128x128xbf16>
    %cst = arith.constant dense<0.000000e+00> : vector<512x128xf32>
    %3 = tpu.matmul %1, %2, %cst {dimension_numbers = #tpu.dot_dimension_numbers<[1], [0], [0], [1], [0, 0, 1, 1], [], []>} : vector<512x128xbf16>, vector<128x128xbf16>, vector<512x128xf32> -> vector<512x128xf32>
    %c0_3 = arith.constant 0 : index
    %c0_4 = arith.constant 0 : index
    %4 = vector.load %arg3[%c0_3, %c0_4] : memref<1x128xf32, #tpu.memory_space<vmem>>, vector<1x128xf32>
    %5 = vector.broadcast %4 : vector<1x128xf32> to vector<512x128xf32>
    %6 = arith.addf %3, %5 : vector<512x128xf32>
    %cst_5 = arith.constant dense<0.000000e+00> : vector<512xf32>
    %7 = vector.multi_reduction <add>, %6, %cst_5 [1] : vector<512x128xf32> to vector<512xf32>
    %8 = vector.shape_cast %7 : vector<512xf32> to vector<512x1xf32>
    %9 = arith.mulf %6, %6 : vector<512x128xf32>
    %cst_6 = arith.constant dense<0.000000e+00> : vector<512xf32>
    %10 = vector.multi_reduction <add>, %9, %cst_6 [1] : vector<512x128xf32> to vector<512xf32>
    %11 = vector.shape_cast %10 : vector<512xf32> to vector<512x1xf32>
    %cst_7 = arith.constant 7.812500e-03 : f32
    %12 = vector.broadcast %cst_7 : f32 to vector<512x1xf32>
    %13 = arith.mulf %8, %12 : vector<512x1xf32>
    %cst_8 = arith.constant 7.812500e-03 : f32
    %14 = vector.broadcast %cst_8 : f32 to vector<512x1xf32>
    %15 = arith.mulf %11, %14 : vector<512x1xf32>
    %16 = arith.mulf %13, %13 : vector<512x1xf32>
    %17 = arith.subf %15, %16 : vector<512x1xf32>
    %cst_9 = arith.constant 0.000000e+00 : f32
    %18 = vector.broadcast %cst_9 : f32 to vector<512x1xf32>
    %19 = arith.maximumf %17, %18 : vector<512x1xf32>
    %20 = vector.broadcast %13 : vector<512x1xf32> to vector<512x128xf32>
    %21 = arith.subf %6, %20 : vector<512x128xf32>
    %cst_10 = arith.constant 9.99999974E-6 : f32
    %22 = vector.broadcast %cst_10 : f32 to vector<512x1xf32>
    %23 = arith.addf %19, %22 : vector<512x1xf32>
    %24 = math.rsqrt %23 : vector<512x1xf32>
    %25 = vector.broadcast %24 : vector<512x1xf32> to vector<512x128xf32>
    %26 = arith.mulf %21, %25 : vector<512x128xf32>
    %c0_11 = arith.constant 0 : index
    %c0_12 = arith.constant 0 : index
    %27 = vector.load %arg4[%c0_11, %c0_12] : memref<1x128xf32, #tpu.memory_space<vmem>>, vector<1x128xf32>
    %28 = vector.broadcast %27 : vector<1x128xf32> to vector<512x128xf32>
    %29 = arith.mulf %26, %28 : vector<512x128xf32>
    %c0_13 = arith.constant 0 : index
    %c0_14 = arith.constant 0 : index
    %30 = vector.load %arg5[%c0_13, %c0_14] : memref<1x128xf32, #tpu.memory_space<vmem>>, vector<1x128xf32>
    %31 = vector.broadcast %30 : vector<1x128xf32> to vector<512x128xf32>
    %32 = arith.addf %29, %31 : vector<512x128xf32>
    %cst_15 = arith.constant 0.000000e+00 : f32
    %33 = vector.broadcast %cst_15 : f32 to vector<512x128xf32>
    %34 = arith.maximumf %32, %33 : vector<512x128xf32>
    %35 = arith.truncf %34 : vector<512x128xf32> to vector<512x128xbf16>
    %c0_16 = arith.constant 0 : index
    %c0_17 = arith.constant 0 : index
    %36 = vector.load %arg6[%c0_16, %c0_17] : memref<128x128xbf16, #tpu.memory_space<vmem>>, vector<128x128xbf16>
    %cst_18 = arith.constant dense<0.000000e+00> : vector<512x128xf32>
    %37 = tpu.matmul %35, %36, %cst_18 {dimension_numbers = #tpu.dot_dimension_numbers<[1], [0], [0], [1], [0, 0, 1, 1], [], []>} : vector<512x128xbf16>, vector<128x128xbf16>, vector<512x128xf32> -> vector<512x128xf32>
    %c0_19 = arith.constant 0 : index
    %c0_20 = arith.constant 0 : index
    %38 = vector.load %arg7[%c0_19, %c0_20] : memref<1x128xf32, #tpu.memory_space<vmem>>, vector<1x128xf32>
    %39 = vector.broadcast %38 : vector<1x128xf32> to vector<512x128xf32>
    %40 = arith.addf %37, %39 : vector<512x128xf32>
    %cst_21 = arith.constant dense<0.000000e+00> : vector<512xf32>
    %41 = vector.multi_reduction <add>, %40, %cst_21 [1] : vector<512x128xf32> to vector<512xf32>
    %42 = vector.shape_cast %41 : vector<512xf32> to vector<512x1xf32>
    %43 = arith.mulf %40, %40 : vector<512x128xf32>
    %cst_22 = arith.constant dense<0.000000e+00> : vector<512xf32>
    %44 = vector.multi_reduction <add>, %43, %cst_22 [1] : vector<512x128xf32> to vector<512xf32>
    %45 = vector.shape_cast %44 : vector<512xf32> to vector<512x1xf32>
    %cst_23 = arith.constant 7.812500e-03 : f32
    %46 = vector.broadcast %cst_23 : f32 to vector<512x1xf32>
    %47 = arith.mulf %42, %46 : vector<512x1xf32>
    %cst_24 = arith.constant 7.812500e-03 : f32
    %48 = vector.broadcast %cst_24 : f32 to vector<512x1xf32>
    %49 = arith.mulf %45, %48 : vector<512x1xf32>
    %50 = arith.mulf %47, %47 : vector<512x1xf32>
    %51 = arith.subf %49, %50 : vector<512x1xf32>
    %cst_25 = arith.constant 0.000000e+00 : f32
    %52 = vector.broadcast %cst_25 : f32 to vector<512x1xf32>
    %53 = arith.maximumf %51, %52 : vector<512x1xf32>
    %54 = vector.broadcast %47 : vector<512x1xf32> to vector<512x128xf32>
    %55 = arith.subf %40, %54 : vector<512x128xf32>
    %cst_26 = arith.constant 9.99999974E-6 : f32
    %56 = vector.broadcast %cst_26 : f32 to vector<512x1xf32>
    %57 = arith.addf %53, %56 : vector<512x1xf32>
    %58 = math.rsqrt %57 : vector<512x1xf32>
    %59 = vector.broadcast %58 : vector<512x1xf32> to vector<512x128xf32>
    %60 = arith.mulf %55, %59 : vector<512x128xf32>
    %c0_27 = arith.constant 0 : index
    %c0_28 = arith.constant 0 : index
    %61 = vector.load %arg8[%c0_27, %c0_28] : memref<1x128xf32, #tpu.memory_space<vmem>>, vector<1x128xf32>
    %62 = vector.broadcast %61 : vector<1x128xf32> to vector<512x128xf32>
    %63 = arith.mulf %60, %62 : vector<512x128xf32>
    %c0_29 = arith.constant 0 : index
    %c0_30 = arith.constant 0 : index
    %64 = vector.load %arg9[%c0_29, %c0_30] : memref<1x128xf32, #tpu.memory_space<vmem>>, vector<1x128xf32>
    %65 = vector.broadcast %64 : vector<1x128xf32> to vector<512x128xf32>
    %66 = arith.addf %63, %65 : vector<512x128xf32>
    %cst_31 = arith.constant 0.000000e+00 : f32
    %67 = vector.broadcast %cst_31 : f32 to vector<512x128xf32>
    %68 = arith.maximumf %66, %67 : vector<512x128xf32>
    %c0_32 = arith.constant 0 : index
    %c0_33 = arith.constant 0 : index
    %69 = vector.load %arg10[%c0_32, %c0_33] : memref<512x128xf32, #tpu.memory_space<vmem>>, vector<512x128xf32>
    tpu.vector_store %arg10[%c0_32, %c0_33], %68 {strides = array<i32>} : memref<512x128xf32, #tpu.memory_space<vmem>>, vector<512x128xf32>,
    return
  }
  func.func @transform_0(%arg0: i32) -> (i32, i32) {
    %c0_i32 = arith.constant 0 : i32
    %c0_i32_0 = arith.constant 0 : i32
    return %arg0, %c0_i32 : i32, i32
  }
  func.func @transform_1(%arg0: i32) -> (i32, i32) {
    %c0_i32 = arith.constant 0 : i32
    %c0_i32_0 = arith.constant 0 : i32
    %c0_i32_1 = arith.constant 0 : i32
    return %c0_i32, %c0_i32_0 : i32, i32
  }
  func.func @transform_2(%arg0: i32) -> (i32, i32) {
    %c0_i32 = arith.constant 0 : i32
    %c0_i32_0 = arith.constant 0 : i32
    %c0_i32_1 = arith.constant 0 : i32
    return %c0_i32, %c0_i32_0 : i32, i32
  }
  func.func @transform_3(%arg0: i32) -> (i32, i32) {
    %c0_i32 = arith.constant 0 : i32
    %c0_i32_0 = arith.constant 0 : i32
    %c0_i32_1 = arith.constant 0 : i32
    return %c0_i32, %c0_i32_0 : i32, i32
  }
  func.func @transform_4(%arg0: i32) -> (i32, i32) {
    %c0_i32 = arith.constant 0 : i32
    %c0_i32_0 = arith.constant 0 : i32
    %c0_i32_1 = arith.constant 0 : i32
    return %c0_i32, %c0_i32_0 : i32, i32
  }
  func.func @transform_5(%arg0: i32) -> (i32, i32) {
    %c0_i32 = arith.constant 0 : i32
    %c0_i32_0 = arith.constant 0 : i32
    %c0_i32_1 = arith.constant 0 : i32
    return %c0_i32, %c0_i32_0 : i32, i32
  }
  func.func @transform_6(%arg0: i32) -> (i32, i32) {
    %c0_i32 = arith.constant 0 : i32
    %c0_i32_0 = arith.constant 0 : i32
    %c0_i32_1 = arith.constant 0 : i32
    return %c0_i32, %c0_i32_0 : i32, i32
  }
  func.func @transform_7(%arg0: i32) -> (i32, i32) {
    %c0_i32 = arith.constant 0 : i32
    %c0_i32_0 = arith.constant 0 : i32
    %c0_i32_1 = arith.constant 0 : i32
    return %c0_i32, %c0_i32_0 : i32, i32
  }
  func.func @transform_8(%arg0: i32) -> (i32, i32) {
    %c0_i32 = arith.constant 0 : i32
    %c0_i32_0 = arith.constant 0 : i32
    %c0_i32_1 = arith.constant 0 : i32
    return %c0_i32, %c0_i32_0 : i32, i32
  }
  func.func @transform_9(%arg0: i32) -> (i32, i32) {
    %c0_i32 = arith.constant 0 : i32
    %c0_i32_0 = arith.constant 0 : i32
    return %arg0, %c0_i32 : i32, i32
  }
}

</mosaic_0001>

<llo_original>
// kernel: tpu_custom_call.1
$region0: #{tpu_custom_call.1}
  #allocation0 [shape = 'u32[]', space=smem, size = 0x4, offset = 0x4, fixed_abs, tag = 'smem constant byte address 0x4 - core index']
  #allocation1 [shape = 'u32[144,128]{1,0:T(1,128)}', space=vmem, size = 0x12000, scoped, tag = 'internal scratch']
  %s0 = inlined_call_operand.hbm [shape: f32[2048,128], index: 0, kind: input, shape index: {}]
  %s1 = inlined_call_operand.hbm [shape: bf16[128,128], index: 1, kind: input, shape index: {}]
  %s2 = inlined_call_operand.vmem [shape: f32[1,128], index: 2, kind: input, shape index: {}]
  %s3 = inlined_call_operand.vmem [shape: f32[1,128], index: 3, kind: input, shape index: {}]
  %s4 = inlined_call_operand.vmem [shape: f32[1,128], index: 4, kind: input, shape index: {}]
  %s5 = inlined_call_operand.hbm [shape: bf16[128,128], index: 5, kind: input, shape index: {}]
  %s6 = inlined_call_operand.vmem [shape: f32[1,128], index: 6, kind: input, shape index: {}]
  %s7 = inlined_call_operand.vmem [shape: f32[1,128], index: 7, kind: input, shape index: {}]
  %s8 = inlined_call_operand.vmem [shape: f32[1,128], index: 8, kind: input, shape index: {}]
  %s9 = inlined_call_operand.hbm [shape: f32[2048,128], index: 9, kind: output, shape index: {}]
  %s10 = sld [smem:[#allocation0]]
  $region81: #{tpu_custom_call.1} parent=0
    _
  %s12 = ssub.s32 1, %s10
  %s13 = scalar_select 0, %s12, %s10
  $region1: #{tpu_custom_call.1} parent=0
    #allocation2 [shape = 'u8[524288]{0}', space=vmem, size = 0x80000, scoped, tag = 'input window, operand 0']
    #allocation3 [shape = 's32[2]{0}', space=sflag, size = 0x8, scoped, tag = 'scoped memory for tpu_custom_call.1']
    #allocation4 [shape = 's32[2]{0}', space=sflag, size = 0x8, scoped, tag = 'scoped memory for tpu_custom_call.1']
    #allocation5 [shape = 'u8[32768]{0}', space=vmem, size = 0x8000, scoped, tag = 'input window, operand 1, single buffered']
    #allocation6 [shape = 's32[1]{0}', space=sflag, size = 0x4, scoped, tag = 'scoped memory for tpu_custom_call.1']
    #allocation7 [shape = 'u8[32768]{0}', space=vmem, size = 0x8000, scoped, tag = 'input window, operand 5, single buffered']
    #allocation8 [shape = 'u8[524288]{0}', space=vmem, size = 0x80000, scoped, tag = 'output window, operand 0']
    %14 = vsyncpa [#allocation3], 0
    %s15 = scalar_lea.sflag [#allocation3], 1
    %16 = vsyncpa %s15, 0
    %17 = vsyncpa [#allocation6], 0
    %18 = vsyncpa [#allocation4], 0
    %s19 = scalar_lea.sflag [#allocation4], 1
    %20 = vsyncpa %s19, 0
    loop: start=0, step=1, limit=6
    $region2: #{tpu_custom_call.1} parent=1 // loop_pre_header
      _
    $region3: #{tpu_custom_call.1} parent=1 // loop_header
      %s22 = sphi 0, %s26
      %p23 = scmp.ge.s32.totalorder %s22, 6
      %s32 = sphi 0, %s34
      %s35 = sphi 0, %s32
      %s36 = sphi 0, %s35
      %s52 = sphi 0, %s36
      %s56 = sphi 0, %s56
      %s58 = sphi 0, %s56
      %s59 = sphi 0, %s58
      %s73 = sphi 0, %s59
      %s77 = sphi 0, %s77
      %s79 = sphi 0, %s77
      %s80 = sphi 0, %s79
      %s94 = sphi 0, %s80
      %s98 = sphi 0, %s98
      %s100 = sphi 0, %s98
      %s101 = sphi 0, %s100
      %s115 = sphi 0, %s101
      %s119 = sphi 0, %s119
      %s121 = sphi 0, %s119
      %s122 = sphi 0, %s121
      %s136 = sphi 0, %s122
      %s140 = sphi 0, %s140
      %s142 = sphi 0, %s140
      %s143 = sphi 0, %s142
      %s157 = sphi 0, %s143
      %s161 = sphi 0, %s161
      %s163 = sphi 0, %s161
      %s164 = sphi 0, %s163
      %s178 = sphi 0, %s164
      %s182 = sphi 0, %s182
      %s184 = sphi 0, %s182
      %s185 = sphi 0, %s184
      %s199 = sphi 0, %s185
      %s203 = sphi 0, %s203
      %s205 = sphi 0, %s203
      %s206 = sphi 0, %s205
      %s220 = sphi 0, %s206
      %s226 = sphi 0, %s228
      %s229 = sphi 0, %s226
      %s230 = sphi 0, %s229
      %s246 = sphi 0, %s230
    $region4: #{tpu_custom_call.1} parent=1 // loop_header_branch
      %25 = sbr.rel (%p23) target = $region8
    $region5: #{tpu_custom_call.1} parent=1 // loop_body
      %s27 = ssub.s32 %s22, 1
      %s28 = ssub.s32 %s22, 2
      %s29 = sadd.s32 %s22, 1
      %s30 = ssub.s32 %s22, %s29
      %p31 = scmp.eq.s32.totalorder %s30, 0
      %s33 = sadd.s32 %s32, 1
      %s34 = scalar_select %p31, %s32, %s33
      %p37 = pneg %p31
      %p38 = scmp.eq.s32.totalorder %s22, 3
      %p39 = por %p37, %p38
      %p40 = scmp.ne.s32.totalorder %s32, %s35
      %p41 = scmp.eq.s32.totalorder %s22, 0
      %p42 = por %p40, %p41
      %p43 = scmp.ne.s32.totalorder %s32, %s35
      %p44 = scmp.eq.s32.totalorder %s27, 3
      %p45 = por %p43, %p44
      %p46 = scmp.ne.s32.totalorder %s35, %s36
      %p47 = scmp.eq.s32.totalorder %s27, 0
      %p48 = por %p46, %p47
      %p49 = scmp.ne.s32.totalorder %s35, %s36
      %p50 = scmp.eq.s32.totalorder %s28, 3
      %p51 = por %p49, %p50
      %p53 = scmp.ne.s32.totalorder %s36, %s52
      %p54 = scmp.eq.s32.totalorder %s28, 0
      %p55 = por %p53, %p54
      %s57 = sadd.s32 %s56, 1
      %p60 = scmp.eq.s32.totalorder %s22, 3
      %p61 = scmp.ne.s32.totalorder %s56, %s58
      %p62 = scmp.eq.s32.totalorder %s22, 0
      %p63 = por %p61, %p62
      %p64 = scmp.ne.s32.totalorder %s56, %s58
      %p65 = scmp.eq.s32.totalorder %s27, 3
      %p66 = por %p64, %p65
      %p67 = scmp.ne.s32.totalorder %s58, %s59
      %p68 = scmp.eq.s32.totalorder %s27, 0
      %p69 = por %p67, %p68
      %p70 = scmp.ne.s32.totalorder %s58, %s59
      %p71 = scmp.eq.s32.totalorder %s28, 3
      %p72 = por %p70, %p71
      %p74 = scmp.ne.s32.totalorder %s59, %s73
      %p75 = scmp.eq.s32.totalorder %s28, 0
      %p76 = por %p74, %p75
      %s78 = sadd.s32 %s77, 1
      %p81 = scmp.eq.s32.totalorder %s22, 3
      %p82 = scmp.ne.s32.totalorder %s77, %s79
      %p83 = scmp.eq.s32.totalorder %s22, 0
      %p84 = por %p82, %p83
      %p85 = scmp.ne.s32.totalorder %s77, %s79
      %p86 = scmp.eq.s32.totalorder %s27, 3
      %p87 = por %p85, %p86
      %p88 = scmp.ne.s32.totalorder %s79, %s80
      %p89 = scmp.eq.s32.totalorder %s27, 0
      %p90 = por %p88, %p89
      %p91 = scmp.ne.s32.totalorder %s79, %s80
      %p92 = scmp.eq.s32.totalorder %s28, 3
      %p93 = por %p91, %p92
      %p95 = scmp.ne.s32.totalorder %s80, %s94
      %p96 = scmp.eq.s32.totalorder %s28, 0
      %p97 = por %p95, %p96
      %s99 = sadd.s32 %s98, 1
      %p102 = scmp.eq.s32.totalorder %s22, 3
      %p103 = scmp.ne.s32.totalorder %s98, %s100
      %p104 = scmp.eq.s32.totalorder %s22, 0
      %p105 = por %p103, %p104
      %p106 = scmp.ne.s32.totalorder %s98, %s100
      %p107 = scmp.eq.s32.totalorder %s27, 3
      %p108 = por %p106, %p107
      %p109 = scmp.ne.s32.totalorder %s100, %s101
      %p110 = scmp.eq.s32.totalorder %s27, 0
      %p111 = por %p109, %p110
      %p112 = scmp.ne.s32.totalorder %s100, %s101
      %p113 = scmp.eq.s32.totalorder %s28, 3
      %p114 = por %p112, %p113
      %p116 = scmp.ne.s32.totalorder %s101, %s115
      %p117 = scmp.eq.s32.totalorder %s28, 0
      %p118 = por %p116, %p117
      %s120 = sadd.s32 %s119, 1
      %p123 = scmp.eq.s32.totalorder %s22, 3
      %p124 = scmp.ne.s32.totalorder %s119, %s121
      %p125 = scmp.eq.s32.totalorder %s22, 0
      %p126 = por %p124, %p125
      %p127 = scmp.ne.s32.totalorder %s119, %s121
      %p128 = scmp.eq.s32.totalorder %s27, 3
      %p129 = por %p127, %p128
      %p130 = scmp.ne.s32.totalorder %s121, %s122
      %p131 = scmp.eq.s32.totalorder %s27, 0
      %p132 = por %p130, %p131
      %p133 = scmp.ne.s32.totalorder %s121, %s122
      %p134 = scmp.eq.s32.totalorder %s28, 3
      %p135 = por %p133, %p134
      %p137 = scmp.ne.s32.totalorder %s122, %s136
      %p138 = scmp.eq.s32.totalorder %s28, 0
      %p139 = por %p137, %p138
      %s141 = sadd.s32 %s140, 1
      %p144 = scmp.eq.s32.totalorder %s22, 3
      %p145 = scmp.ne.s32.totalorder %s140, %s142
      %p146 = scmp.eq.s32.totalorder %s22, 0
      %p147 = por %p145, %p146
      %p148 = scmp.ne.s32.totalorder %s140, %s142
      %p149 = scmp.eq.s32.totalorder %s27, 3
      %p150 = por %p148, %p149
      %p151 = scmp.ne.s32.totalorder %s142, %s143
      %p152 = scmp.eq.s32.totalorder %s27, 0
      %p153 = por %p151, %p152
      %p154 = scmp.ne.s32.totalorder %s142, %s143
      %p155 = scmp.eq.s32.totalorder %s28, 3
      %p156 = por %p154, %p155
      %p158 = scmp.ne.s32.totalorder %s143, %s157
      %p159 = scmp.eq.s32.totalorder %s28, 0
      %p160 = por %p158, %p159
      %s162 = sadd.s32 %s161, 1
      %p165 = scmp.eq.s32.totalorder %s22, 3
      %p166 = scmp.ne.s32.totalorder %s161, %s163
      %p167 = scmp.eq.s32.totalorder %s22, 0
      %p168 = por %p166, %p167
      %p169 = scmp.ne.s32.totalorder %s161, %s163
      %p170 = scmp.eq.s32.totalorder %s27, 3
      %p171 = por %p169, %p170
      %p172 = scmp.ne.s32.totalorder %s163, %s164
      %p173 = scmp.eq.s32.totalorder %s27, 0
      %p174 = por %p172, %p173
      %p175 = scmp.ne.s32.totalorder %s163, %s164
      %p176 = scmp.eq.s32.totalorder %s28, 3
      %p177 = por %p175, %p176
      %p179 = scmp.ne.s32.totalorder %s164, %s178
      %p180 = scmp.eq.s32.totalorder %s28, 0
      %p181 = por %p179, %p180
      %s183 = sadd.s32 %s182, 1
      %p186 = scmp.eq.s32.totalorder %s22, 3
      %p187 = scmp.ne.s32.totalorder %s182, %s184
      %p188 = scmp.eq.s32.totalorder %s22, 0
      %p189 = por %p187, %p188
      %p190 = scmp.ne.s32.totalorder %s182, %s184
      %p191 = scmp.eq.s32.totalorder %s27, 3
      %p192 = por %p190, %p191
      %p193 = scmp.ne.s32.totalorder %s184, %s185
      %p194 = scmp.eq.s32.totalorder %s27, 0
      %p195 = por %p193, %p194
      %p196 = scmp.ne.s32.totalorder %s184, %s185
      %p197 = scmp.eq.s32.totalorder %s28, 3
      %p198 = por %p196, %p197
      %p200 = scmp.ne.s32.totalorder %s185, %s199
      %p201 = scmp.eq.s32.totalorder %s28, 0
      %p202 = por %p200, %p201
      %s204 = sadd.s32 %s203, 1
      %p207 = scmp.eq.s32.totalorder %s22, 3
      %p208 = scmp.ne.s32.totalorder %s203, %s205
      %p209 = scmp.eq.s32.totalorder %s22, 0
      %p210 = por %p208, %p209
      %p211 = scmp.ne.s32.totalorder %s203, %s205
      %p212 = scmp.eq.s32.totalorder %s27, 3
      %p213 = por %p211, %p212
      %p214 = scmp.ne.s32.totalorder %s205, %s206
      %p215 = scmp.eq.s32.totalorder %s27, 0
      %p216 = por %p214, %p215
      %p217 = scmp.ne.s32.totalorder %s205, %s206
      %p218 = scmp.eq.s32.totalorder %s28, 3
      %p219 = por %p217, %p218
      %p221 = scmp.ne.s32.totalorder %s206, %s220
      %p222 = scmp.eq.s32.totalorder %s28, 0
      %p223 = por %p221, %p222
      %s224 = ssub.s32 %s22, %s29
      %p225 = scmp.eq.s32.totalorder %s224, 0
      %s227 = sadd.s32 %s226, 1
      %s228 = scalar_select %p225, %s226, %s227
      %p231 = pneg %p225
      %p232 = scmp.eq.s32.totalorder %s22, 3
      %p233 = por %p231, %p232
      %p234 = scmp.ne.s32.totalorder %s226, %s229
      %p235 = scmp.eq.s32.totalorder %s22, 0
      %p236 = por %p234, %p235
      %p237 = scmp.ne.s32.totalorder %s226, %s229
      %p238 = scmp.eq.s32.totalorder %s27, 3
      %p239 = por %p237, %p238
      %p240 = scmp.ne.s32.totalorder %s229, %s230
      %p241 = scmp.eq.s32.totalorder %s27, 0
      %p242 = por %p240, %p241
      %p243 = scmp.ne.s32.totalorder %s229, %s230
      %p244 = scmp.eq.s32.totalorder %s28, 3
      %p245 = por %p243, %p244
      %p247 = scmp.ne.s32.totalorder %s230, %s246
      %p248 = scmp.eq.s32.totalorder %s28, 0
      %p249 = por %p247, %p248
      %p250 = scmp.le.s32.totalorder 1, %s22
      %p251 = scmp.lt.s32.totalorder %s22, 5
      %p252 = pnand %p250, %p251
      %p253 = pneg %p252
      // Predicated region
      $region9: #{tpu_custom_call.1} parent=5 // pred_check
        _
      $region10: #{tpu_custom_call.1} parent=5 // pred_check_branch
        %255 = sbr.rel (%p252) target = $region12
      $region11: #{tpu_custom_call.1} parent=5 // pred_region
        %s256 = ssub.s32 %s22, 1
        // Predicated region
        $region13: #{tpu_custom_call.1} parent=11 // pred_check
          %p257 = pneg %p69
        $region14: #{tpu_custom_call.1} parent=11 // pred_check_branch
          %259 = sbr.rel (%p257) target = $region16
        $region15: #{tpu_custom_call.1} parent=11 // pred_region
          %s261 = ssub.s32 1024, 1024
          %262 = vsyncadd [#allocation6], %s261
          %s263 = sshll.u32 [#allocation5], 4
          %s264 = int_to_ptr.vmem [resolvable:$true] %s263
          %269 = dma.hbm_to_vmem [thread:$0]  %s1, 1024, %s264, [#allocation6], 64, 64, 4
        $region16: #{tpu_custom_call.1} parent=11 // pred_fallthru
          _
        // Predicated region
        $region17: #{tpu_custom_call.1} parent=11 // pred_check
          %p270 = pneg %p90
        $region18: #{tpu_custom_call.1} parent=11 // pred_check_branch
          %272 = sbr.rel (%p270) target = $region20
        $region19: #{tpu_custom_call.1} parent=11 // pred_region
          _
        $region20: #{tpu_custom_call.1} parent=11 // pred_fallthru
          _
        // Predicated region
        $region21: #{tpu_custom_call.1} parent=11 // pred_check
          %p273 = pneg %p111
        $region22: #{tpu_custom_call.1} parent=11 // pred_check_branch
          %275 = sbr.rel (%p273) target = $region24
        $region23: #{tpu_custom_call.1} parent=11 // pred_region
          _
        $region24: #{tpu_custom_call.1} parent=11 // pred_fallthru
          _
        // Predicated region
        $region25: #{tpu_custom_call.1} parent=11 // pred_check
          %p276 = pneg %p132
        $region26: #{tpu_custom_call.1} parent=11 // pred_check_branch
          %278 = sbr.rel (%p276) target = $region28
        $region27: #{tpu_custom_call.1} parent=11 // pred_region
          _
        $region28: #{tpu_custom_call.1} parent=11 // pred_fallthru
          _
        // Predicated region
        $region29: #{tpu_custom_call.1} parent=11 // pred_check
          %p279 = pneg %p153
        $region30: #{tpu_custom_call.1} parent=11 // pred_check_branch
          %281 = sbr.rel (%p279) target = $region32
        $region31: #{tpu_custom_call.1} parent=11 // pred_region
          %s283 = ssub.s32 1024, 1024
          %284 = vsyncadd [#allocation6], %s283
          %s285 = sshll.u32 [#allocation7], 4
          %s286 = int_to_ptr.vmem [resolvable:$true] %s285
          %291 = dma.hbm_to_vmem [thread:$0]  %s5, 1024, %s286, [#allocation6], 64, 64, 4
        $region32: #{tpu_custom_call.1} parent=11 // pred_fallthru
          _
        // Predicated region
        $region33: #{tpu_custom_call.1} parent=11 // pred_check
          %p292 = pneg %p174
        $region34: #{tpu_custom_call.1} parent=11 // pred_check_branch
          %294 = sbr.rel (%p292) target = $region36
        $region35: #{tpu_custom_call.1} parent=11 // pred_region
          _
        $region36: #{tpu_custom_call.1} parent=11 // pred_fallthru
          _
        // Predicated region
        $region37: #{tpu_custom_call.1} parent=11 // pred_check
          %p295 = pneg %p195
        $region38: #{tpu_custom_call.1} parent=11 // pred_check_branch
          %297 = sbr.rel (%p295) target = $region40
        $region39: #{tpu_custom_call.1} parent=11 // pred_region
          _
        $region40: #{tpu_custom_call.1} parent=11 // pred_fallthru
          _
        // Predicated region
        $region41: #{tpu_custom_call.1} parent=11 // pred_check
          %p298 = pneg %p216
        $region42: #{tpu_custom_call.1} parent=11 // pred_check_branch
          %300 = sbr.rel (%p298) target = $region44
        $region43: #{tpu_custom_call.1} parent=11 // pred_region
          _
        $region44: #{tpu_custom_call.1} parent=11 // pred_fallthru
          _
      $region12: #{tpu_custom_call.1} parent=5 // pred_fallthru
        _
      %p301 = scmp.lt.s32.totalorder %s22, 4
      // Predicated region
      $region45: #{tpu_custom_call.1} parent=5 // pred_check
        %p302 = pneg %p301
      $region46: #{tpu_custom_call.1} parent=5 // pred_check_branch
        %304 = sbr.rel (%p302) target = $region48
      $region47: #{tpu_custom_call.1} parent=5 // pred_region
        // Predicated region
        $region49: #{tpu_custom_call.1} parent=47 // pred_check
          %p305 = pneg %p42
        $region50: #{tpu_custom_call.1} parent=47 // pred_check_branch
          %307 = sbr.rel (%p305) target = $region52
        $region51: #{tpu_custom_call.1} parent=47 // pred_region
          %s308 = sand.u32 %s32, 1
          %s309 = scalar_lea.sflag [#allocation3], %s308
          %s310 = sand.u32 %s32, 1
          %s311 = smul.addr %s310, 512
          %s312 = scalar_lea.vmem [#allocation2], %s311
          %s313 = smul.u32 64, %s22
          %s315 = ssub.s32 8192, 8192
          %316 = vsyncadd %s309, %s315
          %s317 = smul.addr %s313, 128
          %s318 = scalar_lea.hbm %s0, %s317
          %s319 = sshll.u32 %s312, 4
          %s320 = int_to_ptr.vmem [resolvable:$true] %s319
          %325 = dma.hbm_to_vmem [thread:$0]  %s318, 8192, %s320, %s309, 128, 128, 8
        $region52: #{tpu_custom_call.1} parent=47 // pred_fallthru
          _
      $region48: #{tpu_custom_call.1} parent=5 // pred_fallthru
        _
      %p326 = scmp.le.s32.totalorder 1, %s22
      %p327 = scmp.lt.s32.totalorder %s22, 5
      %p328 = pnand %p326, %p327
      %p329 = pneg %p328
      // Predicated region
      $region53: #{tpu_custom_call.1} parent=5 // pred_check
        _
      $region54: #{tpu_custom_call.1} parent=5 // pred_check_branch
        %331 = sbr.rel (%p328) target = $region56
      $region55: #{tpu_custom_call.1} parent=5 // pred_region
        %s332 = ssub.s32 %s22, 1
        %s333 = sand.u32 %s35, 1
        %s334 = scalar_lea.sflag [#allocation3], %s333
        %s335 = sand.u32 %s35, 1
        %s336 = smul.addr %s335, 512
        %s337 = scalar_lea.vmem [#allocation2], %s336
        // Predicated region
        $region57: #{tpu_custom_call.1} parent=55 // pred_check
          %p338 = pneg %p48
        $region58: #{tpu_custom_call.1} parent=55 // pred_check_branch
          %340 = sbr.rel (%p338) target = $region60
        $region59: #{tpu_custom_call.1} parent=55 // pred_region
          %341 = dma.done %s334, 8192
        $region60: #{tpu_custom_call.1} parent=55 // pred_fallthru
          _
        // Predicated region
        $region61: #{tpu_custom_call.1} parent=55 // pred_check
          %p342 = pneg %p69
        $region62: #{tpu_custom_call.1} parent=55 // pred_check_branch
          %344 = sbr.rel (%p342) target = $region64
        $region63: #{tpu_custom_call.1} parent=55 // pred_region
          %345 = dma.done [#allocation6], 1024
        $region64: #{tpu_custom_call.1} parent=55 // pred_fallthru
          _
        // Predicated region
        $region65: #{tpu_custom_call.1} parent=55 // pred_check
          %p346 = pneg %p153
        $region66: #{tpu_custom_call.1} parent=55 // pred_check_branch
          %348 = sbr.rel (%p346) target = $region68
        $region67: #{tpu_custom_call.1} parent=55 // pred_region
          %349 = dma.done [#allocation6], 1024
        $region68: #{tpu_custom_call.1} parent=55 // pred_fallthru
          _
        %s350 = sand.u32 %s35, 1
        %s351 = scalar_lea.sflag [#allocation3], %s350
        %s352 = sand.u32 %s35, 1
        %s353 = smul.addr %s352, 512
        %s354 = scalar_lea.vmem [#allocation2], %s353
        %p355 = pneg %p48
        %p356 = pneg %p45
        %p357 = pneg %p69
        %p358 = pneg %p66
        %p359 = pneg %p90
        %p360 = pneg %p87
        %p361 = pneg %p111
        %p362 = pneg %p108
        %p363 = pneg %p132
        %p364 = pneg %p129
        %p365 = pneg %p153
        %p366 = pneg %p150
        %p367 = pneg %p174
        %p368 = pneg %p171
        %p369 = pneg %p195
        %p370 = pneg %p192
        %p371 = pneg %p216
        %p372 = pneg %p213
        %p373 = pneg %p242
        %p374 = pneg %p239
        %s375 = sand.u32 %s229, 1
        %s376 = scalar_lea.sflag [#allocation4], %s375
        %s377 = sand.u32 %s229, 1
        %s378 = smul.addr %s377, 512
        %s379 = scalar_lea.vmem [#allocation8], %s378
        %s380 = smul.u32 64, %s27
        %s381 = smul.u32 64, %s27
        %v383 = vld [vmem:[%s337] sm:$0xff]
        %v384 = vld [vmem:[%s337 + $0x8] sm:$0xff]
        %v385 = vld [vmem:[%s337 + $0x10] sm:$0xff]
        %v386 = vld [vmem:[%s337 + $0x18] sm:$0xff]
        %v387 = vld [vmem:[%s337 + $0x20] sm:$0xff]
        %v388 = vld [vmem:[%s337 + $0x28] sm:$0xff]
        %v389 = vld [vmem:[%s337 + $0x30] sm:$0xff]
        %v390 = vld [vmem:[%s337 + $0x38] sm:$0xff]
        %v391 = vld [vmem:[%s337 + $0x40] sm:$0xff]
        %v392 = vld [vmem:[%s337 + $0x48] sm:$0xff]
        %v393 = vld [vmem:[%s337 + $0x50] sm:$0xff]
        %v394 = vld [vmem:[%s337 + $0x58] sm:$0xff]
        %v395 = vld [vmem:[%s337 + $0x60] sm:$0xff]
        %v396 = vld [vmem:[%s337 + $0x68] sm:$0xff]
        %v397 = vld [vmem:[%s337 + $0x70] sm:$0xff]
        %v398 = vld [vmem:[%s337 + $0x78] sm:$0xff]
        %v399 = vld [vmem:[%s337 + $0x80] sm:$0xff]
        %v400 = vld [vmem:[%s337 + $0x88] sm:$0xff]
        %v401 = vld [vmem:[%s337 + $0x90] sm:$0xff]
        %v402 = vld [vmem:[%s337 + $0x98] sm:$0xff]
        %v403 = vld [vmem:[%s337 + $0xa0] sm:$0xff]
        %v404 = vld [vmem:[%s337 + $0xa8] sm:$0xff]
        %v405 = vld [vmem:[%s337 + $0xb0] sm:$0xff]
        %v406 = vld [vmem:[%s337 + $0xb8] sm:$0xff]
        %v407 = vld [vmem:[%s337 + $0xc0] sm:$0xff]
        %v408 = vld [vmem:[%s337 + $0xc8] sm:$0xff]
        %v409 = vld [vmem:[%s337 + $0xd0] sm:$0xff]
        %v410 = vld [vmem:[%s337 + $0xd8] sm:$0xff]
        %v411 = vld [vmem:[%s337 + $0xe0] sm:$0xff]
        %v412 = vld [vmem:[%s337 + $0xe8] sm:$0xff]
        %v413 = vld [vmem:[%s337 + $0xf0] sm:$0xff]
        %v414 = vld [vmem:[%s337 + $0xf8] sm:$0xff]
        %v415 = vld [vmem:[%s337 + $0x100] sm:$0xff]
        %v416 = vld [vmem:[%s337 + $0x108] sm:$0xff]
        %v417 = vld [vmem:[%s337 + $0x110] sm:$0xff]
        %v418 = vld [vmem:[%s337 + $0x118] sm:$0xff]
        %v419 = vld [vmem:[%s337 + $0x120] sm:$0xff]
        %v420 = vld [vmem:[%s337 + $0x128] sm:$0xff]
        %v421 = vld [vmem:[%s337 + $0x130] sm:$0xff]
        %v422 = vld [vmem:[%s337 + $0x138] sm:$0xff]
        %v423 = vld [vmem:[%s337 + $0x140] sm:$0xff]
        %v424 = vld [vmem:[%s337 + $0x148] sm:$0xff]
        %v425 = vld [vmem:[%s337 + $0x150] sm:$0xff]
        %v426 = vld [vmem:[%s337 + $0x158] sm:$0xff]
        %v427 = vld [vmem:[%s337 + $0x160] sm:$0xff]
        %v428 = vld [vmem:[%s337 + $0x168] sm:$0xff]
        %v429 = vld [vmem:[%s337 + $0x170] sm:$0xff]
        %v430 = vld [vmem:[%s337 + $0x178] sm:$0xff]
        %v431 = vld [vmem:[%s337 + $0x180] sm:$0xff]
        %v432 = vld [vmem:[%s337 + $0x188] sm:$0xff]
        %v433 = vld [vmem:[%s337 + $0x190] sm:$0xff]
        %v434 = vld [vmem:[%s337 + $0x198] sm:$0xff]
        %v435 = vld [vmem:[%s337 + $0x1a0] sm:$0xff]
        %v436 = vld [vmem:[%s337 + $0x1a8] sm:$0xff]
        %v437 = vld [vmem:[%s337 + $0x1b0] sm:$0xff]
        %v438 = vld [vmem:[%s337 + $0x1b8] sm:$0xff]
        %v439 = vld [vmem:[%s337 + $0x1c0] sm:$0xff]
        %v440 = vld [vmem:[%s337 + $0x1c8] sm:$0xff]
        %v441 = vld [vmem:[%s337 + $0x1d0] sm:$0xff]
        %v442 = vld [vmem:[%s337 + $0x1d8] sm:$0xff]
        %v443 = vld [vmem:[%s337 + $0x1e0] sm:$0xff]
        %v444 = vld [vmem:[%s337 + $0x1e8] sm:$0xff]
        %v445 = vld [vmem:[%s337 + $0x1f0] sm:$0xff]
        %v446 = vld [vmem:[%s337 + $0x1f8] sm:$0xff]
        %v447 = vpack.c.bf16 %v384, %v383
        %v448 = vpack.c.bf16 %v386, %v385
        %v449 = vpack.c.bf16 %v388, %v387
        %v450 = vpack.c.bf16 %v390, %v389
        %v451 = vpack.c.bf16 %v392, %v391
        %v452 = vpack.c.bf16 %v394, %v393
        %v453 = vpack.c.bf16 %v396, %v395
        %v454 = vpack.c.bf16 %v398, %v397
        %v455 = vpack.c.bf16 %v400, %v399
        %v456 = vpack.c.bf16 %v402, %v401
        %v457 = vpack.c.bf16 %v404, %v403
        %v458 = vpack.c.bf16 %v406, %v405
        %v459 = vpack.c.bf16 %v408, %v407
        %v460 = vpack.c.bf16 %v410, %v409
        %v461 = vpack.c.bf16 %v412, %v411
        %v462 = vpack.c.bf16 %v414, %v413
        %v463 = vpack.c.bf16 %v416, %v415
        %v464 = vpack.c.bf16 %v418, %v417
        %v465 = vpack.c.bf16 %v420, %v419
        %v466 = vpack.c.bf16 %v422, %v421
        %v467 = vpack.c.bf16 %v424, %v423
        %v468 = vpack.c.bf16 %v426, %v425
        %v469 = vpack.c.bf16 %v428, %v427
        %v470 = vpack.c.bf16 %v430, %v429
        %v471 = vpack.c.bf16 %v432, %v431
        %v472 = vpack.c.bf16 %v434, %v433
        %v473 = vpack.c.bf16 %v436, %v435
        %v474 = vpack.c.bf16 %v438, %v437
        %v475 = vpack.c.bf16 %v440, %v439
        %v476 = vpack.c.bf16 %v442, %v441
        %v477 = vpack.c.bf16 %v444, %v443
        %v478 = vpack.c.bf16 %v446, %v445
        %v479 = vld [vmem:[#allocation5] sm:$0xf]
        %v480 = vld [vmem:[#allocation5 + $0x4] sm:$0xf]
        %v481 = vld [vmem:[#allocation5 + $0x8] sm:$0xf]
        %v482 = vld [vmem:[#allocation5 + $0xc] sm:$0xf]
        %v483 = vld [vmem:[#allocation5 + $0x10] sm:$0xf]
        %v484 = vld [vmem:[#allocation5 + $0x14] sm:$0xf]
        %v485 = vld [vmem:[#allocation5 + $0x18] sm:$0xf]
        %v486 = vld [vmem:[#allocation5 + $0x1c] sm:$0xf]
        %v487 = vld [vmem:[#allocation5 + $0x20] sm:$0xf]
        %v488 = vld [vmem:[#allocation5 + $0x24] sm:$0xf]
        %v489 = vld [vmem:[#allocation5 + $0x28] sm:$0xf]
        %v490 = vld [vmem:[#allocation5 + $0x2c] sm:$0xf]
        %v491 = vld [vmem:[#allocation5 + $0x30] sm:$0xf]
        %v492 = vld [vmem:[#allocation5 + $0x34] sm:$0xf]
        %v493 = vld [vmem:[#allocation5 + $0x38] sm:$0xf]
        %v494 = vld [vmem:[#allocation5 + $0x3c] sm:$0xf]
        %v495 = vld [vmem:[%s2] sm:$0x1]
        %v497 = vlaneseq
        %v498 = vshrl.u32 %v497, 7
        %v499 = vsub.s32 0, %v498
        %v500 = vrot.slane %v495, %v499
        %v518 = vunpack.c.l.b16 %v479
        %v519 = vunpack.c.l.b16 %v480
        %v520 = vunpack.c.l.b16 %v481
        %v521 = vunpack.c.l.b16 %v482
        %v522 = vunpack.c.l.b16 %v483
        %v523 = vunpack.c.l.b16 %v484
        %v524 = vunpack.c.l.b16 %v485
        %v525 = vunpack.c.l.b16 %v486
        %v526 = vunpack.c.l.b16 %v487
        %v527 = vunpack.c.l.b16 %v488
        %v528 = vunpack.c.l.b16 %v489
        %v529 = vunpack.c.l.b16 %v490
        %v530 = vunpack.c.l.b16 %v491
        %v531 = vunpack.c.l.b16 %v492
        %v532 = vunpack.c.l.b16 %v493
        %v533 = vunpack.c.l.b16 %v494
        %v534 = vpack.c.b16 %v519, %v518
        %v535 = vpack.c.b16 %v521, %v520
        %v536 = vpack.c.b16 %v523, %v522
        %v537 = vpack.c.b16 %v525, %v524
        %v538 = vpack.c.b16 %v527, %v526
        %v539 = vpack.c.b16 %v529, %v528
        %v540 = vpack.c.b16 %v531, %v530
        %v541 = vpack.c.b16 %v533, %v532
        %550 = vmatprep.subr.bf16.mxu0 0
        %551 = vmatpush1.bf16.msra.mxu0 %v541
        %552 = vmatprep.subr.bf16.mxu0 0
        %553 = vmatpush1.bf16.msra.mxu0 %v540
        %554 = vmatprep.subr.bf16.mxu0 0
        %555 = vmatpush1.bf16.msra.mxu0 %v539
        %556 = vmatprep.subr.bf16.mxu0 0
        %557 = vmatpush1.bf16.msra.mxu0 %v538
        %558 = vmatprep.subr.bf16.mxu0 0
        %559 = vmatpush1.bf16.msra.mxu0 %v537
        %560 = vmatprep.subr.bf16.mxu0 0
        %561 = vmatpush1.bf16.msra.mxu0 %v536
        %562 = vmatprep.subr.bf16.mxu0 0
        %563 = vmatpush1.bf16.msra.mxu0 %v535
        %564 = vmatprep.subr.bf16.mxu0 0
        %565 = vmatpush1.bf16.msra.mxu0 %v534
        %566 = vmatprep.subr.bf16.mxu0 0
        %567 = vmatpush2.bf16.msra.mxu0 0
        %568 = vmatprep.subr.bf16.mxu0 0
        %569 = vmatpush2.bf16.msra.mxu0 0
        %570 = vmatprep.subr.bf16.mxu0 0
        %571 = vmatpush2.bf16.msra.mxu0 0
        %572 = vmatprep.subr.bf16.mxu0 0
        %573 = vmatpush2.bf16.msra.mxu0 0
        %574 = vmatprep.subr.bf16.mxu0 0
        %575 = vmatpush2.bf16.msra.mxu0 0
        %576 = vmatprep.subr.bf16.mxu0 0
        %577 = vmatpush2.bf16.msra.mxu0 0
        %578 = vmatprep.subr.bf16.mxu0 0
        %579 = vmatpush2.bf16.msra.mxu0 0
        %580 = vmatprep.subr.bf16.mxu0 0
        %581 = vmatpush2.bf16.msra.mxu0 0
        %582 = vmatprep.mubr.bf16.mxu0 0
        %583 = vmatmul.mubr.bf16.gmra.mxu0 %v447
        %v584 = vpop.f32.mrf.mxu0
        %v585 = vadd.f32 %v500, %v584
        %v586 = vpop.f32.mrf.mxu0
        %v587 = vpop.f32.mrf.mxu0
        %v588 = vadd.f32 %v500, %v587
        %v589 = vpop.f32.mrf.mxu0
        %590 = vmatprep.mubr.bf16.mxu0 0
        %591 = vmatmul.mubr.bf16.gmra.mxu0 %v448
        %v592 = vpop.f32.mrf.mxu0
        %v593 = vadd.f32 %v500, %v592
        %v594 = vpop.f32.mrf.mxu0
        %v595 = vpop.f32.mrf.mxu0
        %v596 = vadd.f32 %v500, %v595
        %v597 = vpop.f32.mrf.mxu0
        %598 = vmatprep.mubr.bf16.mxu0 0
        %599 = vmatmul.mubr.bf16.gmra.mxu0 %v449
        %v600 = vpop.f32.mrf.mxu0
        %v601 = vadd.f32 %v500, %v600
        %v602 = vpop.f32.mrf.mxu0
        %v603 = vpop.f32.mrf.mxu0
        %v604 = vadd.f32 %v500, %v603
        %v605 = vpop.f32.mrf.mxu0
        %606 = vmatprep.mubr.bf16.mxu0 0
        %607 = vmatmul.mubr.bf16.gmra.mxu0 %v450
        %v608 = vpop.f32.mrf.mxu0
        %v609 = vadd.f32 %v500, %v608
        %v610 = vpop.f32.mrf.mxu0
        %v611 = vpop.f32.mrf.mxu0
        %v612 = vadd.f32 %v500, %v611
        %v613 = vpop.f32.mrf.mxu0
        %614 = vmatprep.mubr.bf16.mxu0 0
        %615 = vmatmul.mubr.bf16.gmra.mxu0 %v451
        %v616 = vpop.f32.mrf.mxu0
        %v617 = vadd.f32 %v500, %v616
        %v618 = vpop.f32.mrf.mxu0
        %v619 = vpop.f32.mrf.mxu0
        %v620 = vadd.f32 %v500, %v619
        %v621 = vpop.f32.mrf.mxu0
        %622 = vmatprep.mubr.bf16.mxu0 0
        %623 = vmatmul.mubr.bf16.gmra.mxu0 %v452
        %v624 = vpop.f32.mrf.mxu0
        %v625 = vadd.f32 %v500, %v624
        %v626 = vpop.f32.mrf.mxu0
        %v627 = vpop.f32.mrf.mxu0
        %v628 = vadd.f32 %v500, %v627
        %v629 = vpop.f32.mrf.mxu0
        %630 = vmatprep.mubr.bf16.mxu0 0
        %631 = vmatmul.mubr.bf16.gmra.mxu0 %v453
        %v632 = vpop.f32.mrf.mxu0
        %v633 = vadd.f32 %v500, %v632
        %v634 = vpop.f32.mrf.mxu0
        %v635 = vpop.f32.mrf.mxu0
        %v636 = vadd.f32 %v500, %v635
        %v637 = vpop.f32.mrf.mxu0
        %638 = vmatprep.mubr.bf16.mxu0 0
        %639 = vmatmul.mubr.bf16.gmra.mxu0 %v454
        %v640 = vpop.f32.mrf.mxu0
        %v641 = vadd.f32 %v500, %v640
        %v642 = vpop.f32.mrf.mxu0
        %v643 = vpop.f32.mrf.mxu0
        %v644 = vadd.f32 %v500, %v643
        %v645 = vpop.f32.mrf.mxu0
        %646 = vmatprep.mubr.bf16.mxu0 0
        %647 = vmatmul.mubr.bf16.gmra.mxu0 %v455
        %v648 = vpop.f32.mrf.mxu0
        %v649 = vadd.f32 %v500, %v648
        %v650 = vpop.f32.mrf.mxu0
        %v651 = vpop.f32.mrf.mxu0
        %v652 = vadd.f32 %v500, %v651
        %v653 = vpop.f32.mrf.mxu0
        %654 = vmatprep.mubr.bf16.mxu0 0
        %655 = vmatmul.mubr.bf16.gmra.mxu0 %v456
        %v656 = vpop.f32.mrf.mxu0
        %v657 = vadd.f32 %v500, %v656
        %v658 = vpop.f32.mrf.mxu0
        %v659 = vpop.f32.mrf.mxu0
        %v660 = vadd.f32 %v500, %v659
        %v661 = vpop.f32.mrf.mxu0
        %662 = vmatprep.mubr.bf16.mxu0 0
        %663 = vmatmul.mubr.bf16.gmra.mxu0 %v457
        %v664 = vpop.f32.mrf.mxu0
        %v665 = vadd.f32 %v500, %v664
        %v666 = vpop.f32.mrf.mxu0
        %v667 = vpop.f32.mrf.mxu0
        %v668 = vadd.f32 %v500, %v667
        %v669 = vpop.f32.mrf.mxu0
        %670 = vmatprep.mubr.bf16.mxu0 0
        %671 = vmatmul.mubr.bf16.gmra.mxu0 %v458
        %v672 = vpop.f32.mrf.mxu0
        %v673 = vadd.f32 %v500, %v672
        %v674 = vpop.f32.mrf.mxu0
        %v675 = vpop.f32.mrf.mxu0
        %v676 = vadd.f32 %v500, %v675
        %v677 = vpop.f32.mrf.mxu0
        %678 = vmatprep.mubr.bf16.mxu0 0
        %679 = vmatmul.mubr.bf16.gmra.mxu0 %v459
        %v680 = vpop.f32.mrf.mxu0
        %v681 = vadd.f32 %v500, %v680
        %v682 = vpop.f32.mrf.mxu0
        %v683 = vpop.f32.mrf.mxu0
        %v684 = vadd.f32 %v500, %v683
        %v685 = vpop.f32.mrf.mxu0
        %686 = vmatprep.mubr.bf16.mxu0 0
        %687 = vmatmul.mubr.bf16.gmra.mxu0 %v460
        %v688 = vpop.f32.mrf.mxu0
        %v689 = vadd.f32 %v500, %v688
        %v690 = vpop.f32.mrf.mxu0
        %v691 = vpop.f32.mrf.mxu0
        %v692 = vadd.f32 %v500, %v691
        %v693 = vpop.f32.mrf.mxu0
        %694 = vmatprep.mubr.bf16.mxu0 0
        %695 = vmatmul.mubr.bf16.gmra.mxu0 %v461
        %v696 = vpop.f32.mrf.mxu0
        %v697 = vadd.f32 %v500, %v696
        %v698 = vpop.f32.mrf.mxu0
        %v699 = vpop.f32.mrf.mxu0
        %v700 = vadd.f32 %v500, %v699
        %v701 = vpop.f32.mrf.mxu0
        %702 = vmatprep.mubr.bf16.mxu0 0
        %703 = vmatmul.mubr.bf16.gmra.mxu0 %v462
        %v704 = vpop.f32.mrf.mxu0
        %v705 = vadd.f32 %v500, %v704
        %v706 = vpop.f32.mrf.mxu0
        %v707 = vpop.f32.mrf.mxu0
        %v708 = vadd.f32 %v500, %v707
        %v709 = vpop.f32.mrf.mxu0
        %710 = vmatprep.mubr.bf16.mxu0 0
        %711 = vmatmul.mubr.bf16.gmra.mxu0 %v463
        %v712 = vpop.f32.mrf.mxu0
        %v713 = vadd.f32 %v500, %v712
        %v714 = vpop.f32.mrf.mxu0
        %v715 = vpop.f32.mrf.mxu0
        %v716 = vadd.f32 %v500, %v715
        %v717 = vpop.f32.mrf.mxu0
        %718 = vmatprep.mubr.bf16.mxu0 0
        %719 = vmatmul.mubr.bf16.gmra.mxu0 %v464
        %v720 = vpop.f32.mrf.mxu0
        %v721 = vadd.f32 %v500, %v720
        %v722 = vpop.f32.mrf.mxu0
        %v723 = vpop.f32.mrf.mxu0
        %v724 = vadd.f32 %v500, %v723
        %v725 = vpop.f32.mrf.mxu0
        %726 = vmatprep.mubr.bf16.mxu0 0
        %727 = vmatmul.mubr.bf16.gmra.mxu0 %v465
        %v728 = vpop.f32.mrf.mxu0
        %v729 = vadd.f32 %v500, %v728
        %v730 = vpop.f32.mrf.mxu0
        %v731 = vpop.f32.mrf.mxu0
        %v732 = vadd.f32 %v500, %v731
        %v733 = vpop.f32.mrf.mxu0
        %734 = vmatprep.mubr.bf16.mxu0 0
        %735 = vmatmul.mubr.bf16.gmra.mxu0 %v466
        %v736 = vpop.f32.mrf.mxu0
        %v737 = vadd.f32 %v500, %v736
        %v738 = vpop.f32.mrf.mxu0
        %v739 = vpop.f32.mrf.mxu0
        %v740 = vadd.f32 %v500, %v739
        %v741 = vpop.f32.mrf.mxu0
        %742 = vmatprep.mubr.bf16.mxu0 0
        %743 = vmatmul.mubr.bf16.gmra.mxu0 %v467
        %v744 = vpop.f32.mrf.mxu0
        %v745 = vadd.f32 %v500, %v744
        %v746 = vpop.f32.mrf.mxu0
        %v747 = vpop.f32.mrf.mxu0
        %v748 = vadd.f32 %v500, %v747
        %v749 = vpop.f32.mrf.mxu0
        %750 = vmatprep.mubr.bf16.mxu0 0
        %751 = vmatmul.mubr.bf16.gmra.mxu0 %v468
        %v752 = vpop.f32.mrf.mxu0
        %v753 = vadd.f32 %v500, %v752
        %v754 = vpop.f32.mrf.mxu0
        %v755 = vpop.f32.mrf.mxu0
        %v756 = vadd.f32 %v500, %v755
        %v757 = vpop.f32.mrf.mxu0
        %758 = vmatprep.mubr.bf16.mxu0 0
        %759 = vmatmul.mubr.bf16.gmra.mxu0 %v469
        %v760 = vpop.f32.mrf.mxu0
        %v761 = vadd.f32 %v500, %v760
        %v762 = vpop.f32.mrf.mxu0
        %v763 = vpop.f32.mrf.mxu0
        %v764 = vadd.f32 %v500, %v763
        %v765 = vpop.f32.mrf.mxu0
        %766 = vmatprep.mubr.bf16.mxu0 0
        %767 = vmatmul.mubr.bf16.gmra.mxu0 %v470
        %v768 = vpop.f32.mrf.mxu0
        %v769 = vadd.f32 %v500, %v768
        %v770 = vpop.f32.mrf.mxu0
        %v771 = vpop.f32.mrf.mxu0
        %v772 = vadd.f32 %v500, %v771
        %v773 = vpop.f32.mrf.mxu0
        %774 = vmatprep.mubr.bf16.mxu0 0
        %775 = vmatmul.mubr.bf16.gmra.mxu0 %v471
        %v776 = vpop.f32.mrf.mxu0
        %v777 = vadd.f32 %v500, %v776
        %v778 = vpop.f32.mrf.mxu0
        %v779 = vpop.f32.mrf.mxu0
        %v780 = vadd.f32 %v500, %v779
        %v781 = vpop.f32.mrf.mxu0
        %782 = vmatprep.mubr.bf16.mxu0 0
        %783 = vmatmul.mubr.bf16.gmra.mxu0 %v472
        %v784 = vpop.f32.mrf.mxu0
        %v785 = vadd.f32 %v500, %v784
        %v786 = vpop.f32.mrf.mxu0
        %v787 = vpop.f32.mrf.mxu0
        %v788 = vadd.f32 %v500, %v787
        %v789 = vpop.f32.mrf.mxu0
        %790 = vmatprep.mubr.bf16.mxu0 0
        %791 = vmatmul.mubr.bf16.gmra.mxu0 %v473
        %v792 = vpop.f32.mrf.mxu0
        %v793 = vadd.f32 %v500, %v792
        %v794 = vpop.f32.mrf.mxu0
        %v795 = vpop.f32.mrf.mxu0
        %v796 = vadd.f32 %v500, %v795
        %v797 = vpop.f32.mrf.mxu0
        %798 = vmatprep.mubr.bf16.mxu0 0
        %799 = vmatmul.mubr.bf16.gmra.mxu0 %v474
        %v800 = vpop.f32.mrf.mxu0
        %v801 = vadd.f32 %v500, %v800
        %v802 = vpop.f32.mrf.mxu0
        %v803 = vpop.f32.mrf.mxu0
        %v804 = vadd.f32 %v500, %v803
        %v805 = vpop.f32.mrf.mxu0
        %806 = vmatprep.mubr.bf16.mxu0 0
        %807 = vmatmul.mubr.bf16.gmra.mxu0 %v475
        %v808 = vpop.f32.mrf.mxu0
        %v809 = vadd.f32 %v500, %v808
        %v810 = vpop.f32.mrf.mxu0
        %v811 = vpop.f32.mrf.mxu0
        %v812 = vadd.f32 %v500, %v811
        %v813 = vpop.f32.mrf.mxu0
        %814 = vmatprep.mubr.bf16.mxu0 0
        %815 = vmatmul.mubr.bf16.gmra.mxu0 %v476
        %v816 = vpop.f32.mrf.mxu0
        %v817 = vadd.f32 %v500, %v816
        %v818 = vpop.f32.mrf.mxu0
        %v819 = vpop.f32.mrf.mxu0
        %v820 = vadd.f32 %v500, %v819
        %v821 = vpop.f32.mrf.mxu0
        %822 = vmatprep.mubr.bf16.mxu0 0
        %823 = vmatmul.mubr.bf16.gmra.mxu0 %v477
        %v824 = vpop.f32.mrf.mxu0
        %v825 = vadd.f32 %v500, %v824
        %v826 = vpop.f32.mrf.mxu0
        %v827 = vpop.f32.mrf.mxu0
        %v828 = vadd.f32 %v500, %v827
        %v829 = vpop.f32.mrf.mxu0
        %830 = vmatprep.mubr.bf16.mxu0 0
        %831 = vmatmul.mubr.bf16.gmra.mxu0 %v478
        %v832 = vpop.f32.mrf.mxu0
        %v833 = vadd.f32 %v500, %v832
        %v834 = vpop.f32.mrf.mxu0
        %v835 = vpop.f32.mrf.mxu0
        %v836 = vadd.f32 %v500, %v835
        %v837 = vpop.f32.mrf.mxu0
        %838 = vdwg.mxu0
        %839 = vadd.xlane.f32.xlu0 %v585
        %v840 = vpop.xlane.xlu0 %839
        %841 = vadd.xlane.f32.xlu0 %v588
        %v842 = vpop.xlane.xlu0 %841
        %843 = vadd.xlane.f32.xlu0 %v593
        %v844 = vpop.xlane.xlu0 %843
        %845 = vadd.xlane.f32.xlu0 %v596
        %v846 = vpop.xlane.xlu0 %845
        %847 = vadd.xlane.f32.xlu0 %v601
        %v848 = vpop.xlane.xlu0 %847
        %849 = vadd.xlane.f32.xlu0 %v604
        %v850 = vpop.xlane.xlu0 %849
        %851 = vadd.xlane.f32.xlu0 %v609
        %v852 = vpop.xlane.xlu0 %851
        %853 = vadd.xlane.f32.xlu0 %v612
        %v854 = vpop.xlane.xlu0 %853
        %855 = vadd.xlane.f32.xlu0 %v617
        %v856 = vpop.xlane.xlu0 %855
        %857 = vadd.xlane.f32.xlu0 %v620
        %v858 = vpop.xlane.xlu0 %857
        %859 = vadd.xlane.f32.xlu0 %v625
        %v860 = vpop.xlane.xlu0 %859
        %861 = vadd.xlane.f32.xlu0 %v628
        %v862 = vpop.xlane.xlu0 %861
        %863 = vadd.xlane.f32.xlu0 %v633
        %v864 = vpop.xlane.xlu0 %863
        %865 = vadd.xlane.f32.xlu0 %v636
        %v866 = vpop.xlane.xlu0 %865
        %867 = vadd.xlane.f32.xlu0 %v641
        %v868 = vpop.xlane.xlu0 %867
        %869 = vadd.xlane.f32.xlu0 %v644
        %v870 = vpop.xlane.xlu0 %869
        %871 = vadd.xlane.f32.xlu0 %v649
        %v872 = vpop.xlane.xlu0 %871
        %873 = vadd.xlane.f32.xlu0 %v652
        %v874 = vpop.xlane.xlu0 %873
        %875 = vadd.xlane.f32.xlu0 %v657
        %v876 = vpop.xlane.xlu0 %875
        %877 = vadd.xlane.f32.xlu0 %v660
        %v878 = vpop.xlane.xlu0 %877
        %879 = vadd.xlane.f32.xlu0 %v665
        %v880 = vpop.xlane.xlu0 %879
        %881 = vadd.xlane.f32.xlu0 %v668
        %v882 = vpop.xlane.xlu0 %881
        %883 = vadd.xlane.f32.xlu0 %v673
        %v884 = vpop.xlane.xlu0 %883
        %885 = vadd.xlane.f32.xlu0 %v676
        %v886 = vpop.xlane.xlu0 %885
        %887 = vadd.xlane.f32.xlu0 %v681
        %v888 = vpop.xlane.xlu0 %887
        %889 = vadd.xlane.f32.xlu0 %v684
        %v890 = vpop.xlane.xlu0 %889
        %891 = vadd.xlane.f32.xlu0 %v689
        %v892 = vpop.xlane.xlu0 %891
        %893 = vadd.xlane.f32.xlu0 %v692
        %v894 = vpop.xlane.xlu0 %893
        %895 = vadd.xlane.f32.xlu0 %v697
        %v896 = vpop.xlane.xlu0 %895
        %897 = vadd.xlane.f32.xlu0 %v700
        %v898 = vpop.xlane.xlu0 %897
        %899 = vadd.xlane.f32.xlu0 %v705
        %v900 = vpop.xlane.xlu0 %899
        %901 = vadd.xlane.f32.xlu0 %v708
        %v902 = vpop.xlane.xlu0 %901
        %903 = vadd.xlane.f32.xlu0 %v713
        %v904 = vpop.xlane.xlu0 %903
        %905 = vadd.xlane.f32.xlu0 %v716
        %v906 = vpop.xlane.xlu0 %905
        %907 = vadd.xlane.f32.xlu0 %v721
        %v908 = vpop.xlane.xlu0 %907
        %909 = vadd.xlane.f32.xlu0 %v724
        %v910 = vpop.xlane.xlu0 %909
        %911 = vadd.xlane.f32.xlu0 %v729
        %v912 = vpop.xlane.xlu0 %911
        %913 = vadd.xlane.f32.xlu0 %v732
        %v914 = vpop.xlane.xlu0 %913
        %915 = vadd.xlane.f32.xlu0 %v737
        %v916 = vpop.xlane.xlu0 %915
        %917 = vadd.xlane.f32.xlu0 %v740
        %v918 = vpop.xlane.xlu0 %917
        %919 = vadd.xlane.f32.xlu0 %v745
        %v920 = vpop.xlane.xlu0 %919
        %921 = vadd.xlane.f32.xlu0 %v748
        %v922 = vpop.xlane.xlu0 %921
        %923 = vadd.xlane.f32.xlu0 %v753
        %v924 = vpop.xlane.xlu0 %923
        %925 = vadd.xlane.f32.xlu0 %v756
        %v926 = vpop.xlane.xlu0 %925
        %927 = vadd.xlane.f32.xlu0 %v761
        %v928 = vpop.xlane.xlu0 %927
        %929 = vadd.xlane.f32.xlu0 %v764
        %v930 = vpop.xlane.xlu0 %929
        %931 = vadd.xlane.f32.xlu0 %v769
        %v932 = vpop.xlane.xlu0 %931
        %933 = vadd.xlane.f32.xlu0 %v772
        %v934 = vpop.xlane.xlu0 %933
        %935 = vadd.xlane.f32.xlu0 %v777
        %v936 = vpop.xlane.xlu0 %935
        %937 = vadd.xlane.f32.xlu0 %v780
        %v938 = vpop.xlane.xlu0 %937
        %939 = vadd.xlane.f32.xlu0 %v785
        %v940 = vpop.xlane.xlu0 %939
        %941 = vadd.xlane.f32.xlu0 %v788
        %v942 = vpop.xlane.xlu0 %941
        %943 = vadd.xlane.f32.xlu0 %v793
        %v944 = vpop.xlane.xlu0 %943
        %945 = vadd.xlane.f32.xlu0 %v796
        %v946 = vpop.xlane.xlu0 %945
        %947 = vadd.xlane.f32.xlu0 %v801
        %v948 = vpop.xlane.xlu0 %947
        %949 = vadd.xlane.f32.xlu0 %v804
        %v950 = vpop.xlane.xlu0 %949
        %951 = vadd.xlane.f32.xlu0 %v809
        %v952 = vpop.xlane.xlu0 %951
        %953 = vadd.xlane.f32.xlu0 %v812
        %v954 = vpop.xlane.xlu0 %953
        %955 = vadd.xlane.f32.xlu0 %v817
        %v956 = vpop.xlane.xlu0 %955
        %957 = vadd.xlane.f32.xlu0 %v820
        %v958 = vpop.xlane.xlu0 %957
        %959 = vadd.xlane.f32.xlu0 %v825
        %v960 = vpop.xlane.xlu0 %959
        %961 = vadd.xlane.f32.xlu0 %v828
        %v962 = vpop.xlane.xlu0 %961
        %963 = vadd.xlane.f32.xlu0 %v833
        %v964 = vpop.xlane.xlu0 %963
        %965 = vadd.xlane.f32.xlu0 %v836
        %v966 = vpop.xlane.xlu0 %965
        %v967 = vmul.f32 %v585, %v585
        %v968 = vmul.f32 %v588, %v588
        %v969 = vmul.f32 %v593, %v593
        %v970 = vmul.f32 %v596, %v596
        %v971 = vmul.f32 %v601, %v601
        %v972 = vmul.f32 %v604, %v604
        %v973 = vmul.f32 %v609, %v609
        %v974 = vmul.f32 %v612, %v612
        %v975 = vmul.f32 %v617, %v617
        %v976 = vmul.f32 %v620, %v620
        %v977 = vmul.f32 %v625, %v625
        %v978 = vmul.f32 %v628, %v628
        %v979 = vmul.f32 %v633, %v633
        %v980 = vmul.f32 %v636, %v636
        %v981 = vmul.f32 %v641, %v641
        %v982 = vmul.f32 %v644, %v644
        %v983 = vmul.f32 %v649, %v649
        %v984 = vmul.f32 %v652, %v652
        %v985 = vmul.f32 %v657, %v657
        %v986 = vmul.f32 %v660, %v660
        %v987 = vmul.f32 %v665, %v665
        %v988 = vmul.f32 %v668, %v668
        %v989 = vmul.f32 %v673, %v673
        %v990 = vmul.f32 %v676, %v676
        %v991 = vmul.f32 %v681, %v681
        %v992 = vmul.f32 %v684, %v684
        %v993 = vmul.f32 %v689, %v689
        %v994 = vmul.f32 %v692, %v692
        %v995 = vmul.f32 %v697, %v697
        %v996 = vmul.f32 %v700, %v700
        %v997 = vmul.f32 %v705, %v705
        %v998 = vmul.f32 %v708, %v708
        %v999 = vmul.f32 %v713, %v713
        %v1000 = vmul.f32 %v716, %v716
        %v1001 = vmul.f32 %v721, %v721
        %v1002 = vmul.f32 %v724, %v724
        %v1003 = vmul.f32 %v729, %v729
        %v1004 = vmul.f32 %v732, %v732
        %v1005 = vmul.f32 %v737, %v737
        %v1006 = vmul.f32 %v740, %v740
        %v1007 = vmul.f32 %v745, %v745
        %v1008 = vmul.f32 %v748, %v748
        %v1009 = vmul.f32 %v753, %v753
        %v1010 = vmul.f32 %v756, %v756
        %v1011 = vmul.f32 %v761, %v761
        %v1012 = vmul.f32 %v764, %v764
        %v1013 = vmul.f32 %v769, %v769
        %v1014 = vmul.f32 %v772, %v772
        %v1015 = vmul.f32 %v777, %v777
        %v1016 = vmul.f32 %v780, %v780
        %v1017 = vmul.f32 %v785, %v785
        %v1018 = vmul.f32 %v788, %v788
        %v1019 = vmul.f32 %v793, %v793
        %v1020 = vmul.f32 %v796, %v796
        %v1021 = vmul.f32 %v801, %v801
        %v1022 = vmul.f32 %v804, %v804
        %v1023 = vmul.f32 %v809, %v809
        %v1024 = vmul.f32 %v812, %v812
        %v1025 = vmul.f32 %v817, %v817
        %v1026 = vmul.f32 %v820, %v820
        %v1027 = vmul.f32 %v825, %v825
        %v1028 = vmul.f32 %v828, %v828
        %v1029 = vmul.f32 %v833, %v833
        %v1030 = vmul.f32 %v836, %v836
        %1031 = vadd.xlane.f32.xlu0 %v967
        %v1032 = vpop.xlane.xlu0 %1031
        %1033 = vadd.xlane.f32.xlu0 %v968
        %v1034 = vpop.xlane.xlu0 %1033
        %1035 = vadd.xlane.f32.xlu0 %v969
        %v1036 = vpop.xlane.xlu0 %1035
        %1037 = vadd.xlane.f32.xlu0 %v970
        %v1038 = vpop.xlane.xlu0 %1037
        %1039 = vadd.xlane.f32.xlu0 %v971
        %v1040 = vpop.xlane.xlu0 %1039
        %1041 = vadd.xlane.f32.xlu0 %v972
        %v1042 = vpop.xlane.xlu0 %1041
        %1043 = vadd.xlane.f32.xlu0 %v973
        %v1044 = vpop.xlane.xlu0 %1043
        %1045 = vadd.xlane.f32.xlu0 %v974
        %v1046 = vpop.xlane.xlu0 %1045
        %1047 = vadd.xlane.f32.xlu0 %v975
        %v1048 = vpop.xlane.xlu0 %1047
        %1049 = vadd.xlane.f32.xlu0 %v976
        %v1050 = vpop.xlane.xlu0 %1049
        %1051 = vadd.xlane.f32.xlu0 %v977
        %v1052 = vpop.xlane.xlu0 %1051
        %1053 = vadd.xlane.f32.xlu0 %v978
        %v1054 = vpop.xlane.xlu0 %1053
        %1055 = vadd.xlane.f32.xlu0 %v979
        %v1056 = vpop.xlane.xlu0 %1055
        %1057 = vadd.xlane.f32.xlu0 %v980
        %v1058 = vpop.xlane.xlu0 %1057
        %1059 = vadd.xlane.f32.xlu0 %v981
        %v1060 = vpop.xlane.xlu0 %1059
        %1061 = vadd.xlane.f32.xlu0 %v982
        %v1062 = vpop.xlane.xlu0 %1061
        %1063 = vadd.xlane.f32.xlu0 %v983
        %v1064 = vpop.xlane.xlu0 %1063
        %1065 = vadd.xlane.f32.xlu0 %v984
        %v1066 = vpop.xlane.xlu0 %1065
        %1067 = vadd.xlane.f32.xlu0 %v985
        %v1068 = vpop.xlane.xlu0 %1067
        %1069 = vadd.xlane.f32.xlu0 %v986
        %v1070 = vpop.xlane.xlu0 %1069
        %1071 = vadd.xlane.f32.xlu0 %v987
        %v1072 = vpop.xlane.xlu0 %1071
        %1073 = vadd.xlane.f32.xlu0 %v988
        %v1074 = vpop.xlane.xlu0 %1073
        %1075 = vadd.xlane.f32.xlu0 %v989
        %v1076 = vpop.xlane.xlu0 %1075
        %1077 = vadd.xlane.f32.xlu0 %v990
        %v1078 = vpop.xlane.xlu0 %1077
        %1079 = vadd.xlane.f32.xlu0 %v991
        %v1080 = vpop.xlane.xlu0 %1079
        %1081 = vadd.xlane.f32.xlu0 %v992
        %v1082 = vpop.xlane.xlu0 %1081
        %1083 = vadd.xlane.f32.xlu0 %v993
        %v1084 = vpop.xlane.xlu0 %1083
        %1085 = vadd.xlane.f32.xlu0 %v994
        %v1086 = vpop.xlane.xlu0 %1085
        %1087 = vadd.xlane.f32.xlu0 %v995
        %v1088 = vpop.xlane.xlu0 %1087
        %1089 = vadd.xlane.f32.xlu0 %v996
        %v1090 = vpop.xlane.xlu0 %1089
        %1091 = vadd.xlane.f32.xlu0 %v997
        %v1092 = vpop.xlane.xlu0 %1091
        %1093 = vadd.xlane.f32.xlu0 %v998
        %v1094 = vpop.xlane.xlu0 %1093
        %1095 = vadd.xlane.f32.xlu0 %v999
        %v1096 = vpop.xlane.xlu0 %1095
        %1097 = vadd.xlane.f32.xlu0 %v1000
        %v1098 = vpop.xlane.xlu0 %1097
        %1099 = vadd.xlane.f32.xlu0 %v1001
        %v1100 = vpop.xlane.xlu0 %1099
        %1101 = vadd.xlane.f32.xlu0 %v1002
        %v1102 = vpop.xlane.xlu0 %1101
        %1103 = vadd.xlane.f32.xlu0 %v1003
        %v1104 = vpop.xlane.xlu0 %1103
        %1105 = vadd.xlane.f32.xlu0 %v1004
        %v1106 = vpop.xlane.xlu0 %1105
        %1107 = vadd.xlane.f32.xlu0 %v1005
        %v1108 = vpop.xlane.xlu0 %1107
        %1109 = vadd.xlane.f32.xlu0 %v1006
        %v1110 = vpop.xlane.xlu0 %1109
        %1111 = vadd.xlane.f32.xlu0 %v1007
        %v1112 = vpop.xlane.xlu0 %1111
        %1113 = vadd.xlane.f32.xlu0 %v1008
        %v1114 = vpop.xlane.xlu0 %1113
        %1115 = vadd.xlane.f32.xlu0 %v1009
        %v1116 = vpop.xlane.xlu0 %1115
        %1117 = vadd.xlane.f32.xlu0 %v1010
        %v1118 = vpop.xlane.xlu0 %1117
        %1119 = vadd.xlane.f32.xlu0 %v1011
        %v1120 = vpop.xlane.xlu0 %1119
        %1121 = vadd.xlane.f32.xlu0 %v1012
        %v1122 = vpop.xlane.xlu0 %1121
        %1123 = vadd.xlane.f32.xlu0 %v1013
        %v1124 = vpop.xlane.xlu0 %1123
        %1125 = vadd.xlane.f32.xlu0 %v1014
        %v1126 = vpop.xlane.xlu0 %1125
        %1127 = vadd.xlane.f32.xlu0 %v1015
        %v1128 = vpop.xlane.xlu0 %1127
        %1129 = vadd.xlane.f32.xlu0 %v1016
        %v1130 = vpop.xlane.xlu0 %1129
        %1131 = vadd.xlane.f32.xlu0 %v1017
        %v1132 = vpop.xlane.xlu0 %1131
        %1133 = vadd.xlane.f32.xlu0 %v1018
        %v1134 = vpop.xlane.xlu0 %1133
        %1135 = vadd.xlane.f32.xlu0 %v1019
        %v1136 = vpop.xlane.xlu0 %1135
        %1137 = vadd.xlane.f32.xlu0 %v1020
        %v1138 = vpop.xlane.xlu0 %1137
        %1139 = vadd.xlane.f32.xlu0 %v1021
        %v1140 = vpop.xlane.xlu0 %1139
        %1141 = vadd.xlane.f32.xlu0 %v1022
        %v1142 = vpop.xlane.xlu0 %1141
        %1143 = vadd.xlane.f32.xlu0 %v1023
        %v1144 = vpop.xlane.xlu0 %1143
        %1145 = vadd.xlane.f32.xlu0 %v1024
        %v1146 = vpop.xlane.xlu0 %1145
        %1147 = vadd.xlane.f32.xlu0 %v1025
        %v1148 = vpop.xlane.xlu0 %1147
        %1149 = vadd.xlane.f32.xlu0 %v1026
        %v1150 = vpop.xlane.xlu0 %1149
        %1151 = vadd.xlane.f32.xlu0 %v1027
        %v1152 = vpop.xlane.xlu0 %1151
        %1153 = vadd.xlane.f32.xlu0 %v1028
        %v1154 = vpop.xlane.xlu0 %1153
        %1155 = vadd.xlane.f32.xlu0 %v1029
        %v1156 = vpop.xlane.xlu0 %1155
        %1157 = vadd.xlane.f32.xlu0 %v1030
        %v1158 = vpop.xlane.xlu0 %1157
        %v1159 = vmul.f32 %v840, 0.0078125
        %v1160 = vmul.f32 %v842, 0.0078125
        %v1161 = vmul.f32 %v844, 0.0078125
        %v1162 = vmul.f32 %v846, 0.0078125
        %v1163 = vmul.f32 %v848, 0.0078125
        %v1164 = vmul.f32 %v850, 0.0078125
        %v1165 = vmul.f32 %v852, 0.0078125
        %v1166 = vmul.f32 %v854, 0.0078125
        %v1167 = vmul.f32 %v856, 0.0078125
        %v1168 = vmul.f32 %v858, 0.0078125
        %v1169 = vmul.f32 %v860, 0.0078125
        %v1170 = vmul.f32 %v862, 0.0078125
        %v1171 = vmul.f32 %v864, 0.0078125
        %v1172 = vmul.f32 %v866, 0.0078125
        %v1173 = vmul.f32 %v868, 0.0078125
        %v1174 = vmul.f32 %v870, 0.0078125
        %v1175 = vmul.f32 %v872, 0.0078125
        %v1176 = vmul.f32 %v874, 0.0078125
        %v1177 = vmul.f32 %v876, 0.0078125
        %v1178 = vmul.f32 %v878, 0.0078125
        %v1179 = vmul.f32 %v880, 0.0078125
        %v1180 = vmul.f32 %v882, 0.0078125
        %v1181 = vmul.f32 %v884, 0.0078125
        %v1182 = vmul.f32 %v886, 0.0078125
        %v1183 = vmul.f32 %v888, 0.0078125
        %v1184 = vmul.f32 %v890, 0.0078125
        %v1185 = vmul.f32 %v892, 0.0078125
        %v1186 = vmul.f32 %v894, 0.0078125
        %v1187 = vmul.f32 %v896, 0.0078125
        %v1188 = vmul.f32 %v898, 0.0078125
        %v1189 = vmul.f32 %v900, 0.0078125
        %v1190 = vmul.f32 %v902, 0.0078125
        %v1191 = vmul.f32 %v904, 0.0078125
        %v1192 = vmul.f32 %v906, 0.0078125
        %v1193 = vmul.f32 %v908, 0.0078125
        %v1194 = vmul.f32 %v910, 0.0078125
        %v1195 = vmul.f32 %v912, 0.0078125
        %v1196 = vmul.f32 %v914, 0.0078125
        %v1197 = vmul.f32 %v916, 0.0078125
        %v1198 = vmul.f32 %v918, 0.0078125
        %v1199 = vmul.f32 %v920, 0.0078125
        %v1200 = vmul.f32 %v922, 0.0078125
        %v1201 = vmul.f32 %v924, 0.0078125
        %v1202 = vmul.f32 %v926, 0.0078125
        %v1203 = vmul.f32 %v928, 0.0078125
        %v1204 = vmul.f32 %v930, 0.0078125
        %v1205 = vmul.f32 %v932, 0.0078125
        %v1206 = vmul.f32 %v934, 0.0078125
        %v1207 = vmul.f32 %v936, 0.0078125
        %v1208 = vmul.f32 %v938, 0.0078125
        %v1209 = vmul.f32 %v940, 0.0078125
        %v1210 = vmul.f32 %v942, 0.0078125
        %v1211 = vmul.f32 %v944, 0.0078125
        %v1212 = vmul.f32 %v946, 0.0078125
        %v1213 = vmul.f32 %v948, 0.0078125
        %v1214 = vmul.f32 %v950, 0.0078125
        %v1215 = vmul.f32 %v952, 0.0078125
        %v1216 = vmul.f32 %v954, 0.0078125
        %v1217 = vmul.f32 %v956, 0.0078125
        %v1218 = vmul.f32 %v958, 0.0078125
        %v1219 = vmul.f32 %v960, 0.0078125
        %v1220 = vmul.f32 %v962, 0.0078125
        %v1221 = vmul.f32 %v964, 0.0078125
        %v1222 = vmul.f32 %v966, 0.0078125
        %v1223 = vmul.f32 %v1032, 0.0078125
        %v1224 = vmul.f32 %v1034, 0.0078125
        %v1225 = vmul.f32 %v1036, 0.0078125
        %v1226 = vmul.f32 %v1038, 0.0078125
        %v1227 = vmul.f32 %v1040, 0.0078125
        %v1228 = vmul.f32 %v1042, 0.0078125
        %v1229 = vmul.f32 %v1044, 0.0078125
        %v1230 = vmul.f32 %v1046, 0.0078125
        %v1231 = vmul.f32 %v1048, 0.0078125
        %v1232 = vmul.f32 %v1050, 0.0078125
        %v1233 = vmul.f32 %v1052, 0.0078125
        %v1234 = vmul.f32 %v1054, 0.0078125
        %v1235 = vmul.f32 %v1056, 0.0078125
        %v1236 = vmul.f32 %v1058, 0.0078125
        %v1237 = vmul.f32 %v1060, 0.0078125
        %v1238 = vmul.f32 %v1062, 0.0078125
        %v1239 = vmul.f32 %v1064, 0.0078125
        %v1240 = vmul.f32 %v1066, 0.0078125
        %v1241 = vmul.f32 %v1068, 0.0078125
        %v1242 = vmul.f32 %v1070, 0.0078125
        %v1243 = vmul.f32 %v1072, 0.0078125
        %v1244 = vmul.f32 %v1074, 0.0078125
        %v1245 = vmul.f32 %v1076, 0.0078125
        %v1246 = vmul.f32 %v1078, 0.0078125
        %v1247 = vmul.f32 %v1080, 0.0078125
        %v1248 = vmul.f32 %v1082, 0.0078125
        %v1249 = vmul.f32 %v1084, 0.0078125
        %v1250 = vmul.f32 %v1086, 0.0078125
        %v1251 = vmul.f32 %v1088, 0.0078125
        %v1252 = vmul.f32 %v1090, 0.0078125
        %v1253 = vmul.f32 %v1092, 0.0078125
        %v1254 = vmul.f32 %v1094, 0.0078125
        %v1255 = vmul.f32 %v1096, 0.0078125
        %v1256 = vmul.f32 %v1098, 0.0078125
        %v1257 = vmul.f32 %v1100, 0.0078125
        %v1258 = vmul.f32 %v1102, 0.0078125
        %v1259 = vmul.f32 %v1104, 0.0078125
        %v1260 = vmul.f32 %v1106, 0.0078125
        %v1261 = vmul.f32 %v1108, 0.0078125
        %v1262 = vmul.f32 %v1110, 0.0078125
        %v1263 = vmul.f32 %v1112, 0.0078125
        %v1264 = vmul.f32 %v1114, 0.0078125
        %v1265 = vmul.f32 %v1116, 0.0078125
        %v1266 = vmul.f32 %v1118, 0.0078125
        %v1267 = vmul.f32 %v1120, 0.0078125
        %v1268 = vmul.f32 %v1122, 0.0078125
        %v1269 = vmul.f32 %v1124, 0.0078125
        %v1270 = vmul.f32 %v1126, 0.0078125
        %v1271 = vmul.f32 %v1128, 0.0078125
        %v1272 = vmul.f32 %v1130, 0.0078125
        %v1273 = vmul.f32 %v1132, 0.0078125
        %v1274 = vmul.f32 %v1134, 0.0078125
        %v1275 = vmul.f32 %v1136, 0.0078125
        %v1276 = vmul.f32 %v1138, 0.0078125
        %v1277 = vmul.f32 %v1140, 0.0078125
        %v1278 = vmul.f32 %v1142, 0.0078125
        %v1279 = vmul.f32 %v1144, 0.0078125
        %v1280 = vmul.f32 %v1146, 0.0078125
        %v1281 = vmul.f32 %v1148, 0.0078125
        %v1282 = vmul.f32 %v1150, 0.0078125
        %v1283 = vmul.f32 %v1152, 0.0078125
        %v1284 = vmul.f32 %v1154, 0.0078125
        %v1285 = vmul.f32 %v1156, 0.0078125
        %v1286 = vmul.f32 %v1158, 0.0078125
        %v1287 = vmul.f32 %v1159, %v1159
        %v1288 = vmul.f32 %v1160, %v1160
        %v1289 = vmul.f32 %v1161, %v1161
        %v1290 = vmul.f32 %v1162, %v1162
        %v1291 = vmul.f32 %v1163, %v1163
        %v1292 = vmul.f32 %v1164, %v1164
        %v1293 = vmul.f32 %v1165, %v1165
        %v1294 = vmul.f32 %v1166, %v1166
        %v1295 = vmul.f32 %v1167, %v1167
        %v1296 = vmul.f32 %v1168, %v1168
        %v1297 = vmul.f32 %v1169, %v1169
        %v1298 = vmul.f32 %v1170, %v1170
        %v1299 = vmul.f32 %v1171, %v1171
        %v1300 = vmul.f32 %v1172, %v1172
        %v1301 = vmul.f32 %v1173, %v1173
        %v1302 = vmul.f32 %v1174, %v1174
        %v1303 = vmul.f32 %v1175, %v1175
        %v1304 = vmul.f32 %v1176, %v1176
        %v1305 = vmul.f32 %v1177, %v1177
        %v1306 = vmul.f32 %v1178, %v1178
        %v1307 = vmul.f32 %v1179, %v1179
        %v1308 = vmul.f32 %v1180, %v1180
        %v1309 = vmul.f32 %v1181, %v1181
        %v1310 = vmul.f32 %v1182, %v1182
        %v1311 = vmul.f32 %v1183, %v1183
        %v1312 = vmul.f32 %v1184, %v1184
        %v1313 = vmul.f32 %v1185, %v1185
        %v1314 = vmul.f32 %v1186, %v1186
        %v1315 = vmul.f32 %v1187, %v1187
        %v1316 = vmul.f32 %v1188, %v1188
        %v1317 = vmul.f32 %v1189, %v1189
        %v1318 = vmul.f32 %v1190, %v1190
        %v1319 = vmul.f32 %v1191, %v1191
        %v1320 = vmul.f32 %v1192, %v1192
        %v1321 = vmul.f32 %v1193, %v1193
        %v1322 = vmul.f32 %v1194, %v1194
        %v1323 = vmul.f32 %v1195, %v1195
        %v1324 = vmul.f32 %v1196, %v1196
        %v1325 = vmul.f32 %v1197, %v1197
        %v1326 = vmul.f32 %v1198, %v1198
        %v1327 = vmul.f32 %v1199, %v1199
        %v1328 = vmul.f32 %v1200, %v1200
        %v1329 = vmul.f32 %v1201, %v1201
        %v1330 = vmul.f32 %v1202, %v1202
        %v1331 = vmul.f32 %v1203, %v1203
        %v1332 = vmul.f32 %v1204, %v1204
        %v1333 = vmul.f32 %v1205, %v1205
        %v1334 = vmul.f32 %v1206, %v1206
        %v1335 = vmul.f32 %v1207, %v1207
        %v1336 = vmul.f32 %v1208, %v1208
        %v1337 = vmul.f32 %v1209, %v1209
        %v1338 = vmul.f32 %v1210, %v1210
        %v1339 = vmul.f32 %v1211, %v1211
        %v1340 = vmul.f32 %v1212, %v1212
        %v1341 = vmul.f32 %v1213, %v1213
        %v1342 = vmul.f32 %v1214, %v1214
        %v1343 = vmul.f32 %v1215, %v1215
        %v1344 = vmul.f32 %v1216, %v1216
        %v1345 = vmul.f32 %v1217, %v1217
        %v1346 = vmul.f32 %v1218, %v1218
        %v1347 = vmul.f32 %v1219, %v1219
        %v1348 = vmul.f32 %v1220, %v1220
        %v1349 = vmul.f32 %v1221, %v1221
        %v1350 = vmul.f32 %v1222, %v1222
        %v1351 = vsub.f32 %v1223, %v1287
        %v1352 = vsub.f32 %v1224, %v1288
        %v1353 = vsub.f32 %v1225, %v1289
        %v1354 = vsub.f32 %v1226, %v1290
        %v1355 = vsub.f32 %v1227, %v1291
        %v1356 = vsub.f32 %v1228, %v1292
        %v1357 = vsub.f32 %v1229, %v1293
        %v1358 = vsub.f32 %v1230, %v1294
        %v1359 = vsub.f32 %v1231, %v1295
        %v1360 = vsub.f32 %v1232, %v1296
        %v1361 = vsub.f32 %v1233, %v1297
        %v1362 = vsub.f32 %v1234, %v1298
        %v1363 = vsub.f32 %v1235, %v1299
        %v1364 = vsub.f32 %v1236, %v1300
        %v1365 = vsub.f32 %v1237, %v1301
        %v1366 = vsub.f32 %v1238, %v1302
        %v1367 = vsub.f32 %v1239, %v1303
        %v1368 = vsub.f32 %v1240, %v1304
        %v1369 = vsub.f32 %v1241, %v1305
        %v1370 = vsub.f32 %v1242, %v1306
        %v1371 = vsub.f32 %v1243, %v1307
        %v1372 = vsub.f32 %v1244, %v1308
        %v1373 = vsub.f32 %v1245, %v1309
        %v1374 = vsub.f32 %v1246, %v1310
        %v1375 = vsub.f32 %v1247, %v1311
        %v1376 = vsub.f32 %v1248, %v1312
        %v1377 = vsub.f32 %v1249, %v1313
        %v1378 = vsub.f32 %v1250, %v1314
        %v1379 = vsub.f32 %v1251, %v1315
        %v1380 = vsub.f32 %v1252, %v1316
        %v1381 = vsub.f32 %v1253, %v1317
        %v1382 = vsub.f32 %v1254, %v1318
        %v1383 = vsub.f32 %v1255, %v1319
        %v1384 = vsub.f32 %v1256, %v1320
        %v1385 = vsub.f32 %v1257, %v1321
        %v1386 = vsub.f32 %v1258, %v1322
        %v1387 = vsub.f32 %v1259, %v1323
        %v1388 = vsub.f32 %v1260, %v1324
        %v1389 = vsub.f32 %v1261, %v1325
        %v1390 = vsub.f32 %v1262, %v1326
        %v1391 = vsub.f32 %v1263, %v1327
        %v1392 = vsub.f32 %v1264, %v1328
        %v1393 = vsub.f32 %v1265, %v1329
        %v1394 = vsub.f32 %v1266, %v1330
        %v1395 = vsub.f32 %v1267, %v1331
        %v1396 = vsub.f32 %v1268, %v1332
        %v1397 = vsub.f32 %v1269, %v1333
        %v1398 = vsub.f32 %v1270, %v1334
        %v1399 = vsub.f32 %v1271, %v1335
        %v1400 = vsub.f32 %v1272, %v1336
        %v1401 = vsub.f32 %v1273, %v1337
        %v1402 = vsub.f32 %v1274, %v1338
        %v1403 = vsub.f32 %v1275, %v1339
        %v1404 = vsub.f32 %v1276, %v1340
        %v1405 = vsub.f32 %v1277, %v1341
        %v1406 = vsub.f32 %v1278, %v1342
        %v1407 = vsub.f32 %v1279, %v1343
        %v1408 = vsub.f32 %v1280, %v1344
        %v1409 = vsub.f32 %v1281, %v1345
        %v1410 = vsub.f32 %v1282, %v1346
        %v1411 = vsub.f32 %v1283, %v1347
        %v1412 = vsub.f32 %v1284, %v1348
        %v1413 = vsub.f32 %v1285, %v1349
        %v1414 = vsub.f32 %v1286, %v1350
        %v1415 = vmax.f32 %v1351, 0.0
        %v1416 = vmax.f32 %v1352, 0.0
        %v1417 = vmax.f32 %v1353, 0.0
        %v1418 = vmax.f32 %v1354, 0.0
        %v1419 = vmax.f32 %v1355, 0.0
        %v1420 = vmax.f32 %v1356, 0.0
        %v1421 = vmax.f32 %v1357, 0.0
        %v1422 = vmax.f32 %v1358, 0.0
        %v1423 = vmax.f32 %v1359, 0.0
        %v1424 = vmax.f32 %v1360, 0.0
        %v1425 = vmax.f32 %v1361, 0.0
        %v1426 = vmax.f32 %v1362, 0.0
        %v1427 = vmax.f32 %v1363, 0.0
        %v1428 = vmax.f32 %v1364, 0.0
        %v1429 = vmax.f32 %v1365, 0.0
        %v1430 = vmax.f32 %v1366, 0.0
        %v1431 = vmax.f32 %v1367, 0.0
        %v1432 = vmax.f32 %v1368, 0.0
        %v1433 = vmax.f32 %v1369, 0.0
        %v1434 = vmax.f32 %v1370, 0.0
        %v1435 = vmax.f32 %v1371, 0.0
        %v1436 = vmax.f32 %v1372, 0.0
        %v1437 = vmax.f32 %v1373, 0.0
        %v1438 = vmax.f32 %v1374, 0.0
        %v1439 = vmax.f32 %v1375, 0.0
        %v1440 = vmax.f32 %v1376, 0.0
        %v1441 = vmax.f32 %v1377, 0.0
        %v1442 = vmax.f32 %v1378, 0.0
        %v1443 = vmax.f32 %v1379, 0.0
        %v1444 = vmax.f32 %v1380, 0.0
        %v1445 = vmax.f32 %v1381, 0.0
        %v1446 = vmax.f32 %v1382, 0.0
        %v1447 = vmax.f32 %v1383, 0.0
        %v1448 = vmax.f32 %v1384, 0.0
        %v1449 = vmax.f32 %v1385, 0.0
        %v1450 = vmax.f32 %v1386, 0.0
        %v1451 = vmax.f32 %v1387, 0.0
        %v1452 = vmax.f32 %v1388, 0.0
        %v1453 = vmax.f32 %v1389, 0.0
        %v1454 = vmax.f32 %v1390, 0.0
        %v1455 = vmax.f32 %v1391, 0.0
        %v1456 = vmax.f32 %v1392, 0.0
        %v1457 = vmax.f32 %v1393, 0.0
        %v1458 = vmax.f32 %v1394, 0.0
        %v1459 = vmax.f32 %v1395, 0.0
        %v1460 = vmax.f32 %v1396, 0.0
        %v1461 = vmax.f32 %v1397, 0.0
        %v1462 = vmax.f32 %v1398, 0.0
        %v1463 = vmax.f32 %v1399, 0.0
        %v1464 = vmax.f32 %v1400, 0.0
        %v1465 = vmax.f32 %v1401, 0.0
        %v1466 = vmax.f32 %v1402, 0.0
        %v1467 = vmax.f32 %v1403, 0.0
        %v1468 = vmax.f32 %v1404, 0.0
        %v1469 = vmax.f32 %v1405, 0.0
        %v1470 = vmax.f32 %v1406, 0.0
        %v1471 = vmax.f32 %v1407, 0.0
        %v1472 = vmax.f32 %v1408, 0.0
        %v1473 = vmax.f32 %v1409, 0.0
        %v1474 = vmax.f32 %v1410, 0.0
        %v1475 = vmax.f32 %v1411, 0.0
        %v1476 = vmax.f32 %v1412, 0.0
        %v1477 = vmax.f32 %v1413, 0.0
        %v1478 = vmax.f32 %v1414, 0.0
        %v1479 = vsub.f32 %v585, %v1159
        %v1480 = vsub.f32 %v588, %v1160
        %v1481 = vsub.f32 %v593, %v1161
        %v1482 = vsub.f32 %v596, %v1162
        %v1483 = vsub.f32 %v601, %v1163
        %v1484 = vsub.f32 %v604, %v1164
        %v1485 = vsub.f32 %v609, %v1165
        %v1486 = vsub.f32 %v612, %v1166
        %v1487 = vsub.f32 %v617, %v1167
        %v1488 = vsub.f32 %v620, %v1168
        %v1489 = vsub.f32 %v625, %v1169
        %v1490 = vsub.f32 %v628, %v1170
        %v1491 = vsub.f32 %v633, %v1171
        %v1492 = vsub.f32 %v636, %v1172
        %v1493 = vsub.f32 %v641, %v1173
        %v1494 = vsub.f32 %v644, %v1174
        %v1495 = vsub.f32 %v649, %v1175
        %v1496 = vsub.f32 %v652, %v1176
        %v1497 = vsub.f32 %v657, %v1177
        %v1498 = vsub.f32 %v660, %v1178
        %v1499 = vsub.f32 %v665, %v1179
        %v1500 = vsub.f32 %v668, %v1180
        %v1501 = vsub.f32 %v673, %v1181
        %v1502 = vsub.f32 %v676, %v1182
        %v1503 = vsub.f32 %v681, %v1183
        %v1504 = vsub.f32 %v684, %v1184
        %v1505 = vsub.f32 %v689, %v1185
        %v1506 = vsub.f32 %v692, %v1186
        %v1507 = vsub.f32 %v697, %v1187
        %v1508 = vsub.f32 %v700, %v1188
        %v1509 = vsub.f32 %v705, %v1189
        %v1510 = vsub.f32 %v708, %v1190
        %v1511 = vsub.f32 %v713, %v1191
        %v1512 = vsub.f32 %v716, %v1192
        %v1513 = vsub.f32 %v721, %v1193
        %v1514 = vsub.f32 %v724, %v1194
        %v1515 = vsub.f32 %v729, %v1195
        %v1516 = vsub.f32 %v732, %v1196
        %v1517 = vsub.f32 %v737, %v1197
        %v1518 = vsub.f32 %v740, %v1198
        %v1519 = vsub.f32 %v745, %v1199
        %v1520 = vsub.f32 %v748, %v1200
        %v1521 = vsub.f32 %v753, %v1201
        %v1522 = vsub.f32 %v756, %v1202
        %v1523 = vsub.f32 %v761, %v1203
        %v1524 = vsub.f32 %v764, %v1204
        %v1525 = vsub.f32 %v769, %v1205
        %v1526 = vsub.f32 %v772, %v1206
        %v1527 = vsub.f32 %v777, %v1207
        %v1528 = vsub.f32 %v780, %v1208
        %v1529 = vsub.f32 %v785, %v1209
        %v1530 = vsub.f32 %v788, %v1210
        %v1531 = vsub.f32 %v793, %v1211
        %v1532 = vsub.f32 %v796, %v1212
        %v1533 = vsub.f32 %v801, %v1213
        %v1534 = vsub.f32 %v804, %v1214
        %v1535 = vsub.f32 %v809, %v1215
        %v1536 = vsub.f32 %v812, %v1216
        %v1537 = vsub.f32 %v817, %v1217
        %v1538 = vsub.f32 %v820, %v1218
        %v1539 = vsub.f32 %v825, %v1219
        %v1540 = vsub.f32 %v828, %v1220
        %v1541 = vsub.f32 %v833, %v1221
        %v1542 = vsub.f32 %v836, %v1222
        %v1543 = vadd.f32 %v1415, 1e-05
        %v1544 = vadd.f32 %v1416, 1e-05
        %v1545 = vadd.f32 %v1417, 1e-05
        %v1546 = vadd.f32 %v1418, 1e-05
        %v1547 = vadd.f32 %v1419, 1e-05
        %v1548 = vadd.f32 %v1420, 1e-05
        %v1549 = vadd.f32 %v1421, 1e-05
        %v1550 = vadd.f32 %v1422, 1e-05
        %v1551 = vadd.f32 %v1423, 1e-05
        %v1552 = vadd.f32 %v1424, 1e-05
        %v1553 = vadd.f32 %v1425, 1e-05
        %v1554 = vadd.f32 %v1426, 1e-05
        %v1555 = vadd.f32 %v1427, 1e-05
        %v1556 = vadd.f32 %v1428, 1e-05
        %v1557 = vadd.f32 %v1429, 1e-05
        %v1558 = vadd.f32 %v1430, 1e-05
        %v1559 = vadd.f32 %v1431, 1e-05
        %v1560 = vadd.f32 %v1432, 1e-05
        %v1561 = vadd.f32 %v1433, 1e-05
        %v1562 = vadd.f32 %v1434, 1e-05
        %v1563 = vadd.f32 %v1435, 1e-05
        %v1564 = vadd.f32 %v1436, 1e-05
        %v1565 = vadd.f32 %v1437, 1e-05
        %v1566 = vadd.f32 %v1438, 1e-05
        %v1567 = vadd.f32 %v1439, 1e-05
        %v1568 = vadd.f32 %v1440, 1e-05
        %v1569 = vadd.f32 %v1441, 1e-05
        %v1570 = vadd.f32 %v1442, 1e-05
        %v1571 = vadd.f32 %v1443, 1e-05
        %v1572 = vadd.f32 %v1444, 1e-05
        %v1573 = vadd.f32 %v1445, 1e-05
        %v1574 = vadd.f32 %v1446, 1e-05
        %v1575 = vadd.f32 %v1447, 1e-05
        %v1576 = vadd.f32 %v1448, 1e-05
        %v1577 = vadd.f32 %v1449, 1e-05
        %v1578 = vadd.f32 %v1450, 1e-05
        %v1579 = vadd.f32 %v1451, 1e-05
        %v1580 = vadd.f32 %v1452, 1e-05
        %v1581 = vadd.f32 %v1453, 1e-05
        %v1582 = vadd.f32 %v1454, 1e-05
        %v1583 = vadd.f32 %v1455, 1e-05
        %v1584 = vadd.f32 %v1456, 1e-05
        %v1585 = vadd.f32 %v1457, 1e-05
        %v1586 = vadd.f32 %v1458, 1e-05
        %v1587 = vadd.f32 %v1459, 1e-05
        %v1588 = vadd.f32 %v1460, 1e-05
        %v1589 = vadd.f32 %v1461, 1e-05
        %v1590 = vadd.f32 %v1462, 1e-05
        %v1591 = vadd.f32 %v1463, 1e-05
        %v1592 = vadd.f32 %v1464, 1e-05
        %v1593 = vadd.f32 %v1465, 1e-05
        %v1594 = vadd.f32 %v1466, 1e-05
        %v1595 = vadd.f32 %v1467, 1e-05
        %v1596 = vadd.f32 %v1468, 1e-05
        %v1597 = vadd.f32 %v1469, 1e-05
        %v1598 = vadd.f32 %v1470, 1e-05
        %v1599 = vadd.f32 %v1471, 1e-05
        %v1600 = vadd.f32 %v1472, 1e-05
        %v1601 = vadd.f32 %v1473, 1e-05
        %v1602 = vadd.f32 %v1474, 1e-05
        %v1603 = vadd.f32 %v1475, 1e-05
        %v1604 = vadd.f32 %v1476, 1e-05
        %v1605 = vadd.f32 %v1477, 1e-05
        %v1606 = vadd.f32 %v1478, 1e-05
        %v1607 = vrsqrt.pop %v1543
        %v1608 = vrsqrt.pop %v1544
        %v1609 = vrsqrt.pop %v1545
        %v1610 = vrsqrt.pop %v1546
        %v1611 = vrsqrt.pop %v1547
        %v1612 = vrsqrt.pop %v1548
        %v1613 = vrsqrt.pop %v1549
        %v1614 = vrsqrt.pop %v1550
        %v1615 = vrsqrt.pop %v1551
        %v1616 = vrsqrt.pop %v1552
        %v1617 = vrsqrt.pop %v1553
        %v1618 = vrsqrt.pop %v1554
        %v1619 = vrsqrt.pop %v1555
        %v1620 = vrsqrt.pop %v1556
        %v1621 = vrsqrt.pop %v1557
        %v1622 = vrsqrt.pop %v1558
        %v1623 = vrsqrt.pop %v1559
        %v1624 = vrsqrt.pop %v1560
        %v1625 = vrsqrt.pop %v1561
        %v1626 = vrsqrt.pop %v1562
        %v1627 = vrsqrt.pop %v1563
        %v1628 = vrsqrt.pop %v1564
        %v1629 = vrsqrt.pop %v1565
        %v1630 = vrsqrt.pop %v1566
        %v1631 = vrsqrt.pop %v1567
        %v1632 = vrsqrt.pop %v1568
        %v1633 = vrsqrt.pop %v1569
        %v1634 = vrsqrt.pop %v1570
        %v1635 = vrsqrt.pop %v1571
        %v1636 = vrsqrt.pop %v1572
        %v1637 = vrsqrt.pop %v1573
        %v1638 = vrsqrt.pop %v1574
        %v1639 = vrsqrt.pop %v1575
        %v1640 = vrsqrt.pop %v1576
        %v1641 = vrsqrt.pop %v1577
        %v1642 = vrsqrt.pop %v1578
        %v1643 = vrsqrt.pop %v1579
        %v1644 = vrsqrt.pop %v1580
        %v1645 = vrsqrt.pop %v1581
        %v1646 = vrsqrt.pop %v1582
        %v1647 = vrsqrt.pop %v1583
        %v1648 = vrsqrt.pop %v1584
        %v1649 = vrsqrt.pop %v1585
        %v1650 = vrsqrt.pop %v1586
        %v1651 = vrsqrt.pop %v1587
        %v1652 = vrsqrt.pop %v1588
        %v1653 = vrsqrt.pop %v1589
        %v1654 = vrsqrt.pop %v1590
        %v1655 = vrsqrt.pop %v1591
        %v1656 = vrsqrt.pop %v1592
        %v1657 = vrsqrt.pop %v1593
        %v1658 = vrsqrt.pop %v1594
        %v1659 = vrsqrt.pop %v1595
        %v1660 = vrsqrt.pop %v1596
        %v1661 = vrsqrt.pop %v1597
        %v1662 = vrsqrt.pop %v1598
        %v1663 = vrsqrt.pop %v1599
        %v1664 = vrsqrt.pop %v1600
        %v1665 = vrsqrt.pop %v1601
        %v1666 = vrsqrt.pop %v1602
        %v1667 = vrsqrt.pop %v1603
        %v1668 = vrsqrt.pop %v1604
        %v1669 = vrsqrt.pop %v1605
        %v1670 = vrsqrt.pop %v1606
        %v1671 = vmul.f32 %v1479, %v1607
        %v1672 = vmul.f32 %v1480, %v1608
        %v1673 = vmul.f32 %v1481, %v1609
        %v1674 = vmul.f32 %v1482, %v1610
        %v1675 = vmul.f32 %v1483, %v1611
        %v1676 = vmul.f32 %v1484, %v1612
        %v1677 = vmul.f32 %v1485, %v1613
        %v1678 = vmul.f32 %v1486, %v1614
        %v1679 = vmul.f32 %v1487, %v1615
        %v1680 = vmul.f32 %v1488, %v1616
        %v1681 = vmul.f32 %v1489, %v1617
        %v1682 = vmul.f32 %v1490, %v1618
        %v1683 = vmul.f32 %v1491, %v1619
        %v1684 = vmul.f32 %v1492, %v1620
        %v1685 = vmul.f32 %v1493, %v1621
        %v1686 = vmul.f32 %v1494, %v1622
        %v1687 = vmul.f32 %v1495, %v1623
        %v1688 = vmul.f32 %v1496, %v1624
        %v1689 = vmul.f32 %v1497, %v1625
        %v1690 = vmul.f32 %v1498, %v1626
        %v1691 = vmul.f32 %v1499, %v1627
        %v1692 = vmul.f32 %v1500, %v1628
        %v1693 = vmul.f32 %v1501, %v1629
        %v1694 = vmul.f32 %v1502, %v1630
        %v1695 = vmul.f32 %v1503, %v1631
        %v1696 = vmul.f32 %v1504, %v1632
        %v1697 = vmul.f32 %v1505, %v1633
        %v1698 = vmul.f32 %v1506, %v1634
        %v1699 = vmul.f32 %v1507, %v1635
        %v1700 = vmul.f32 %v1508, %v1636
        %v1701 = vmul.f32 %v1509, %v1637
        %v1702 = vmul.f32 %v1510, %v1638
        %v1703 = vmul.f32 %v1511, %v1639
        %v1704 = vmul.f32 %v1512, %v1640
        %v1705 = vmul.f32 %v1513, %v1641
        %v1706 = vmul.f32 %v1514, %v1642
        %v1707 = vmul.f32 %v1515, %v1643
        %v1708 = vmul.f32 %v1516, %v1644
        %v1709 = vmul.f32 %v1517, %v1645
        %v1710 = vmul.f32 %v1518, %v1646
        %v1711 = vmul.f32 %v1519, %v1647
        %v1712 = vmul.f32 %v1520, %v1648
        %v1713 = vmul.f32 %v1521, %v1649
        %v1714 = vmul.f32 %v1522, %v1650
        %v1715 = vmul.f32 %v1523, %v1651
        %v1716 = vmul.f32 %v1524, %v1652
        %v1717 = vmul.f32 %v1525, %v1653
        %v1718 = vmul.f32 %v1526, %v1654
        %v1719 = vmul.f32 %v1527, %v1655
        %v1720 = vmul.f32 %v1528, %v1656
        %v1721 = vmul.f32 %v1529, %v1657
        %v1722 = vmul.f32 %v1530, %v1658
        %v1723 = vmul.f32 %v1531, %v1659
        %v1724 = vmul.f32 %v1532, %v1660
        %v1725 = vmul.f32 %v1533, %v1661
        %v1726 = vmul.f32 %v1534, %v1662
        %v1727 = vmul.f32 %v1535, %v1663
        %v1728 = vmul.f32 %v1536, %v1664
        %v1729 = vmul.f32 %v1537, %v1665
        %v1730 = vmul.f32 %v1538, %v1666
        %v1731 = vmul.f32 %v1539, %v1667
        %v1732 = vmul.f32 %v1540, %v1668
        %v1733 = vmul.f32 %v1541, %v1669
        %v1734 = vmul.f32 %v1542, %v1670
        %v1735 = vld [vmem:[%s3] sm:$0x1]
        %v1737 = vlaneseq
        %v1738 = vshrl.u32 %v1737, 7
        %v1739 = vsub.s32 0, %v1738
        %v1740 = vrot.slane %v1735, %v1739
        %v1742 = vmul.f32 %v1671, %v1740
        %v1743 = vmul.f32 %v1672, %v1740
        %v1744 = vmul.f32 %v1673, %v1740
        %v1745 = vmul.f32 %v1674, %v1740
        %v1746 = vmul.f32 %v1675, %v1740
        %v1747 = vmul.f32 %v1676, %v1740
        %v1748 = vmul.f32 %v1677, %v1740
        %v1749 = vmul.f32 %v1678, %v1740
        %v1750 = vmul.f32 %v1679, %v1740
        %v1751 = vmul.f32 %v1680, %v1740
        %v1752 = vmul.f32 %v1681, %v1740
        %v1753 = vmul.f32 %v1682, %v1740
        %v1754 = vmul.f32 %v1683, %v1740
        %v1755 = vmul.f32 %v1684, %v1740
        %v1756 = vmul.f32 %v1685, %v1740
        %v1757 = vmul.f32 %v1686, %v1740
        %v1758 = vmul.f32 %v1687, %v1740
        %v1759 = vmul.f32 %v1688, %v1740
        %v1760 = vmul.f32 %v1689, %v1740
        %v1761 = vmul.f32 %v1690, %v1740
        %v1762 = vmul.f32 %v1691, %v1740
        %v1763 = vmul.f32 %v1692, %v1740
        %v1764 = vmul.f32 %v1693, %v1740
        %v1765 = vmul.f32 %v1694, %v1740
        %v1766 = vmul.f32 %v1695, %v1740
        %v1767 = vmul.f32 %v1696, %v1740
        %v1768 = vmul.f32 %v1697, %v1740
        %v1769 = vmul.f32 %v1698, %v1740
        %v1770 = vmul.f32 %v1699, %v1740
        %v1771 = vmul.f32 %v1700, %v1740
        %v1772 = vmul.f32 %v1701, %v1740
        %v1773 = vmul.f32 %v1702, %v1740
        %v1774 = vmul.f32 %v1703, %v1740
        %v1775 = vmul.f32 %v1704, %v1740
        %v1776 = vmul.f32 %v1705, %v1740
        %v1777 = vmul.f32 %v1706, %v1740
        %v1778 = vmul.f32 %v1707, %v1740
        %v1779 = vmul.f32 %v1708, %v1740
        %v1780 = vmul.f32 %v1709, %v1740
        %v1781 = vmul.f32 %v1710, %v1740
        %v1782 = vmul.f32 %v1711, %v1740
        %v1783 = vmul.f32 %v1712, %v1740
        %v1784 = vmul.f32 %v1713, %v1740
        %v1785 = vmul.f32 %v1714, %v1740
        %v1786 = vmul.f32 %v1715, %v1740
        %v1787 = vmul.f32 %v1716, %v1740
        %v1788 = vmul.f32 %v1717, %v1740
        %v1789 = vmul.f32 %v1718, %v1740
        %v1790 = vmul.f32 %v1719, %v1740
        %v1791 = vmul.f32 %v1720, %v1740
        %v1792 = vmul.f32 %v1721, %v1740
        %v1793 = vmul.f32 %v1722, %v1740
        %v1794 = vmul.f32 %v1723, %v1740
        %v1795 = vmul.f32 %v1724, %v1740
        %v1796 = vmul.f32 %v1725, %v1740
        %v1797 = vmul.f32 %v1726, %v1740
        %v1798 = vmul.f32 %v1727, %v1740
        %v1799 = vmul.f32 %v1728, %v1740
        %v1800 = vmul.f32 %v1729, %v1740
        %v1801 = vmul.f32 %v1730, %v1740
        %v1802 = vmul.f32 %v1731, %v1740
        %v1803 = vmul.f32 %v1732, %v1740
        %v1804 = vmul.f32 %v1733, %v1740
        %v1805 = vmul.f32 %v1734, %v1740
        %v1806 = vld [vmem:[%s4] sm:$0x1]
        %v1808 = vlaneseq
        %v1809 = vshrl.u32 %v1808, 7
        %v1810 = vsub.s32 0, %v1809
        %v1811 = vrot.slane %v1806, %v1810
        %v1813 = vadd.f32 %v1742, %v1811
        %v1814 = vadd.f32 %v1743, %v1811
        %v1815 = vadd.f32 %v1744, %v1811
        %v1816 = vadd.f32 %v1745, %v1811
        %v1817 = vadd.f32 %v1746, %v1811
        %v1818 = vadd.f32 %v1747, %v1811
        %v1819 = vadd.f32 %v1748, %v1811
        %v1820 = vadd.f32 %v1749, %v1811
        %v1821 = vadd.f32 %v1750, %v1811
        %v1822 = vadd.f32 %v1751, %v1811
        %v1823 = vadd.f32 %v1752, %v1811
        %v1824 = vadd.f32 %v1753, %v1811
        %v1825 = vadd.f32 %v1754, %v1811
        %v1826 = vadd.f32 %v1755, %v1811
        %v1827 = vadd.f32 %v1756, %v1811
        %v1828 = vadd.f32 %v1757, %v1811
        %v1829 = vadd.f32 %v1758, %v1811
        %v1830 = vadd.f32 %v1759, %v1811
        %v1831 = vadd.f32 %v1760, %v1811
        %v1832 = vadd.f32 %v1761, %v1811
        %v1833 = vadd.f32 %v1762, %v1811
        %v1834 = vadd.f32 %v1763, %v1811
        %v1835 = vadd.f32 %v1764, %v1811
        %v1836 = vadd.f32 %v1765, %v1811
        %v1837 = vadd.f32 %v1766, %v1811
        %v1838 = vadd.f32 %v1767, %v1811
        %v1839 = vadd.f32 %v1768, %v1811
        %v1840 = vadd.f32 %v1769, %v1811
        %v1841 = vadd.f32 %v1770, %v1811
        %v1842 = vadd.f32 %v1771, %v1811
        %v1843 = vadd.f32 %v1772, %v1811
        %v1844 = vadd.f32 %v1773, %v1811
        %v1845 = vadd.f32 %v1774, %v1811
        %v1846 = vadd.f32 %v1775, %v1811
        %v1847 = vadd.f32 %v1776, %v1811
        %v1848 = vadd.f32 %v1777, %v1811
        %v1849 = vadd.f32 %v1778, %v1811
        %v1850 = vadd.f32 %v1779, %v1811
        %v1851 = vadd.f32 %v1780, %v1811
        %v1852 = vadd.f32 %v1781, %v1811
        %v1853 = vadd.f32 %v1782, %v1811
        %v1854 = vadd.f32 %v1783, %v1811
        %v1855 = vadd.f32 %v1784, %v1811
        %v1856 = vadd.f32 %v1785, %v1811
        %v1857 = vadd.f32 %v1786, %v1811
        %v1858 = vadd.f32 %v1787, %v1811
        %v1859 = vadd.f32 %v1788, %v1811
        %v1860 = vadd.f32 %v1789, %v1811
        %v1861 = vadd.f32 %v1790, %v1811
        %v1862 = vadd.f32 %v1791, %v1811
        %v1863 = vadd.f32 %v1792, %v1811
        %v1864 = vadd.f32 %v1793, %v1811
        %v1865 = vadd.f32 %v1794, %v1811
        %v1866 = vadd.f32 %v1795, %v1811
        %v1867 = vadd.f32 %v1796, %v1811
        %v1868 = vadd.f32 %v1797, %v1811
        %v1869 = vadd.f32 %v1798, %v1811
        %v1870 = vadd.f32 %v1799, %v1811
        %v1871 = vadd.f32 %v1800, %v1811
        %v1872 = vadd.f32 %v1801, %v1811
        %v1873 = vadd.f32 %v1802, %v1811
        %v1874 = vadd.f32 %v1803, %v1811
        %v1875 = vadd.f32 %v1804, %v1811
        %v1876 = vadd.f32 %v1805, %v1811
        %v1877 = vmax.f32 %v1813, 0.0
        %v1878 = vmax.f32 %v1814, 0.0
        %v1879 = vmax.f32 %v1815, 0.0
        %v1880 = vmax.f32 %v1816, 0.0
        %v1881 = vmax.f32 %v1817, 0.0
        %v1882 = vmax.f32 %v1818, 0.0
        %v1883 = vmax.f32 %v1819, 0.0
        %v1884 = vmax.f32 %v1820, 0.0
        %v1885 = vmax.f32 %v1821, 0.0
        %v1886 = vmax.f32 %v1822, 0.0
        %v1887 = vmax.f32 %v1823, 0.0
        %v1888 = vmax.f32 %v1824, 0.0
        %v1889 = vmax.f32 %v1825, 0.0
        %v1890 = vmax.f32 %v1826, 0.0
        %v1891 = vmax.f32 %v1827, 0.0
        %v1892 = vmax.f32 %v1828, 0.0
        %v1893 = vmax.f32 %v1829, 0.0
        %v1894 = vmax.f32 %v1830, 0.0
        %v1895 = vmax.f32 %v1831, 0.0
        %v1896 = vmax.f32 %v1832, 0.0
        %v1897 = vmax.f32 %v1833, 0.0
        %v1898 = vmax.f32 %v1834, 0.0
        %v1899 = vmax.f32 %v1835, 0.0
        %v1900 = vmax.f32 %v1836, 0.0
        %v1901 = vmax.f32 %v1837, 0.0
        %v1902 = vmax.f32 %v1838, 0.0
        %v1903 = vmax.f32 %v1839, 0.0
        %v1904 = vmax.f32 %v1840, 0.0
        %v1905 = vmax.f32 %v1841, 0.0
        %v1906 = vmax.f32 %v1842, 0.0
        %v1907 = vmax.f32 %v1843, 0.0
        %v1908 = vmax.f32 %v1844, 0.0
        %v1909 = vmax.f32 %v1845, 0.0
        %v1910 = vmax.f32 %v1846, 0.0
        %v1911 = vmax.f32 %v1847, 0.0
        %v1912 = vmax.f32 %v1848, 0.0
        %v1913 = vmax.f32 %v1849, 0.0
        %v1914 = vmax.f32 %v1850, 0.0
        %v1915 = vmax.f32 %v1851, 0.0
        %v1916 = vmax.f32 %v1852, 0.0
        %v1917 = vmax.f32 %v1853, 0.0
        %v1918 = vmax.f32 %v1854, 0.0
        %v1919 = vmax.f32 %v1855, 0.0
        %v1920 = vmax.f32 %v1856, 0.0
        %v1921 = vmax.f32 %v1857, 0.0
        %v1922 = vmax.f32 %v1858, 0.0
        %v1923 = vmax.f32 %v1859, 0.0
        %v1924 = vmax.f32 %v1860, 0.0
        %v1925 = vmax.f32 %v1861, 0.0
        %v1926 = vmax.f32 %v1862, 0.0
        %v1927 = vmax.f32 %v1863, 0.0
        %v1928 = vmax.f32 %v1864, 0.0
        %v1929 = vmax.f32 %v1865, 0.0
        %v1930 = vmax.f32 %v1866, 0.0
        %v1931 = vmax.f32 %v1867, 0.0
        %v1932 = vmax.f32 %v1868, 0.0
        %v1933 = vmax.f32 %v1869, 0.0
        %v1934 = vmax.f32 %v1870, 0.0
        %v1935 = vmax.f32 %v1871, 0.0
        %v1936 = vmax.f32 %v1872, 0.0
        %v1937 = vmax.f32 %v1873, 0.0
        %v1938 = vmax.f32 %v1874, 0.0
        %v1939 = vmax.f32 %v1875, 0.0
        %v1940 = vmax.f32 %v1876, 0.0
        %v1941 = vpack.c.bf16 %v1878, %v1877
        %v1942 = vpack.c.bf16 %v1880, %v1879
        %v1943 = vpack.c.bf16 %v1882, %v1881
        %v1944 = vpack.c.bf16 %v1884, %v1883
        %v1945 = vpack.c.bf16 %v1886, %v1885
        %v1946 = vpack.c.bf16 %v1888, %v1887
        %v1947 = vpack.c.bf16 %v1890, %v1889
        %v1948 = vpack.c.bf16 %v1892, %v1891
        %v1949 = vpack.c.bf16 %v1894, %v1893
        %v1950 = vpack.c.bf16 %v1896, %v1895
        %v1951 = vpack.c.bf16 %v1898, %v1897
        %v1952 = vpack.c.bf16 %v1900, %v1899
        %v1953 = vpack.c.bf16 %v1902, %v1901
        %v1954 = vpack.c.bf16 %v1904, %v1903
        %v1955 = vpack.c.bf16 %v1906, %v1905
        %v1956 = vpack.c.bf16 %v1908, %v1907
        %v1957 = vpack.c.bf16 %v1910, %v1909
        %v1958 = vpack.c.bf16 %v1912, %v1911
        %v1959 = vpack.c.bf16 %v1914, %v1913
        %v1960 = vpack.c.bf16 %v1916, %v1915
        %v1961 = vpack.c.bf16 %v1918, %v1917
        %v1962 = vpack.c.bf16 %v1920, %v1919
        %v1963 = vpack.c.bf16 %v1922, %v1921
        %v1964 = vpack.c.bf16 %v1924, %v1923
        %v1965 = vpack.c.bf16 %v1926, %v1925
        %v1966 = vpack.c.bf16 %v1928, %v1927
        %v1967 = vpack.c.bf16 %v1930, %v1929
        %v1968 = vpack.c.bf16 %v1932, %v1931
        %v1969 = vpack.c.bf16 %v1934, %v1933
        %v1970 = vpack.c.bf16 %v1936, %v1935
        %v1971 = vpack.c.bf16 %v1938, %v1937
        %v1972 = vpack.c.bf16 %v1940, %v1939
        %v1973 = vld [vmem:[#allocation7] sm:$0xf]
        %v1974 = vld [vmem:[#allocation7 + $0x4] sm:$0xf]
        %v1975 = vld [vmem:[#allocation7 + $0x8] sm:$0xf]
        %v1976 = vld [vmem:[#allocation7 + $0xc] sm:$0xf]
        %v1977 = vld [vmem:[#allocation7 + $0x10] sm:$0xf]
        %v1978 = vld [vmem:[#allocation7 + $0x14] sm:$0xf]
        %v1979 = vld [vmem:[#allocation7 + $0x18] sm:$0xf]
        %v1980 = vld [vmem:[#allocation7 + $0x1c] sm:$0xf]
        %v1981 = vld [vmem:[#allocation7 + $0x20] sm:$0xf]
        %v1982 = vld [vmem:[#allocation7 + $0x24] sm:$0xf]
        %v1983 = vld [vmem:[#allocation7 + $0x28] sm:$0xf]
        %v1984 = vld [vmem:[#allocation7 + $0x2c] sm:$0xf]
        %v1985 = vld [vmem:[#allocation7 + $0x30] sm:$0xf]
        %v1986 = vld [vmem:[#allocation7 + $0x34] sm:$0xf]
        %v1987 = vld [vmem:[#allocation7 + $0x38] sm:$0xf]
        %v1988 = vld [vmem:[#allocation7 + $0x3c] sm:$0xf]
        %v1989 = vld [vmem:[%s6] sm:$0x1]
        %v1991 = vlaneseq
        %v1992 = vshrl.u32 %v1991, 7
        %v1993 = vsub.s32 0, %v1992
        %v1994 = vrot.slane %v1989, %v1993
        %v2012 = vunpack.c.l.b16 %v1973
        %v2013 = vunpack.c.l.b16 %v1974
        %v2014 = vunpack.c.l.b16 %v1975
        %v2015 = vunpack.c.l.b16 %v1976
        %v2016 = vunpack.c.l.b16 %v1977
        %v2017 = vunpack.c.l.b16 %v1978
        %v2018 = vunpack.c.l.b16 %v1979
        %v2019 = vunpack.c.l.b16 %v1980
        %v2020 = vunpack.c.l.b16 %v1981
        %v2021 = vunpack.c.l.b16 %v1982
        %v2022 = vunpack.c.l.b16 %v1983
        %v2023 = vunpack.c.l.b16 %v1984
        %v2024 = vunpack.c.l.b16 %v1985
        %v2025 = vunpack.c.l.b16 %v1986
        %v2026 = vunpack.c.l.b16 %v1987
        %v2027 = vunpack.c.l.b16 %v1988
        %v2028 = vpack.c.b16 %v2013, %v2012
        %v2029 = vpack.c.b16 %v2015, %v2014
        %v2030 = vpack.c.b16 %v2017, %v2016
        %v2031 = vpack.c.b16 %v2019, %v2018
        %v2032 = vpack.c.b16 %v2021, %v2020
        %v2033 = vpack.c.b16 %v2023, %v2022
        %v2034 = vpack.c.b16 %v2025, %v2024
        %v2035 = vpack.c.b16 %v2027, %v2026
        %2044 = vmatprep.subr.bf16.mxu0 0
        %2045 = vmatpush1.bf16.msra.mxu0 %v2035
        %2046 = vmatprep.subr.bf16.mxu0 0
        %2047 = vmatpush1.bf16.msra.mxu0 %v2034
        %2048 = vmatprep.subr.bf16.mxu0 0
        %2049 = vmatpush1.bf16.msra.mxu0 %v2033
        %2050 = vmatprep.subr.bf16.mxu0 0
        %2051 = vmatpush1.bf16.msra.mxu0 %v2032
        %2052 = vmatprep.subr.bf16.mxu0 0
        %2053 = vmatpush1.bf16.msra.mxu0 %v2031
        %2054 = vmatprep.subr.bf16.mxu0 0
        %2055 = vmatpush1.bf16.msra.mxu0 %v2030
        %2056 = vmatprep.subr.bf16.mxu0 0
        %2057 = vmatpush1.bf16.msra.mxu0 %v2029
        %2058 = vmatprep.subr.bf16.mxu0 0
        %2059 = vmatpush1.bf16.msra.mxu0 %v2028
        %2060 = vmatprep.subr.bf16.mxu0 0
        %2061 = vmatpush2.bf16.msra.mxu0 0
        %2062 = vmatprep.subr.bf16.mxu0 0
        %2063 = vmatpush2.bf16.msra.mxu0 0
        %2064 = vmatprep.subr.bf16.mxu0 0
        %2065 = vmatpush2.bf16.msra.mxu0 0
        %2066 = vmatprep.subr.bf16.mxu0 0
        %2067 = vmatpush2.bf16.msra.mxu0 0
        %2068 = vmatprep.subr.bf16.mxu0 0
        %2069 = vmatpush2.bf16.msra.mxu0 0
        %2070 = vmatprep.subr.bf16.mxu0 0
        %2071 = vmatpush2.bf16.msra.mxu0 0
        %2072 = vmatprep.subr.bf16.mxu0 0
        %2073 = vmatpush2.bf16.msra.mxu0 0
        %2074 = vmatprep.subr.bf16.mxu0 0
        %2075 = vmatpush2.bf16.msra.mxu0 0
        %2076 = vmatprep.mubr.bf16.mxu0 0
        %2077 = vmatmul.mubr.bf16.gmra.mxu0 %v1941
        %v2078 = vpop.f32.mrf.mxu0
        %v2079 = vadd.f32 %v1994, %v2078
        %v2080 = vpop.f32.mrf.mxu0
        %v2081 = vpop.f32.mrf.mxu0
        %v2082 = vadd.f32 %v1994, %v2081
        %v2083 = vpop.f32.mrf.mxu0
        %2084 = vmatprep.mubr.bf16.mxu0 0
        %2085 = vmatmul.mubr.bf16.gmra.mxu0 %v1942
        %v2086 = vpop.f32.mrf.mxu0
        %v2087 = vadd.f32 %v1994, %v2086
        %v2088 = vpop.f32.mrf.mxu0
        %v2089 = vpop.f32.mrf.mxu0
        %v2090 = vadd.f32 %v1994, %v2089
        %v2091 = vpop.f32.mrf.mxu0
        %2092 = vmatprep.mubr.bf16.mxu0 0
        %2093 = vmatmul.mubr.bf16.gmra.mxu0 %v1943
        %v2094 = vpop.f32.mrf.mxu0
        %v2095 = vadd.f32 %v1994, %v2094
        %v2096 = vpop.f32.mrf.mxu0
        %v2097 = vpop.f32.mrf.mxu0
        %v2098 = vadd.f32 %v1994, %v2097
        %v2099 = vpop.f32.mrf.mxu0
        %2100 = vmatprep.mubr.bf16.mxu0 0
        %2101 = vmatmul.mubr.bf16.gmra.mxu0 %v1944
        %v2102 = vpop.f32.mrf.mxu0
        %v2103 = vadd.f32 %v1994, %v2102
        %v2104 = vpop.f32.mrf.mxu0
        %v2105 = vpop.f32.mrf.mxu0
        %v2106 = vadd.f32 %v1994, %v2105
        %v2107 = vpop.f32.mrf.mxu0
        %2108 = vmatprep.mubr.bf16.mxu0 0
        %2109 = vmatmul.mubr.bf16.gmra.mxu0 %v1945
        %v2110 = vpop.f32.mrf.mxu0
        %v2111 = vadd.f32 %v1994, %v2110
        %v2112 = vpop.f32.mrf.mxu0
        %v2113 = vpop.f32.mrf.mxu0
        %v2114 = vadd.f32 %v1994, %v2113
        %v2115 = vpop.f32.mrf.mxu0
        %2116 = vmatprep.mubr.bf16.mxu0 0
        %2117 = vmatmul.mubr.bf16.gmra.mxu0 %v1946
        %v2118 = vpop.f32.mrf.mxu0
        %v2119 = vadd.f32 %v1994, %v2118
        %v2120 = vpop.f32.mrf.mxu0
        %v2121 = vpop.f32.mrf.mxu0
        %v2122 = vadd.f32 %v1994, %v2121
        %v2123 = vpop.f32.mrf.mxu0
        %2124 = vmatprep.mubr.bf16.mxu0 0
        %2125 = vmatmul.mubr.bf16.gmra.mxu0 %v1947
        %v2126 = vpop.f32.mrf.mxu0
        %v2127 = vadd.f32 %v1994, %v2126
        %v2128 = vpop.f32.mrf.mxu0
        %v2129 = vpop.f32.mrf.mxu0
        %v2130 = vadd.f32 %v1994, %v2129
        %v2131 = vpop.f32.mrf.mxu0
        %2132 = vmatprep.mubr.bf16.mxu0 0
        %2133 = vmatmul.mubr.bf16.gmra.mxu0 %v1948
        %v2134 = vpop.f32.mrf.mxu0
        %v2135 = vadd.f32 %v1994, %v2134
        %v2136 = vpop.f32.mrf.mxu0
        %v2137 = vpop.f32.mrf.mxu0
        %v2138 = vadd.f32 %v1994, %v2137
        %v2139 = vpop.f32.mrf.mxu0
        %2140 = vmatprep.mubr.bf16.mxu0 0
        %2141 = vmatmul.mubr.bf16.gmra.mxu0 %v1949
        %v2142 = vpop.f32.mrf.mxu0
        %v2143 = vadd.f32 %v1994, %v2142
        %v2144 = vpop.f32.mrf.mxu0
        %v2145 = vpop.f32.mrf.mxu0
        %v2146 = vadd.f32 %v1994, %v2145
        %v2147 = vpop.f32.mrf.mxu0
        %2148 = vmatprep.mubr.bf16.mxu0 0
        %2149 = vmatmul.mubr.bf16.gmra.mxu0 %v1950
        %v2150 = vpop.f32.mrf.mxu0
        %v2151 = vadd.f32 %v1994, %v2150
        %v2152 = vpop.f32.mrf.mxu0
        %v2153 = vpop.f32.mrf.mxu0
        %v2154 = vadd.f32 %v1994, %v2153
        %v2155 = vpop.f32.mrf.mxu0
        %2156 = vmatprep.mubr.bf16.mxu0 0
        %2157 = vmatmul.mubr.bf16.gmra.mxu0 %v1951
        %v2158 = vpop.f32.mrf.mxu0
        %v2159 = vadd.f32 %v1994, %v2158
        %v2160 = vpop.f32.mrf.mxu0
        %v2161 = vpop.f32.mrf.mxu0
        %v2162 = vadd.f32 %v1994, %v2161
        %v2163 = vpop.f32.mrf.mxu0
        %2164 = vmatprep.mubr.bf16.mxu0 0
        %2165 = vmatmul.mubr.bf16.gmra.mxu0 %v1952
        %v2166 = vpop.f32.mrf.mxu0
        %v2167 = vadd.f32 %v1994, %v2166
        %v2168 = vpop.f32.mrf.mxu0
        %v2169 = vpop.f32.mrf.mxu0
        %v2170 = vadd.f32 %v1994, %v2169
        %v2171 = vpop.f32.mrf.mxu0
        %2172 = vmatprep.mubr.bf16.mxu0 0
        %2173 = vmatmul.mubr.bf16.gmra.mxu0 %v1953
        %v2174 = vpop.f32.mrf.mxu0
        %v2175 = vadd.f32 %v1994, %v2174
        %v2176 = vpop.f32.mrf.mxu0
        %v2177 = vpop.f32.mrf.mxu0
        %v2178 = vadd.f32 %v1994, %v2177
        %v2179 = vpop.f32.mrf.mxu0
        %2180 = vmatprep.mubr.bf16.mxu0 0
        %2181 = vmatmul.mubr.bf16.gmra.mxu0 %v1954
        %v2182 = vpop.f32.mrf.mxu0
        %v2183 = vadd.f32 %v1994, %v2182
        %v2184 = vpop.f32.mrf.mxu0
        %v2185 = vpop.f32.mrf.mxu0
        %v2186 = vadd.f32 %v1994, %v2185
        %v2187 = vpop.f32.mrf.mxu0
        %2188 = vmatprep.mubr.bf16.mxu0 0
        %2189 = vmatmul.mubr.bf16.gmra.mxu0 %v1955
        %v2190 = vpop.f32.mrf.mxu0
        %v2191 = vadd.f32 %v1994, %v2190
        %v2192 = vpop.f32.mrf.mxu0
        %v2193 = vpop.f32.mrf.mxu0
        %v2194 = vadd.f32 %v1994, %v2193
        %v2195 = vpop.f32.mrf.mxu0
        %2196 = vmatprep.mubr.bf16.mxu0 0
        %2197 = vmatmul.mubr.bf16.gmra.mxu0 %v1956
        %v2198 = vpop.f32.mrf.mxu0
        %v2199 = vadd.f32 %v1994, %v2198
        %v2200 = vpop.f32.mrf.mxu0
        %v2201 = vpop.f32.mrf.mxu0
        %v2202 = vadd.f32 %v1994, %v2201
        %v2203 = vpop.f32.mrf.mxu0
        %2204 = vmatprep.mubr.bf16.mxu0 0
        %2205 = vmatmul.mubr.bf16.gmra.mxu0 %v1957
        %v2206 = vpop.f32.mrf.mxu0
        %v2207 = vadd.f32 %v1994, %v2206
        %v2208 = vpop.f32.mrf.mxu0
        %v2209 = vpop.f32.mrf.mxu0
        %v2210 = vadd.f32 %v1994, %v2209
        %v2211 = vpop.f32.mrf.mxu0
        %2212 = vmatprep.mubr.bf16.mxu0 0
        %2213 = vmatmul.mubr.bf16.gmra.mxu0 %v1958
        %v2214 = vpop.f32.mrf.mxu0
        %v2215 = vadd.f32 %v1994, %v2214
        %v2216 = vpop.f32.mrf.mxu0
        %v2217 = vpop.f32.mrf.mxu0
        %v2218 = vadd.f32 %v1994, %v2217
        %v2219 = vpop.f32.mrf.mxu0
        %2220 = vmatprep.mubr.bf16.mxu0 0
        %2221 = vmatmul.mubr.bf16.gmra.mxu0 %v1959
        %v2222 = vpop.f32.mrf.mxu0
        %v2223 = vadd.f32 %v1994, %v2222
        %v2224 = vpop.f32.mrf.mxu0
        %v2225 = vpop.f32.mrf.mxu0
        %v2226 = vadd.f32 %v1994, %v2225
        %v2227 = vpop.f32.mrf.mxu0
        %2228 = vmatprep.mubr.bf16.mxu0 0
        %2229 = vmatmul.mubr.bf16.gmra.mxu0 %v1960
        %v2230 = vpop.f32.mrf.mxu0
        %v2231 = vadd.f32 %v1994, %v2230
        %v2232 = vpop.f32.mrf.mxu0
        %v2233 = vpop.f32.mrf.mxu0
        %v2234 = vadd.f32 %v1994, %v2233
        %v2235 = vpop.f32.mrf.mxu0
        %2236 = vmatprep.mubr.bf16.mxu0 0
        %2237 = vmatmul.mubr.bf16.gmra.mxu0 %v1961
        %v2238 = vpop.f32.mrf.mxu0
        %v2239 = vadd.f32 %v1994, %v2238
        %v2240 = vpop.f32.mrf.mxu0
        %v2241 = vpop.f32.mrf.mxu0
        %v2242 = vadd.f32 %v1994, %v2241
        %v2243 = vpop.f32.mrf.mxu0
        %2244 = vmatprep.mubr.bf16.mxu0 0
        %2245 = vmatmul.mubr.bf16.gmra.mxu0 %v1962
        %v2246 = vpop.f32.mrf.mxu0
        %v2247 = vadd.f32 %v1994, %v2246
        %v2248 = vpop.f32.mrf.mxu0
        %v2249 = vpop.f32.mrf.mxu0
        %v2250 = vadd.f32 %v1994, %v2249
        %v2251 = vpop.f32.mrf.mxu0
        %2252 = vmatprep.mubr.bf16.mxu0 0
        %2253 = vmatmul.mubr.bf16.gmra.mxu0 %v1963
        %v2254 = vpop.f32.mrf.mxu0
        %v2255 = vadd.f32 %v1994, %v2254
        %v2256 = vpop.f32.mrf.mxu0
        %v2257 = vpop.f32.mrf.mxu0
        %v2258 = vadd.f32 %v1994, %v2257
        %v2259 = vpop.f32.mrf.mxu0
        %2260 = vmatprep.mubr.bf16.mxu0 0
        %2261 = vmatmul.mubr.bf16.gmra.mxu0 %v1964
        %v2262 = vpop.f32.mrf.mxu0
        %v2263 = vadd.f32 %v1994, %v2262
        %v2264 = vpop.f32.mrf.mxu0
        %v2265 = vpop.f32.mrf.mxu0
        %v2266 = vadd.f32 %v1994, %v2265
        %v2267 = vpop.f32.mrf.mxu0
        %2268 = vmatprep.mubr.bf16.mxu0 0
        %2269 = vmatmul.mubr.bf16.gmra.mxu0 %v1965
        %v2270 = vpop.f32.mrf.mxu0
        %v2271 = vadd.f32 %v1994, %v2270
        %v2272 = vpop.f32.mrf.mxu0
        %v2273 = vpop.f32.mrf.mxu0
        %v2274 = vadd.f32 %v1994, %v2273
        %v2275 = vpop.f32.mrf.mxu0
        %2276 = vmatprep.mubr.bf16.mxu0 0
        %2277 = vmatmul.mubr.bf16.gmra.mxu0 %v1966
        %v2278 = vpop.f32.mrf.mxu0
        %v2279 = vadd.f32 %v1994, %v2278
        %v2280 = vpop.f32.mrf.mxu0
        %v2281 = vpop.f32.mrf.mxu0
        %v2282 = vadd.f32 %v1994, %v2281
        %v2283 = vpop.f32.mrf.mxu0
        %2284 = vmatprep.mubr.bf16.mxu0 0
        %2285 = vmatmul.mubr.bf16.gmra.mxu0 %v1967
        %v2286 = vpop.f32.mrf.mxu0
        %v2287 = vadd.f32 %v1994, %v2286
        %v2288 = vpop.f32.mrf.mxu0
        %v2289 = vpop.f32.mrf.mxu0
        %v2290 = vadd.f32 %v1994, %v2289
        %v2291 = vpop.f32.mrf.mxu0
        %2292 = vmatprep.mubr.bf16.mxu0 0
        %2293 = vmatmul.mubr.bf16.gmra.mxu0 %v1968
        %v2294 = vpop.f32.mrf.mxu0
        %v2295 = vadd.f32 %v1994, %v2294
        %v2296 = vpop.f32.mrf.mxu0
        %v2297 = vpop.f32.mrf.mxu0
        %v2298 = vadd.f32 %v1994, %v2297
        %v2299 = vpop.f32.mrf.mxu0
        %2300 = vmatprep.mubr.bf16.mxu0 0
        %2301 = vmatmul.mubr.bf16.gmra.mxu0 %v1969
        %v2302 = vpop.f32.mrf.mxu0
        %v2303 = vadd.f32 %v1994, %v2302
        %v2304 = vpop.f32.mrf.mxu0
        %v2305 = vpop.f32.mrf.mxu0
        %v2306 = vadd.f32 %v1994, %v2305
        %v2307 = vpop.f32.mrf.mxu0
        %2308 = vmatprep.mubr.bf16.mxu0 0
        %2309 = vmatmul.mubr.bf16.gmra.mxu0 %v1970
        %v2310 = vpop.f32.mrf.mxu0
        %v2311 = vadd.f32 %v1994, %v2310
        %v2312 = vpop.f32.mrf.mxu0
        %v2313 = vpop.f32.mrf.mxu0
        %v2314 = vadd.f32 %v1994, %v2313
        %v2315 = vpop.f32.mrf.mxu0
        %2316 = vmatprep.mubr.bf16.mxu0 0
        %2317 = vmatmul.mubr.bf16.gmra.mxu0 %v1971
        %v2318 = vpop.f32.mrf.mxu0
        %v2319 = vadd.f32 %v1994, %v2318
        %v2320 = vpop.f32.mrf.mxu0
        %v2321 = vpop.f32.mrf.mxu0
        %v2322 = vadd.f32 %v1994, %v2321
        %v2323 = vpop.f32.mrf.mxu0
        %2324 = vmatprep.mubr.bf16.mxu0 0
        %2325 = vmatmul.mubr.bf16.gmra.mxu0 %v1972
        %v2326 = vpop.f32.mrf.mxu0
        %v2327 = vadd.f32 %v1994, %v2326
        %v2328 = vpop.f32.mrf.mxu0
        %v2329 = vpop.f32.mrf.mxu0
        %v2330 = vadd.f32 %v1994, %v2329
        %v2331 = vpop.f32.mrf.mxu0
        %2332 = vdwg.mxu0
        %2333 = vadd.xlane.f32.xlu0 %v2079
        %v2334 = vpop.xlane.xlu0 %2333
        %2335 = vadd.xlane.f32.xlu0 %v2082
        %v2336 = vpop.xlane.xlu0 %2335
        %2337 = vadd.xlane.f32.xlu0 %v2087
        %v2338 = vpop.xlane.xlu0 %2337
        %2339 = vadd.xlane.f32.xlu0 %v2090
        %v2340 = vpop.xlane.xlu0 %2339
        %2341 = vadd.xlane.f32.xlu0 %v2095
        %v2342 = vpop.xlane.xlu0 %2341
        %2343 = vadd.xlane.f32.xlu0 %v2098
        %v2344 = vpop.xlane.xlu0 %2343
        %2345 = vadd.xlane.f32.xlu0 %v2103
        %v2346 = vpop.xlane.xlu0 %2345
        %2347 = vadd.xlane.f32.xlu0 %v2106
        %v2348 = vpop.xlane.xlu0 %2347
        %2349 = vadd.xlane.f32.xlu0 %v2111
        %v2350 = vpop.xlane.xlu0 %2349
        %2351 = vadd.xlane.f32.xlu0 %v2114
        %v2352 = vpop.xlane.xlu0 %2351
        %2353 = vadd.xlane.f32.xlu0 %v2119
        %v2354 = vpop.xlane.xlu0 %2353
        %2355 = vadd.xlane.f32.xlu0 %v2122
        %v2356 = vpop.xlane.xlu0 %2355
        %2357 = vadd.xlane.f32.xlu0 %v2127
        %v2358 = vpop.xlane.xlu0 %2357
        %2359 = vadd.xlane.f32.xlu0 %v2130
        %v2360 = vpop.xlane.xlu0 %2359
        %2361 = vadd.xlane.f32.xlu0 %v2135
        %v2362 = vpop.xlane.xlu0 %2361
        %2363 = vadd.xlane.f32.xlu0 %v2138
        %v2364 = vpop.xlane.xlu0 %2363
        %2365 = vadd.xlane.f32.xlu0 %v2143
        %v2366 = vpop.xlane.xlu0 %2365
        %2367 = vadd.xlane.f32.xlu0 %v2146
        %v2368 = vpop.xlane.xlu0 %2367
        %2369 = vadd.xlane.f32.xlu0 %v2151
        %v2370 = vpop.xlane.xlu0 %2369
        %2371 = vadd.xlane.f32.xlu0 %v2154
        %v2372 = vpop.xlane.xlu0 %2371
        %2373 = vadd.xlane.f32.xlu0 %v2159
        %v2374 = vpop.xlane.xlu0 %2373
        %2375 = vadd.xlane.f32.xlu0 %v2162
        %v2376 = vpop.xlane.xlu0 %2375
        %2377 = vadd.xlane.f32.xlu0 %v2167
        %v2378 = vpop.xlane.xlu0 %2377
        %2379 = vadd.xlane.f32.xlu0 %v2170
        %v2380 = vpop.xlane.xlu0 %2379
        %2381 = vadd.xlane.f32.xlu0 %v2175
        %v2382 = vpop.xlane.xlu0 %2381
        %2383 = vadd.xlane.f32.xlu0 %v2178
        %v2384 = vpop.xlane.xlu0 %2383
        %2385 = vadd.xlane.f32.xlu0 %v2183
        %v2386 = vpop.xlane.xlu0 %2385
        %2387 = vadd.xlane.f32.xlu0 %v2186
        %v2388 = vpop.xlane.xlu0 %2387
        %2389 = vadd.xlane.f32.xlu0 %v2191
        %v2390 = vpop.xlane.xlu0 %2389
        %2391 = vadd.xlane.f32.xlu0 %v2194
        %v2392 = vpop.xlane.xlu0 %2391
        %2393 = vadd.xlane.f32.xlu0 %v2199
        %v2394 = vpop.xlane.xlu0 %2393
        %2395 = vadd.xlane.f32.xlu0 %v2202
        %v2396 = vpop.xlane.xlu0 %2395
        %2397 = vadd.xlane.f32.xlu0 %v2207
        %v2398 = vpop.xlane.xlu0 %2397
        %2399 = vadd.xlane.f32.xlu0 %v2210
        %v2400 = vpop.xlane.xlu0 %2399
        %2401 = vadd.xlane.f32.xlu0 %v2215
        %v2402 = vpop.xlane.xlu0 %2401
        %2403 = vadd.xlane.f32.xlu0 %v2218
        %v2404 = vpop.xlane.xlu0 %2403
        %2405 = vadd.xlane.f32.xlu0 %v2223
        %v2406 = vpop.xlane.xlu0 %2405
        %2407 = vadd.xlane.f32.xlu0 %v2226
        %v2408 = vpop.xlane.xlu0 %2407
        %2409 = vadd.xlane.f32.xlu0 %v2231
        %v2410 = vpop.xlane.xlu0 %2409
        %2411 = vadd.xlane.f32.xlu0 %v2234
        %v2412 = vpop.xlane.xlu0 %2411
        %2413 = vadd.xlane.f32.xlu0 %v2239
        %v2414 = vpop.xlane.xlu0 %2413
        %2415 = vadd.xlane.f32.xlu0 %v2242
        %v2416 = vpop.xlane.xlu0 %2415
        %2417 = vadd.xlane.f32.xlu0 %v2247
        %v2418 = vpop.xlane.xlu0 %2417
        %2419 = vadd.xlane.f32.xlu0 %v2250
        %v2420 = vpop.xlane.xlu0 %2419
        %2421 = vadd.xlane.f32.xlu0 %v2255
        %v2422 = vpop.xlane.xlu0 %2421
        %2423 = vadd.xlane.f32.xlu0 %v2258
        %v2424 = vpop.xlane.xlu0 %2423
        %2425 = vadd.xlane.f32.xlu0 %v2263
        %v2426 = vpop.xlane.xlu0 %2425
        %2427 = vadd.xlane.f32.xlu0 %v2266
        %v2428 = vpop.xlane.xlu0 %2427
        %2429 = vadd.xlane.f32.xlu0 %v2271
        %v2430 = vpop.xlane.xlu0 %2429
        %2431 = vadd.xlane.f32.xlu0 %v2274
        %v2432 = vpop.xlane.xlu0 %2431
        %2433 = vadd.xlane.f32.xlu0 %v2279
        %v2434 = vpop.xlane.xlu0 %2433
        %2435 = vadd.xlane.f32.xlu0 %v2282
        %v2436 = vpop.xlane.xlu0 %2435
        %2437 = vadd.xlane.f32.xlu0 %v2287
        %v2438 = vpop.xlane.xlu0 %2437
        %2439 = vadd.xlane.f32.xlu0 %v2290
        %v2440 = vpop.xlane.xlu0 %2439
        %2441 = vadd.xlane.f32.xlu0 %v2295
        %v2442 = vpop.xlane.xlu0 %2441
        %2443 = vadd.xlane.f32.xlu0 %v2298
        %v2444 = vpop.xlane.xlu0 %2443
        %2445 = vadd.xlane.f32.xlu0 %v2303
        %v2446 = vpop.xlane.xlu0 %2445
        %2447 = vadd.xlane.f32.xlu0 %v2306
        %v2448 = vpop.xlane.xlu0 %2447
        %2449 = vadd.xlane.f32.xlu0 %v2311
        %v2450 = vpop.xlane.xlu0 %2449
        %2451 = vadd.xlane.f32.xlu0 %v2314
        %v2452 = vpop.xlane.xlu0 %2451
        %2453 = vadd.xlane.f32.xlu0 %v2319
        %v2454 = vpop.xlane.xlu0 %2453
        %2455 = vadd.xlane.f32.xlu0 %v2322
        %v2456 = vpop.xlane.xlu0 %2455
        %2457 = vadd.xlane.f32.xlu0 %v2327
        %v2458 = vpop.xlane.xlu0 %2457
        %2459 = vadd.xlane.f32.xlu0 %v2330
        %v2460 = vpop.xlane.xlu0 %2459
        %v2461 = vmul.f32 %v2079, %v2079
        %v2462 = vmul.f32 %v2082, %v2082
        %v2463 = vmul.f32 %v2087, %v2087
        %v2464 = vmul.f32 %v2090, %v2090
        %v2465 = vmul.f32 %v2095, %v2095
        %v2466 = vmul.f32 %v2098, %v2098
        %v2467 = vmul.f32 %v2103, %v2103
        %v2468 = vmul.f32 %v2106, %v2106
        %v2469 = vmul.f32 %v2111, %v2111
        %v2470 = vmul.f32 %v2114, %v2114
        %v2471 = vmul.f32 %v2119, %v2119
        %v2472 = vmul.f32 %v2122, %v2122
        %v2473 = vmul.f32 %v2127, %v2127
        %v2474 = vmul.f32 %v2130, %v2130
        %v2475 = vmul.f32 %v2135, %v2135
        %v2476 = vmul.f32 %v2138, %v2138
        %v2477 = vmul.f32 %v2143, %v2143
        %v2478 = vmul.f32 %v2146, %v2146
        %v2479 = vmul.f32 %v2151, %v2151
        %v2480 = vmul.f32 %v2154, %v2154
        %v2481 = vmul.f32 %v2159, %v2159
        %v2482 = vmul.f32 %v2162, %v2162
        %v2483 = vmul.f32 %v2167, %v2167
        %v2484 = vmul.f32 %v2170, %v2170
        %v2485 = vmul.f32 %v2175, %v2175
        %v2486 = vmul.f32 %v2178, %v2178
        %v2487 = vmul.f32 %v2183, %v2183
        %v2488 = vmul.f32 %v2186, %v2186
        %v2489 = vmul.f32 %v2191, %v2191
        %v2490 = vmul.f32 %v2194, %v2194
        %v2491 = vmul.f32 %v2199, %v2199
        %v2492 = vmul.f32 %v2202, %v2202
        %v2493 = vmul.f32 %v2207, %v2207
        %v2494 = vmul.f32 %v2210, %v2210
        %v2495 = vmul.f32 %v2215, %v2215
        %v2496 = vmul.f32 %v2218, %v2218
        %v2497 = vmul.f32 %v2223, %v2223
        %v2498 = vmul.f32 %v2226, %v2226
        %v2499 = vmul.f32 %v2231, %v2231
        %v2500 = vmul.f32 %v2234, %v2234
        %v2501 = vmul.f32 %v2239, %v2239
        %v2502 = vmul.f32 %v2242, %v2242
        %v2503 = vmul.f32 %v2247, %v2247
        %v2504 = vmul.f32 %v2250, %v2250
        %v2505 = vmul.f32 %v2255, %v2255
        %v2506 = vmul.f32 %v2258, %v2258
        %v2507 = vmul.f32 %v2263, %v2263
        %v2508 = vmul.f32 %v2266, %v2266
        %v2509 = vmul.f32 %v2271, %v2271
        %v2510 = vmul.f32 %v2274, %v2274
        %v2511 = vmul.f32 %v2279, %v2279
        %v2512 = vmul.f32 %v2282, %v2282
        %v2513 = vmul.f32 %v2287, %v2287
        %v2514 = vmul.f32 %v2290, %v2290
        %v2515 = vmul.f32 %v2295, %v2295
        %v2516 = vmul.f32 %v2298, %v2298
        %v2517 = vmul.f32 %v2303, %v2303
        %v2518 = vmul.f32 %v2306, %v2306
        %v2519 = vmul.f32 %v2311, %v2311
        %v2520 = vmul.f32 %v2314, %v2314
        %v2521 = vmul.f32 %v2319, %v2319
        %v2522 = vmul.f32 %v2322, %v2322
        %v2523 = vmul.f32 %v2327, %v2327
        %v2524 = vmul.f32 %v2330, %v2330
        %2525 = vadd.xlane.f32.xlu0 %v2461
        %v2526 = vpop.xlane.xlu0 %2525
        %2527 = vadd.xlane.f32.xlu0 %v2462
        %v2528 = vpop.xlane.xlu0 %2527
        %2529 = vadd.xlane.f32.xlu0 %v2463
        %v2530 = vpop.xlane.xlu0 %2529
        %2531 = vadd.xlane.f32.xlu0 %v2464
        %v2532 = vpop.xlane.xlu0 %2531
        %2533 = vadd.xlane.f32.xlu0 %v2465
        %v2534 = vpop.xlane.xlu0 %2533
        %2535 = vadd.xlane.f32.xlu0 %v2466
        %v2536 = vpop.xlane.xlu0 %2535
        %2537 = vadd.xlane.f32.xlu0 %v2467
        %v2538 = vpop.xlane.xlu0 %2537
        %2539 = vadd.xlane.f32.xlu0 %v2468
        %v2540 = vpop.xlane.xlu0 %2539
        %2541 = vadd.xlane.f32.xlu0 %v2469
        %v2542 = vpop.xlane.xlu0 %2541
        %2543 = vadd.xlane.f32.xlu0 %v2470
        %v2544 = vpop.xlane.xlu0 %2543
        %2545 = vadd.xlane.f32.xlu0 %v2471
        %v2546 = vpop.xlane.xlu0 %2545
        %2547 = vadd.xlane.f32.xlu0 %v2472
        %v2548 = vpop.xlane.xlu0 %2547
        %2549 = vadd.xlane.f32.xlu0 %v2473
        %v2550 = vpop.xlane.xlu0 %2549
        %2551 = vadd.xlane.f32.xlu0 %v2474
        %v2552 = vpop.xlane.xlu0 %2551
        %2553 = vadd.xlane.f32.xlu0 %v2475
        %v2554 = vpop.xlane.xlu0 %2553
        %2555 = vadd.xlane.f32.xlu0 %v2476
        %v2556 = vpop.xlane.xlu0 %2555
        %2557 = vadd.xlane.f32.xlu0 %v2477
        %v2558 = vpop.xlane.xlu0 %2557
        %2559 = vadd.xlane.f32.xlu0 %v2478
        %v2560 = vpop.xlane.xlu0 %2559
        %2561 = vadd.xlane.f32.xlu0 %v2479
        %v2562 = vpop.xlane.xlu0 %2561
        %2563 = vadd.xlane.f32.xlu0 %v2480
        %v2564 = vpop.xlane.xlu0 %2563
        %2565 = vadd.xlane.f32.xlu0 %v2481
        %v2566 = vpop.xlane.xlu0 %2565
        %2567 = vadd.xlane.f32.xlu0 %v2482
        %v2568 = vpop.xlane.xlu0 %2567
        %2569 = vadd.xlane.f32.xlu0 %v2483
        %v2570 = vpop.xlane.xlu0 %2569
        %2571 = vadd.xlane.f32.xlu0 %v2484
        %v2572 = vpop.xlane.xlu0 %2571
        %2573 = vadd.xlane.f32.xlu0 %v2485
        %v2574 = vpop.xlane.xlu0 %2573
        %2575 = vadd.xlane.f32.xlu0 %v2486
        %v2576 = vpop.xlane.xlu0 %2575
        %2577 = vadd.xlane.f32.xlu0 %v2487
        %v2578 = vpop.xlane.xlu0 %2577
        %2579 = vadd.xlane.f32.xlu0 %v2488
        %v2580 = vpop.xlane.xlu0 %2579
        %2581 = vadd.xlane.f32.xlu0 %v2489
        %v2582 = vpop.xlane.xlu0 %2581
        %2583 = vadd.xlane.f32.xlu0 %v2490
        %v2584 = vpop.xlane.xlu0 %2583
        %2585 = vadd.xlane.f32.xlu0 %v2491
        %v2586 = vpop.xlane.xlu0 %2585
        %2587 = vadd.xlane.f32.xlu0 %v2492
        %v2588 = vpop.xlane.xlu0 %2587
        %2589 = vadd.xlane.f32.xlu0 %v2493
        %v2590 = vpop.xlane.xlu0 %2589
        %2591 = vadd.xlane.f32.xlu0 %v2494
        %v2592 = vpop.xlane.xlu0 %2591
        %2593 = vadd.xlane.f32.xlu0 %v2495
        %v2594 = vpop.xlane.xlu0 %2593
        %2595 = vadd.xlane.f32.xlu0 %v2496
        %v2596 = vpop.xlane.xlu0 %2595
        %2597 = vadd.xlane.f32.xlu0 %v2497
        %v2598 = vpop.xlane.xlu0 %2597
        %2599 = vadd.xlane.f32.xlu0 %v2498
        %v2600 = vpop.xlane.xlu0 %2599
        %2601 = vadd.xlane.f32.xlu0 %v2499
        %v2602 = vpop.xlane.xlu0 %2601
        %2603 = vadd.xlane.f32.xlu0 %v2500
        %v2604 = vpop.xlane.xlu0 %2603
        %2605 = vadd.xlane.f32.xlu0 %v2501
        %v2606 = vpop.xlane.xlu0 %2605
        %2607 = vadd.xlane.f32.xlu0 %v2502
        %v2608 = vpop.xlane.xlu0 %2607
        %2609 = vadd.xlane.f32.xlu0 %v2503
        %v2610 = vpop.xlane.xlu0 %2609
        %2611 = vadd.xlane.f32.xlu0 %v2504
        %v2612 = vpop.xlane.xlu0 %2611
        %2613 = vadd.xlane.f32.xlu0 %v2505
        %v2614 = vpop.xlane.xlu0 %2613
        %2615 = vadd.xlane.f32.xlu0 %v2506
        %v2616 = vpop.xlane.xlu0 %2615
        %2617 = vadd.xlane.f32.xlu0 %v2507
        %v2618 = vpop.xlane.xlu0 %2617
        %2619 = vadd.xlane.f32.xlu0 %v2508
        %v2620 = vpop.xlane.xlu0 %2619
        %2621 = vadd.xlane.f32.xlu0 %v2509
        %v2622 = vpop.xlane.xlu0 %2621
        %2623 = vadd.xlane.f32.xlu0 %v2510
        %v2624 = vpop.xlane.xlu0 %2623
        %2625 = vadd.xlane.f32.xlu0 %v2511
        %v2626 = vpop.xlane.xlu0 %2625
        %2627 = vadd.xlane.f32.xlu0 %v2512
        %v2628 = vpop.xlane.xlu0 %2627
        %2629 = vadd.xlane.f32.xlu0 %v2513
        %v2630 = vpop.xlane.xlu0 %2629
        %2631 = vadd.xlane.f32.xlu0 %v2514
        %v2632 = vpop.xlane.xlu0 %2631
        %2633 = vadd.xlane.f32.xlu0 %v2515
        %v2634 = vpop.xlane.xlu0 %2633
        %2635 = vadd.xlane.f32.xlu0 %v2516
        %v2636 = vpop.xlane.xlu0 %2635
        %2637 = vadd.xlane.f32.xlu0 %v2517
        %v2638 = vpop.xlane.xlu0 %2637
        %2639 = vadd.xlane.f32.xlu0 %v2518
        %v2640 = vpop.xlane.xlu0 %2639
        %2641 = vadd.xlane.f32.xlu0 %v2519
        %v2642 = vpop.xlane.xlu0 %2641
        %2643 = vadd.xlane.f32.xlu0 %v2520
        %v2644 = vpop.xlane.xlu0 %2643
        %2645 = vadd.xlane.f32.xlu0 %v2521
        %v2646 = vpop.xlane.xlu0 %2645
        %2647 = vadd.xlane.f32.xlu0 %v2522
        %v2648 = vpop.xlane.xlu0 %2647
        %2649 = vadd.xlane.f32.xlu0 %v2523
        %v2650 = vpop.xlane.xlu0 %2649
        %2651 = vadd.xlane.f32.xlu0 %v2524
        %v2652 = vpop.xlane.xlu0 %2651
        %v2653 = vmul.f32 %v2334, 0.0078125
        %v2654 = vmul.f32 %v2336, 0.0078125
        %v2655 = vmul.f32 %v2338, 0.0078125
        %v2656 = vmul.f32 %v2340, 0.0078125
        %v2657 = vmul.f32 %v2342, 0.0078125
        %v2658 = vmul.f32 %v2344, 0.0078125
        %v2659 = vmul.f32 %v2346, 0.0078125
        %v2660 = vmul.f32 %v2348, 0.0078125
        %v2661 = vmul.f32 %v2350, 0.0078125
        %v2662 = vmul.f32 %v2352, 0.0078125
        %v2663 = vmul.f32 %v2354, 0.0078125
        %v2664 = vmul.f32 %v2356, 0.0078125
        %v2665 = vmul.f32 %v2358, 0.0078125
        %v2666 = vmul.f32 %v2360, 0.0078125
        %v2667 = vmul.f32 %v2362, 0.0078125
        %v2668 = vmul.f32 %v2364, 0.0078125
        %v2669 = vmul.f32 %v2366, 0.0078125
        %v2670 = vmul.f32 %v2368, 0.0078125
        %v2671 = vmul.f32 %v2370, 0.0078125
        %v2672 = vmul.f32 %v2372, 0.0078125
        %v2673 = vmul.f32 %v2374, 0.0078125
        %v2674 = vmul.f32 %v2376, 0.0078125
        %v2675 = vmul.f32 %v2378, 0.0078125
        %v2676 = vmul.f32 %v2380, 0.0078125
        %v2677 = vmul.f32 %v2382, 0.0078125
        %v2678 = vmul.f32 %v2384, 0.0078125
        %v2679 = vmul.f32 %v2386, 0.0078125
        %v2680 = vmul.f32 %v2388, 0.0078125
        %v2681 = vmul.f32 %v2390, 0.0078125
        %v2682 = vmul.f32 %v2392, 0.0078125
        %v2683 = vmul.f32 %v2394, 0.0078125
        %v2684 = vmul.f32 %v2396, 0.0078125
        %v2685 = vmul.f32 %v2398, 0.0078125
        %v2686 = vmul.f32 %v2400, 0.0078125
        %v2687 = vmul.f32 %v2402, 0.0078125
        %v2688 = vmul.f32 %v2404, 0.0078125
        %v2689 = vmul.f32 %v2406, 0.0078125
        %v2690 = vmul.f32 %v2408, 0.0078125
        %v2691 = vmul.f32 %v2410, 0.0078125
        %v2692 = vmul.f32 %v2412, 0.0078125
        %v2693 = vmul.f32 %v2414, 0.0078125
        %v2694 = vmul.f32 %v2416, 0.0078125
        %v2695 = vmul.f32 %v2418, 0.0078125
        %v2696 = vmul.f32 %v2420, 0.0078125
        %v2697 = vmul.f32 %v2422, 0.0078125
        %v2698 = vmul.f32 %v2424, 0.0078125
        %v2699 = vmul.f32 %v2426, 0.0078125
        %v2700 = vmul.f32 %v2428, 0.0078125
        %v2701 = vmul.f32 %v2430, 0.0078125
        %v2702 = vmul.f32 %v2432, 0.0078125
        %v2703 = vmul.f32 %v2434, 0.0078125
        %v2704 = vmul.f32 %v2436, 0.0078125
        %v2705 = vmul.f32 %v2438, 0.0078125
        %v2706 = vmul.f32 %v2440, 0.0078125
        %v2707 = vmul.f32 %v2442, 0.0078125
        %v2708 = vmul.f32 %v2444, 0.0078125
        %v2709 = vmul.f32 %v2446, 0.0078125
        %v2710 = vmul.f32 %v2448, 0.0078125
        %v2711 = vmul.f32 %v2450, 0.0078125
        %v2712 = vmul.f32 %v2452, 0.0078125
        %v2713 = vmul.f32 %v2454, 0.0078125
        %v2714 = vmul.f32 %v2456, 0.0078125
        %v2715 = vmul.f32 %v2458, 0.0078125
        %v2716 = vmul.f32 %v2460, 0.0078125
        %v2717 = vmul.f32 %v2526, 0.0078125
        %v2718 = vmul.f32 %v2528, 0.0078125
        %v2719 = vmul.f32 %v2530, 0.0078125
        %v2720 = vmul.f32 %v2532, 0.0078125
        %v2721 = vmul.f32 %v2534, 0.0078125
        %v2722 = vmul.f32 %v2536, 0.0078125
        %v2723 = vmul.f32 %v2538, 0.0078125
        %v2724 = vmul.f32 %v2540, 0.0078125
        %v2725 = vmul.f32 %v2542, 0.0078125
        %v2726 = vmul.f32 %v2544, 0.0078125
        %v2727 = vmul.f32 %v2546, 0.0078125
        %v2728 = vmul.f32 %v2548, 0.0078125
        %v2729 = vmul.f32 %v2550, 0.0078125
        %v2730 = vmul.f32 %v2552, 0.0078125
        %v2731 = vmul.f32 %v2554, 0.0078125
        %v2732 = vmul.f32 %v2556, 0.0078125
        %v2733 = vmul.f32 %v2558, 0.0078125
        %v2734 = vmul.f32 %v2560, 0.0078125
        %v2735 = vmul.f32 %v2562, 0.0078125
        %v2736 = vmul.f32 %v2564, 0.0078125
        %v2737 = vmul.f32 %v2566, 0.0078125
        %v2738 = vmul.f32 %v2568, 0.0078125
        %v2739 = vmul.f32 %v2570, 0.0078125
        %v2740 = vmul.f32 %v2572, 0.0078125
        %v2741 = vmul.f32 %v2574, 0.0078125
        %v2742 = vmul.f32 %v2576, 0.0078125
        %v2743 = vmul.f32 %v2578, 0.0078125
        %v2744 = vmul.f32 %v2580, 0.0078125
        %v2745 = vmul.f32 %v2582, 0.0078125
        %v2746 = vmul.f32 %v2584, 0.0078125
        %v2747 = vmul.f32 %v2586, 0.0078125
        %v2748 = vmul.f32 %v2588, 0.0078125
        %v2749 = vmul.f32 %v2590, 0.0078125
        %v2750 = vmul.f32 %v2592, 0.0078125
        %v2751 = vmul.f32 %v2594, 0.0078125
        %v2752 = vmul.f32 %v2596, 0.0078125
        %v2753 = vmul.f32 %v2598, 0.0078125
        %v2754 = vmul.f32 %v2600, 0.0078125
        %v2755 = vmul.f32 %v2602, 0.0078125
        %v2756 = vmul.f32 %v2604, 0.0078125
        %v2757 = vmul.f32 %v2606, 0.0078125
        %v2758 = vmul.f32 %v2608, 0.0078125
        %v2759 = vmul.f32 %v2610, 0.0078125
        %v2760 = vmul.f32 %v2612, 0.0078125
        %v2761 = vmul.f32 %v2614, 0.0078125
        %v2762 = vmul.f32 %v2616, 0.0078125
        %v2763 = vmul.f32 %v2618, 0.0078125
        %v2764 = vmul.f32 %v2620, 0.0078125
        %v2765 = vmul.f32 %v2622, 0.0078125
        %v2766 = vmul.f32 %v2624, 0.0078125
        %v2767 = vmul.f32 %v2626, 0.0078125
        %v2768 = vmul.f32 %v2628, 0.0078125
        %v2769 = vmul.f32 %v2630, 0.0078125
        %v2770 = vmul.f32 %v2632, 0.0078125
        %v2771 = vmul.f32 %v2634, 0.0078125
        %v2772 = vmul.f32 %v2636, 0.0078125
        %v2773 = vmul.f32 %v2638, 0.0078125
        %v2774 = vmul.f32 %v2640, 0.0078125
        %v2775 = vmul.f32 %v2642, 0.0078125
        %v2776 = vmul.f32 %v2644, 0.0078125
        %v2777 = vmul.f32 %v2646, 0.0078125
        %v2778 = vmul.f32 %v2648, 0.0078125
        %v2779 = vmul.f32 %v2650, 0.0078125
        %v2780 = vmul.f32 %v2652, 0.0078125
        %v2781 = vmul.f32 %v2653, %v2653
        %v2782 = vmul.f32 %v2654, %v2654
        %v2783 = vmul.f32 %v2655, %v2655
        %v2784 = vmul.f32 %v2656, %v2656
        %v2785 = vmul.f32 %v2657, %v2657
        %v2786 = vmul.f32 %v2658, %v2658
        %v2787 = vmul.f32 %v2659, %v2659
        %v2788 = vmul.f32 %v2660, %v2660
        %v2789 = vmul.f32 %v2661, %v2661
        %v2790 = vmul.f32 %v2662, %v2662
        %v2791 = vmul.f32 %v2663, %v2663
        %v2792 = vmul.f32 %v2664, %v2664
        %v2793 = vmul.f32 %v2665, %v2665
        %v2794 = vmul.f32 %v2666, %v2666
        %v2795 = vmul.f32 %v2667, %v2667
        %v2796 = vmul.f32 %v2668, %v2668
        %v2797 = vmul.f32 %v2669, %v2669
        %v2798 = vmul.f32 %v2670, %v2670
        %v2799 = vmul.f32 %v2671, %v2671
        %v2800 = vmul.f32 %v2672, %v2672
        %v2801 = vmul.f32 %v2673, %v2673
        %v2802 = vmul.f32 %v2674, %v2674
        %v2803 = vmul.f32 %v2675, %v2675
        %v2804 = vmul.f32 %v2676, %v2676
        %v2805 = vmul.f32 %v2677, %v2677
        %v2806 = vmul.f32 %v2678, %v2678
        %v2807 = vmul.f32 %v2679, %v2679
        %v2808 = vmul.f32 %v2680, %v2680
        %v2809 = vmul.f32 %v2681, %v2681
        %v2810 = vmul.f32 %v2682, %v2682
        %v2811 = vmul.f32 %v2683, %v2683
        %v2812 = vmul.f32 %v2684, %v2684
        %v2813 = vmul.f32 %v2685, %v2685
        %v2814 = vmul.f32 %v2686, %v2686
        %v2815 = vmul.f32 %v2687, %v2687
        %v2816 = vmul.f32 %v2688, %v2688
        %v2817 = vmul.f32 %v2689, %v2689
        %v2818 = vmul.f32 %v2690, %v2690
        %v2819 = vmul.f32 %v2691, %v2691
        %v2820 = vmul.f32 %v2692, %v2692
        %v2821 = vmul.f32 %v2693, %v2693
        %v2822 = vmul.f32 %v2694, %v2694
        %v2823 = vmul.f32 %v2695, %v2695
        %v2824 = vmul.f32 %v2696, %v2696
        %v2825 = vmul.f32 %v2697, %v2697
        %v2826 = vmul.f32 %v2698, %v2698
        %v2827 = vmul.f32 %v2699, %v2699
        %v2828 = vmul.f32 %v2700, %v2700
        %v2829 = vmul.f32 %v2701, %v2701
        %v2830 = vmul.f32 %v2702, %v2702
        %v2831 = vmul.f32 %v2703, %v2703
        %v2832 = vmul.f32 %v2704, %v2704
        %v2833 = vmul.f32 %v2705, %v2705
        %v2834 = vmul.f32 %v2706, %v2706
        %v2835 = vmul.f32 %v2707, %v2707
        %v2836 = vmul.f32 %v2708, %v2708
        %v2837 = vmul.f32 %v2709, %v2709
        %v2838 = vmul.f32 %v2710, %v2710
        %v2839 = vmul.f32 %v2711, %v2711
        %v2840 = vmul.f32 %v2712, %v2712
        %v2841 = vmul.f32 %v2713, %v2713
        %v2842 = vmul.f32 %v2714, %v2714
        %v2843 = vmul.f32 %v2715, %v2715
        %v2844 = vmul.f32 %v2716, %v2716
        %v2845 = vsub.f32 %v2717, %v2781
        %v2846 = vsub.f32 %v2718, %v2782
        %v2847 = vsub.f32 %v2719, %v2783
        %v2848 = vsub.f32 %v2720, %v2784
        %v2849 = vsub.f32 %v2721, %v2785
        %v2850 = vsub.f32 %v2722, %v2786
        %v2851 = vsub.f32 %v2723, %v2787
        %v2852 = vsub.f32 %v2724, %v2788
        %v2853 = vsub.f32 %v2725, %v2789
        %v2854 = vsub.f32 %v2726, %v2790
        %v2855 = vsub.f32 %v2727, %v2791
        %v2856 = vsub.f32 %v2728, %v2792
        %v2857 = vsub.f32 %v2729, %v2793
        %v2858 = vsub.f32 %v2730, %v2794
        %v2859 = vsub.f32 %v2731, %v2795
        %v2860 = vsub.f32 %v2732, %v2796
        %v2861 = vsub.f32 %v2733, %v2797
        %v2862 = vsub.f32 %v2734, %v2798
        %v2863 = vsub.f32 %v2735, %v2799
        %v2864 = vsub.f32 %v2736, %v2800
        %v2865 = vsub.f32 %v2737, %v2801
        %v2866 = vsub.f32 %v2738, %v2802
        %v2867 = vsub.f32 %v2739, %v2803
        %v2868 = vsub.f32 %v2740, %v2804
        %v2869 = vsub.f32 %v2741, %v2805
        %v2870 = vsub.f32 %v2742, %v2806
        %v2871 = vsub.f32 %v2743, %v2807
        %v2872 = vsub.f32 %v2744, %v2808
        %v2873 = vsub.f32 %v2745, %v2809
        %v2874 = vsub.f32 %v2746, %v2810
        %v2875 = vsub.f32 %v2747, %v2811
        %v2876 = vsub.f32 %v2748, %v2812
        %v2877 = vsub.f32 %v2749, %v2813
        %v2878 = vsub.f32 %v2750, %v2814
        %v2879 = vsub.f32 %v2751, %v2815
        %v2880 = vsub.f32 %v2752, %v2816
        %v2881 = vsub.f32 %v2753, %v2817
        %v2882 = vsub.f32 %v2754, %v2818
        %v2883 = vsub.f32 %v2755, %v2819
        %v2884 = vsub.f32 %v2756, %v2820
        %v2885 = vsub.f32 %v2757, %v2821
        %v2886 = vsub.f32 %v2758, %v2822
        %v2887 = vsub.f32 %v2759, %v2823
        %v2888 = vsub.f32 %v2760, %v2824
        %v2889 = vsub.f32 %v2761, %v2825
        %v2890 = vsub.f32 %v2762, %v2826
        %v2891 = vsub.f32 %v2763, %v2827
        %v2892 = vsub.f32 %v2764, %v2828
        %v2893 = vsub.f32 %v2765, %v2829
        %v2894 = vsub.f32 %v2766, %v2830
        %v2895 = vsub.f32 %v2767, %v2831
        %v2896 = vsub.f32 %v2768, %v2832
        %v2897 = vsub.f32 %v2769, %v2833
        %v2898 = vsub.f32 %v2770, %v2834
        %v2899 = vsub.f32 %v2771, %v2835
        %v2900 = vsub.f32 %v2772, %v2836
        %v2901 = vsub.f32 %v2773, %v2837
        %v2902 = vsub.f32 %v2774, %v2838
        %v2903 = vsub.f32 %v2775, %v2839
        %v2904 = vsub.f32 %v2776, %v2840
        %v2905 = vsub.f32 %v2777, %v2841
        %v2906 = vsub.f32 %v2778, %v2842
        %v2907 = vsub.f32 %v2779, %v2843
        %v2908 = vsub.f32 %v2780, %v2844
        %v2909 = vmax.f32 %v2845, 0.0
        %v2910 = vmax.f32 %v2846, 0.0
        %v2911 = vmax.f32 %v2847, 0.0
        %v2912 = vmax.f32 %v2848, 0.0
        %v2913 = vmax.f32 %v2849, 0.0
        %v2914 = vmax.f32 %v2850, 0.0
        %v2915 = vmax.f32 %v2851, 0.0
        %v2916 = vmax.f32 %v2852, 0.0
        %v2917 = vmax.f32 %v2853, 0.0
        %v2918 = vmax.f32 %v2854, 0.0
        %v2919 = vmax.f32 %v2855, 0.0
        %v2920 = vmax.f32 %v2856, 0.0
        %v2921 = vmax.f32 %v2857, 0.0
        %v2922 = vmax.f32 %v2858, 0.0
        %v2923 = vmax.f32 %v2859, 0.0
        %v2924 = vmax.f32 %v2860, 0.0
        %v2925 = vmax.f32 %v2861, 0.0
        %v2926 = vmax.f32 %v2862, 0.0
        %v2927 = vmax.f32 %v2863, 0.0
        %v2928 = vmax.f32 %v2864, 0.0
        %v2929 = vmax.f32 %v2865, 0.0
        %v2930 = vmax.f32 %v2866, 0.0
        %v2931 = vmax.f32 %v2867, 0.0
        %v2932 = vmax.f32 %v2868, 0.0
        %v2933 = vmax.f32 %v2869, 0.0
        %v2934 = vmax.f32 %v2870, 0.0
        %v2935 = vmax.f32 %v2871, 0.0
        %v2936 = vmax.f32 %v2872, 0.0
        %v2937 = vmax.f32 %v2873, 0.0
        %v2938 = vmax.f32 %v2874, 0.0
        %v2939 = vmax.f32 %v2875, 0.0
        %v2940 = vmax.f32 %v2876, 0.0
        %v2941 = vmax.f32 %v2877, 0.0
        %v2942 = vmax.f32 %v2878, 0.0
        %v2943 = vmax.f32 %v2879, 0.0
        %v2944 = vmax.f32 %v2880, 0.0
        %v2945 = vmax.f32 %v2881, 0.0
        %v2946 = vmax.f32 %v2882, 0.0
        %v2947 = vmax.f32 %v2883, 0.0
        %v2948 = vmax.f32 %v2884, 0.0
        %v2949 = vmax.f32 %v2885, 0.0
        %v2950 = vmax.f32 %v2886, 0.0
        %v2951 = vmax.f32 %v2887, 0.0
        %v2952 = vmax.f32 %v2888, 0.0
        %v2953 = vmax.f32 %v2889, 0.0
        %v2954 = vmax.f32 %v2890, 0.0
        %v2955 = vmax.f32 %v2891, 0.0
        %v2956 = vmax.f32 %v2892, 0.0
        %v2957 = vmax.f32 %v2893, 0.0
        %v2958 = vmax.f32 %v2894, 0.0
        %v2959 = vmax.f32 %v2895, 0.0
        %v2960 = vmax.f32 %v2896, 0.0
        %v2961 = vmax.f32 %v2897, 0.0
        %v2962 = vmax.f32 %v2898, 0.0
        %v2963 = vmax.f32 %v2899, 0.0
        %v2964 = vmax.f32 %v2900, 0.0
        %v2965 = vmax.f32 %v2901, 0.0
        %v2966 = vmax.f32 %v2902, 0.0
        %v2967 = vmax.f32 %v2903, 0.0
        %v2968 = vmax.f32 %v2904, 0.0
        %v2969 = vmax.f32 %v2905, 0.0
        %v2970 = vmax.f32 %v2906, 0.0
        %v2971 = vmax.f32 %v2907, 0.0
        %v2972 = vmax.f32 %v2908, 0.0
        %v2973 = vsub.f32 %v2079, %v2653
        %v2974 = vsub.f32 %v2082, %v2654
        %v2975 = vsub.f32 %v2087, %v2655
        %v2976 = vsub.f32 %v2090, %v2656
        %v2977 = vsub.f32 %v2095, %v2657
        %v2978 = vsub.f32 %v2098, %v2658
        %v2979 = vsub.f32 %v2103, %v2659
        %v2980 = vsub.f32 %v2106, %v2660
        %v2981 = vsub.f32 %v2111, %v2661
        %v2982 = vsub.f32 %v2114, %v2662
        %v2983 = vsub.f32 %v2119, %v2663
        %v2984 = vsub.f32 %v2122, %v2664
        %v2985 = vsub.f32 %v2127, %v2665
        %v2986 = vsub.f32 %v2130, %v2666
        %v2987 = vsub.f32 %v2135, %v2667
        %v2988 = vsub.f32 %v2138, %v2668
        %v2989 = vsub.f32 %v2143, %v2669
        %v2990 = vsub.f32 %v2146, %v2670
        %v2991 = vsub.f32 %v2151, %v2671
        %v2992 = vsub.f32 %v2154, %v2672
        %v2993 = vsub.f32 %v2159, %v2673
        %v2994 = vsub.f32 %v2162, %v2674
        %v2995 = vsub.f32 %v2167, %v2675
        %v2996 = vsub.f32 %v2170, %v2676
        %v2997 = vsub.f32 %v2175, %v2677
        %v2998 = vsub.f32 %v2178, %v2678
        %v2999 = vsub.f32 %v2183, %v2679
        %v3000 = vsub.f32 %v2186, %v2680
        %v3001 = vsub.f32 %v2191, %v2681
        %v3002 = vsub.f32 %v2194, %v2682
        %v3003 = vsub.f32 %v2199, %v2683
        %v3004 = vsub.f32 %v2202, %v2684
        %v3005 = vsub.f32 %v2207, %v2685
        %v3006 = vsub.f32 %v2210, %v2686
        %v3007 = vsub.f32 %v2215, %v2687
        %v3008 = vsub.f32 %v2218, %v2688
        %v3009 = vsub.f32 %v2223, %v2689
        %v3010 = vsub.f32 %v2226, %v2690
        %v3011 = vsub.f32 %v2231, %v2691
        %v3012 = vsub.f32 %v2234, %v2692
        %v3013 = vsub.f32 %v2239, %v2693
        %v3014 = vsub.f32 %v2242, %v2694
        %v3015 = vsub.f32 %v2247, %v2695
        %v3016 = vsub.f32 %v2250, %v2696
        %v3017 = vsub.f32 %v2255, %v2697
        %v3018 = vsub.f32 %v2258, %v2698
        %v3019 = vsub.f32 %v2263, %v2699
        %v3020 = vsub.f32 %v2266, %v2700
        %v3021 = vsub.f32 %v2271, %v2701
        %v3022 = vsub.f32 %v2274, %v2702
        %v3023 = vsub.f32 %v2279, %v2703
        %v3024 = vsub.f32 %v2282, %v2704
        %v3025 = vsub.f32 %v2287, %v2705
        %v3026 = vsub.f32 %v2290, %v2706
        %v3027 = vsub.f32 %v2295, %v2707
        %v3028 = vsub.f32 %v2298, %v2708
        %v3029 = vsub.f32 %v2303, %v2709
        %v3030 = vsub.f32 %v2306, %v2710
        %v3031 = vsub.f32 %v2311, %v2711
        %v3032 = vsub.f32 %v2314, %v2712
        %v3033 = vsub.f32 %v2319, %v2713
        %v3034 = vsub.f32 %v2322, %v2714
        %v3035 = vsub.f32 %v2327, %v2715
        %v3036 = vsub.f32 %v2330, %v2716
        %v3037 = vadd.f32 %v2909, 1e-05
        %v3038 = vadd.f32 %v2910, 1e-05
        %v3039 = vadd.f32 %v2911, 1e-05
        %v3040 = vadd.f32 %v2912, 1e-05
        %v3041 = vadd.f32 %v2913, 1e-05
        %v3042 = vadd.f32 %v2914, 1e-05
        %v3043 = vadd.f32 %v2915, 1e-05
        %v3044 = vadd.f32 %v2916, 1e-05
        %v3045 = vadd.f32 %v2917, 1e-05
        %v3046 = vadd.f32 %v2918, 1e-05
        %v3047 = vadd.f32 %v2919, 1e-05
        %v3048 = vadd.f32 %v2920, 1e-05
        %v3049 = vadd.f32 %v2921, 1e-05
        %v3050 = vadd.f32 %v2922, 1e-05
        %v3051 = vadd.f32 %v2923, 1e-05
        %v3052 = vadd.f32 %v2924, 1e-05
        %v3053 = vadd.f32 %v2925, 1e-05
        %v3054 = vadd.f32 %v2926, 1e-05
        %v3055 = vadd.f32 %v2927, 1e-05
        %v3056 = vadd.f32 %v2928, 1e-05
        %v3057 = vadd.f32 %v2929, 1e-05
        %v3058 = vadd.f32 %v2930, 1e-05
        %v3059 = vadd.f32 %v2931, 1e-05
        %v3060 = vadd.f32 %v2932, 1e-05
        %v3061 = vadd.f32 %v2933, 1e-05
        %v3062 = vadd.f32 %v2934, 1e-05
        %v3063 = vadd.f32 %v2935, 1e-05
        %v3064 = vadd.f32 %v2936, 1e-05
        %v3065 = vadd.f32 %v2937, 1e-05
        %v3066 = vadd.f32 %v2938, 1e-05
        %v3067 = vadd.f32 %v2939, 1e-05
        %v3068 = vadd.f32 %v2940, 1e-05
        %v3069 = vadd.f32 %v2941, 1e-05
        %v3070 = vadd.f32 %v2942, 1e-05
        %v3071 = vadd.f32 %v2943, 1e-05
        %v3072 = vadd.f32 %v2944, 1e-05
        %v3073 = vadd.f32 %v2945, 1e-05
        %v3074 = vadd.f32 %v2946, 1e-05
        %v3075 = vadd.f32 %v2947, 1e-05
        %v3076 = vadd.f32 %v2948, 1e-05
        %v3077 = vadd.f32 %v2949, 1e-05
        %v3078 = vadd.f32 %v2950, 1e-05
        %v3079 = vadd.f32 %v2951, 1e-05
        %v3080 = vadd.f32 %v2952, 1e-05
        %v3081 = vadd.f32 %v2953, 1e-05
        %v3082 = vadd.f32 %v2954, 1e-05
        %v3083 = vadd.f32 %v2955, 1e-05
        %v3084 = vadd.f32 %v2956, 1e-05
        %v3085 = vadd.f32 %v2957, 1e-05
        %v3086 = vadd.f32 %v2958, 1e-05
        %v3087 = vadd.f32 %v2959, 1e-05
        %v3088 = vadd.f32 %v2960, 1e-05
        %v3089 = vadd.f32 %v2961, 1e-05
        %v3090 = vadd.f32 %v2962, 1e-05
        %v3091 = vadd.f32 %v2963, 1e-05
        %v3092 = vadd.f32 %v2964, 1e-05
        %v3093 = vadd.f32 %v2965, 1e-05
        %v3094 = vadd.f32 %v2966, 1e-05
        %v3095 = vadd.f32 %v2967, 1e-05
        %v3096 = vadd.f32 %v2968, 1e-05
        %v3097 = vadd.f32 %v2969, 1e-05
        %v3098 = vadd.f32 %v2970, 1e-05
        %v3099 = vadd.f32 %v2971, 1e-05
        %v3100 = vadd.f32 %v2972, 1e-05
        %v3101 = vrsqrt.pop %v3037
        %v3102 = vrsqrt.pop %v3038
        %v3103 = vrsqrt.pop %v3039
        %v3104 = vrsqrt.pop %v3040
        %v3105 = vrsqrt.pop %v3041
        %v3106 = vrsqrt.pop %v3042
        %v3107 = vrsqrt.pop %v3043
        %v3108 = vrsqrt.pop %v3044
        %v3109 = vrsqrt.pop %v3045
        %v3110 = vrsqrt.pop %v3046
        %v3111 = vrsqrt.pop %v3047
        %v3112 = vrsqrt.pop %v3048
        %v3113 = vrsqrt.pop %v3049
        %v3114 = vrsqrt.pop %v3050
        %v3115 = vrsqrt.pop %v3051
        %v3116 = vrsqrt.pop %v3052
        %v3117 = vrsqrt.pop %v3053
        %v3118 = vrsqrt.pop %v3054
        %v3119 = vrsqrt.pop %v3055
        %v3120 = vrsqrt.pop %v3056
        %v3121 = vrsqrt.pop %v3057
        %v3122 = vrsqrt.pop %v3058
        %v3123 = vrsqrt.pop %v3059
        %v3124 = vrsqrt.pop %v3060
        %v3125 = vrsqrt.pop %v3061
        %v3126 = vrsqrt.pop %v3062
        %v3127 = vrsqrt.pop %v3063
        %v3128 = vrsqrt.pop %v3064
        %v3129 = vrsqrt.pop %v3065
        %v3130 = vrsqrt.pop %v3066
        %v3131 = vrsqrt.pop %v3067
        %v3132 = vrsqrt.pop %v3068
        %v3133 = vrsqrt.pop %v3069
        %v3134 = vrsqrt.pop %v3070
        %v3135 = vrsqrt.pop %v3071
        %v3136 = vrsqrt.pop %v3072
        %v3137 = vrsqrt.pop %v3073
        %v3138 = vrsqrt.pop %v3074
        %v3139 = vrsqrt.pop %v3075
        %v3140 = vrsqrt.pop %v3076
        %v3141 = vrsqrt.pop %v3077
        %v3142 = vrsqrt.pop %v3078
        %v3143 = vrsqrt.pop %v3079
        %v3144 = vrsqrt.pop %v3080
        %v3145 = vrsqrt.pop %v3081
        %v3146 = vrsqrt.pop %v3082
        %v3147 = vrsqrt.pop %v3083
        %v3148 = vrsqrt.pop %v3084
        %v3149 = vrsqrt.pop %v3085
        %v3150 = vrsqrt.pop %v3086
        %v3151 = vrsqrt.pop %v3087
        %v3152 = vrsqrt.pop %v3088
        %v3153 = vrsqrt.pop %v3089
        %v3154 = vrsqrt.pop %v3090
        %v3155 = vrsqrt.pop %v3091
        %v3156 = vrsqrt.pop %v3092
        %v3157 = vrsqrt.pop %v3093
        %v3158 = vrsqrt.pop %v3094
        %v3159 = vrsqrt.pop %v3095
        %v3160 = vrsqrt.pop %v3096
        %v3161 = vrsqrt.pop %v3097
        %v3162 = vrsqrt.pop %v3098
        %v3163 = vrsqrt.pop %v3099
        %v3164 = vrsqrt.pop %v3100
        %v3165 = vmul.f32 %v2973, %v3101
        %v3166 = vmul.f32 %v2974, %v3102
        %v3167 = vmul.f32 %v2975, %v3103
        %v3168 = vmul.f32 %v2976, %v3104
        %v3169 = vmul.f32 %v2977, %v3105
        %v3170 = vmul.f32 %v2978, %v3106
        %v3171 = vmul.f32 %v2979, %v3107
        %v3172 = vmul.f32 %v2980, %v3108
        %v3173 = vmul.f32 %v2981, %v3109
        %v3174 = vmul.f32 %v2982, %v3110
        %v3175 = vmul.f32 %v2983, %v3111
        %v3176 = vmul.f32 %v2984, %v3112
        %v3177 = vmul.f32 %v2985, %v3113
        %v3178 = vmul.f32 %v2986, %v3114
        %v3179 = vmul.f32 %v2987, %v3115
        %v3180 = vmul.f32 %v2988, %v3116
        %v3181 = vmul.f32 %v2989, %v3117
        %v3182 = vmul.f32 %v2990, %v3118
        %v3183 = vmul.f32 %v2991, %v3119
        %v3184 = vmul.f32 %v2992, %v3120
        %v3185 = vmul.f32 %v2993, %v3121
        %v3186 = vmul.f32 %v2994, %v3122
        %v3187 = vmul.f32 %v2995, %v3123
        %v3188 = vmul.f32 %v2996, %v3124
        %v3189 = vmul.f32 %v2997, %v3125
        %v3190 = vmul.f32 %v2998, %v3126
        %v3191 = vmul.f32 %v2999, %v3127
        %v3192 = vmul.f32 %v3000, %v3128
        %v3193 = vmul.f32 %v3001, %v3129
        %v3194 = vmul.f32 %v3002, %v3130
        %v3195 = vmul.f32 %v3003, %v3131
        %v3196 = vmul.f32 %v3004, %v3132
        %v3197 = vmul.f32 %v3005, %v3133
        %v3198 = vmul.f32 %v3006, %v3134
        %v3199 = vmul.f32 %v3007, %v3135
        %v3200 = vmul.f32 %v3008, %v3136
        %v3201 = vmul.f32 %v3009, %v3137
        %v3202 = vmul.f32 %v3010, %v3138
        %v3203 = vmul.f32 %v3011, %v3139
        %v3204 = vmul.f32 %v3012, %v3140
        %v3205 = vmul.f32 %v3013, %v3141
        %v3206 = vmul.f32 %v3014, %v3142
        %v3207 = vmul.f32 %v3015, %v3143
        %v3208 = vmul.f32 %v3016, %v3144
        %v3209 = vmul.f32 %v3017, %v3145
        %v3210 = vmul.f32 %v3018, %v3146
        %v3211 = vmul.f32 %v3019, %v3147
        %v3212 = vmul.f32 %v3020, %v3148
        %v3213 = vmul.f32 %v3021, %v3149
        %v3214 = vmul.f32 %v3022, %v3150
        %v3215 = vmul.f32 %v3023, %v3151
        %v3216 = vmul.f32 %v3024, %v3152
        %v3217 = vmul.f32 %v3025, %v3153
        %v3218 = vmul.f32 %v3026, %v3154
        %v3219 = vmul.f32 %v3027, %v3155
        %v3220 = vmul.f32 %v3028, %v3156
        %v3221 = vmul.f32 %v3029, %v3157
        %v3222 = vmul.f32 %v3030, %v3158
        %v3223 = vmul.f32 %v3031, %v3159
        %v3224 = vmul.f32 %v3032, %v3160
        %v3225 = vmul.f32 %v3033, %v3161
        %v3226 = vmul.f32 %v3034, %v3162
        %v3227 = vmul.f32 %v3035, %v3163
        %v3228 = vmul.f32 %v3036, %v3164
        %v3229 = vld [vmem:[%s7] sm:$0x1]
        %v3231 = vlaneseq
        %v3232 = vshrl.u32 %v3231, 7
        %v3233 = vsub.s32 0, %v3232
        %v3234 = vrot.slane %v3229, %v3233
        %v3236 = vmul.f32 %v3165, %v3234
        %v3237 = vmul.f32 %v3166, %v3234
        %v3238 = vmul.f32 %v3167, %v3234
        %v3239 = vmul.f32 %v3168, %v3234
        %v3240 = vmul.f32 %v3169, %v3234
        %v3241 = vmul.f32 %v3170, %v3234
        %v3242 = vmul.f32 %v3171, %v3234
        %v3243 = vmul.f32 %v3172, %v3234
        %v3244 = vmul.f32 %v3173, %v3234
        %v3245 = vmul.f32 %v3174, %v3234
        %v3246 = vmul.f32 %v3175, %v3234
        %v3247 = vmul.f32 %v3176, %v3234
        %v3248 = vmul.f32 %v3177, %v3234
        %v3249 = vmul.f32 %v3178, %v3234
        %v3250 = vmul.f32 %v3179, %v3234
        %v3251 = vmul.f32 %v3180, %v3234
        %v3252 = vmul.f32 %v3181, %v3234
        %v3253 = vmul.f32 %v3182, %v3234
        %v3254 = vmul.f32 %v3183, %v3234
        %v3255 = vmul.f32 %v3184, %v3234
        %v3256 = vmul.f32 %v3185, %v3234
        %v3257 = vmul.f32 %v3186, %v3234
        %v3258 = vmul.f32 %v3187, %v3234
        %v3259 = vmul.f32 %v3188, %v3234
        %v3260 = vmul.f32 %v3189, %v3234
        %v3261 = vmul.f32 %v3190, %v3234
        %v3262 = vmul.f32 %v3191, %v3234
        %v3263 = vmul.f32 %v3192, %v3234
        %v3264 = vmul.f32 %v3193, %v3234
        %v3265 = vmul.f32 %v3194, %v3234
        %v3266 = vmul.f32 %v3195, %v3234
        %v3267 = vmul.f32 %v3196, %v3234
        %v3268 = vmul.f32 %v3197, %v3234
        %v3269 = vmul.f32 %v3198, %v3234
        %v3270 = vmul.f32 %v3199, %v3234
        %v3271 = vmul.f32 %v3200, %v3234
        %v3272 = vmul.f32 %v3201, %v3234
        %v3273 = vmul.f32 %v3202, %v3234
        %v3274 = vmul.f32 %v3203, %v3234
        %v3275 = vmul.f32 %v3204, %v3234
        %v3276 = vmul.f32 %v3205, %v3234
        %v3277 = vmul.f32 %v3206, %v3234
        %v3278 = vmul.f32 %v3207, %v3234
        %v3279 = vmul.f32 %v3208, %v3234
        %v3280 = vmul.f32 %v3209, %v3234
        %v3281 = vmul.f32 %v3210, %v3234
        %v3282 = vmul.f32 %v3211, %v3234
        %v3283 = vmul.f32 %v3212, %v3234
        %v3284 = vmul.f32 %v3213, %v3234
        %v3285 = vmul.f32 %v3214, %v3234
        %v3286 = vmul.f32 %v3215, %v3234
        %v3287 = vmul.f32 %v3216, %v3234
        %v3288 = vmul.f32 %v3217, %v3234
        %v3289 = vmul.f32 %v3218, %v3234
        %v3290 = vmul.f32 %v3219, %v3234
        %v3291 = vmul.f32 %v3220, %v3234
        %v3292 = vmul.f32 %v3221, %v3234
        %v3293 = vmul.f32 %v3222, %v3234
        %v3294 = vmul.f32 %v3223, %v3234
        %v3295 = vmul.f32 %v3224, %v3234
        %v3296 = vmul.f32 %v3225, %v3234
        %v3297 = vmul.f32 %v3226, %v3234
        %v3298 = vmul.f32 %v3227, %v3234
        %v3299 = vmul.f32 %v3228, %v3234
        %v3300 = vld [vmem:[%s8] sm:$0x1]
        %v3302 = vlaneseq
        %v3303 = vshrl.u32 %v3302, 7
        %v3304 = vsub.s32 0, %v3303
        %v3305 = vrot.slane %v3300, %v3304
        %v3307 = vadd.f32 %v3236, %v3305
        %v3308 = vadd.f32 %v3237, %v3305
        %v3309 = vadd.f32 %v3238, %v3305
        %v3310 = vadd.f32 %v3239, %v3305
        %v3311 = vadd.f32 %v3240, %v3305
        %v3312 = vadd.f32 %v3241, %v3305
        %v3313 = vadd.f32 %v3242, %v3305
        %v3314 = vadd.f32 %v3243, %v3305
        %v3315 = vadd.f32 %v3244, %v3305
        %v3316 = vadd.f32 %v3245, %v3305
        %v3317 = vadd.f32 %v3246, %v3305
        %v3318 = vadd.f32 %v3247, %v3305
        %v3319 = vadd.f32 %v3248, %v3305
        %v3320 = vadd.f32 %v3249, %v3305
        %v3321 = vadd.f32 %v3250, %v3305
        %v3322 = vadd.f32 %v3251, %v3305
        %v3323 = vadd.f32 %v3252, %v3305
        %v3324 = vadd.f32 %v3253, %v3305
        %v3325 = vadd.f32 %v3254, %v3305
        %v3326 = vadd.f32 %v3255, %v3305
        %v3327 = vadd.f32 %v3256, %v3305
        %v3328 = vadd.f32 %v3257, %v3305
        %v3329 = vadd.f32 %v3258, %v3305
        %v3330 = vadd.f32 %v3259, %v3305
        %v3331 = vadd.f32 %v3260, %v3305
        %v3332 = vadd.f32 %v3261, %v3305
        %v3333 = vadd.f32 %v3262, %v3305
        %v3334 = vadd.f32 %v3263, %v3305
        %v3335 = vadd.f32 %v3264, %v3305
        %v3336 = vadd.f32 %v3265, %v3305
        %v3337 = vadd.f32 %v3266, %v3305
        %v3338 = vadd.f32 %v3267, %v3305
        %v3339 = vadd.f32 %v3268, %v3305
        %v3340 = vadd.f32 %v3269, %v3305
        %v3341 = vadd.f32 %v3270, %v3305
        %v3342 = vadd.f32 %v3271, %v3305
        %v3343 = vadd.f32 %v3272, %v3305
        %v3344 = vadd.f32 %v3273, %v3305
        %v3345 = vadd.f32 %v3274, %v3305
        %v3346 = vadd.f32 %v3275, %v3305
        %v3347 = vadd.f32 %v3276, %v3305
        %v3348 = vadd.f32 %v3277, %v3305
        %v3349 = vadd.f32 %v3278, %v3305
        %v3350 = vadd.f32 %v3279, %v3305
        %v3351 = vadd.f32 %v3280, %v3305
        %v3352 = vadd.f32 %v3281, %v3305
        %v3353 = vadd.f32 %v3282, %v3305
        %v3354 = vadd.f32 %v3283, %v3305
        %v3355 = vadd.f32 %v3284, %v3305
        %v3356 = vadd.f32 %v3285, %v3305
        %v3357 = vadd.f32 %v3286, %v3305
        %v3358 = vadd.f32 %v3287, %v3305
        %v3359 = vadd.f32 %v3288, %v3305
        %v3360 = vadd.f32 %v3289, %v3305
        %v3361 = vadd.f32 %v3290, %v3305
        %v3362 = vadd.f32 %v3291, %v3305
        %v3363 = vadd.f32 %v3292, %v3305
        %v3364 = vadd.f32 %v3293, %v3305
        %v3365 = vadd.f32 %v3294, %v3305
        %v3366 = vadd.f32 %v3295, %v3305
        %v3367 = vadd.f32 %v3296, %v3305
        %v3368 = vadd.f32 %v3297, %v3305
        %v3369 = vadd.f32 %v3298, %v3305
        %v3370 = vadd.f32 %v3299, %v3305
        %v3371 = vmax.f32 %v3307, 0.0
        %v3372 = vmax.f32 %v3308, 0.0
        %v3373 = vmax.f32 %v3309, 0.0
        %v3374 = vmax.f32 %v3310, 0.0
        %v3375 = vmax.f32 %v3311, 0.0
        %v3376 = vmax.f32 %v3312, 0.0
        %v3377 = vmax.f32 %v3313, 0.0
        %v3378 = vmax.f32 %v3314, 0.0
        %v3379 = vmax.f32 %v3315, 0.0
        %v3380 = vmax.f32 %v3316, 0.0
        %v3381 = vmax.f32 %v3317, 0.0
        %v3382 = vmax.f32 %v3318, 0.0
        %v3383 = vmax.f32 %v3319, 0.0
        %v3384 = vmax.f32 %v3320, 0.0
        %v3385 = vmax.f32 %v3321, 0.0
        %v3386 = vmax.f32 %v3322, 0.0
        %v3387 = vmax.f32 %v3323, 0.0
        %v3388 = vmax.f32 %v3324, 0.0
        %v3389 = vmax.f32 %v3325, 0.0
        %v3390 = vmax.f32 %v3326, 0.0
        %v3391 = vmax.f32 %v3327, 0.0
        %v3392 = vmax.f32 %v3328, 0.0
        %v3393 = vmax.f32 %v3329, 0.0
        %v3394 = vmax.f32 %v3330, 0.0
        %v3395 = vmax.f32 %v3331, 0.0
        %v3396 = vmax.f32 %v3332, 0.0
        %v3397 = vmax.f32 %v3333, 0.0
        %v3398 = vmax.f32 %v3334, 0.0
        %v3399 = vmax.f32 %v3335, 0.0
        %v3400 = vmax.f32 %v3336, 0.0
        %v3401 = vmax.f32 %v3337, 0.0
        %v3402 = vmax.f32 %v3338, 0.0
        %v3403 = vmax.f32 %v3339, 0.0
        %v3404 = vmax.f32 %v3340, 0.0
        %v3405 = vmax.f32 %v3341, 0.0
        %v3406 = vmax.f32 %v3342, 0.0
        %v3407 = vmax.f32 %v3343, 0.0
        %v3408 = vmax.f32 %v3344, 0.0
        %v3409 = vmax.f32 %v3345, 0.0
        %v3410 = vmax.f32 %v3346, 0.0
        %v3411 = vmax.f32 %v3347, 0.0
        %v3412 = vmax.f32 %v3348, 0.0
        %v3413 = vmax.f32 %v3349, 0.0
        %v3414 = vmax.f32 %v3350, 0.0
        %v3415 = vmax.f32 %v3351, 0.0
        %v3416 = vmax.f32 %v3352, 0.0
        %v3417 = vmax.f32 %v3353, 0.0
        %v3418 = vmax.f32 %v3354, 0.0
        %v3419 = vmax.f32 %v3355, 0.0
        %v3420 = vmax.f32 %v3356, 0.0
        %v3421 = vmax.f32 %v3357, 0.0
        %v3422 = vmax.f32 %v3358, 0.0
        %v3423 = vmax.f32 %v3359, 0.0
        %v3424 = vmax.f32 %v3360, 0.0
        %v3425 = vmax.f32 %v3361, 0.0
        %v3426 = vmax.f32 %v3362, 0.0
        %v3427 = vmax.f32 %v3363, 0.0
        %v3428 = vmax.f32 %v3364, 0.0
        %v3429 = vmax.f32 %v3365, 0.0
        %v3430 = vmax.f32 %v3366, 0.0
        %v3431 = vmax.f32 %v3367, 0.0
        %v3432 = vmax.f32 %v3368, 0.0
        %v3433 = vmax.f32 %v3369, 0.0
        %v3434 = vmax.f32 %v3370, 0.0
        %3435 = vst [vmem:[%s379] sm:$0xff] %v3371
        %3436 = vst [vmem:[%s379 + $0x8] sm:$0xff] %v3372
        %3437 = vst [vmem:[%s379 + $0x10] sm:$0xff] %v3373
        %3438 = vst [vmem:[%s379 + $0x18] sm:$0xff] %v3374
        %3439 = vst [vmem:[%s379 + $0x20] sm:$0xff] %v3375
        %3440 = vst [vmem:[%s379 + $0x28] sm:$0xff] %v3376
        %3441 = vst [vmem:[%s379 + $0x30] sm:$0xff] %v3377
        %3442 = vst [vmem:[%s379 + $0x38] sm:$0xff] %v3378
        %3443 = vst [vmem:[%s379 + $0x40] sm:$0xff] %v3379
        %3444 = vst [vmem:[%s379 + $0x48] sm:$0xff] %v3380
        %3445 = vst [vmem:[%s379 + $0x50] sm:$0xff] %v3381
        %3446 = vst [vmem:[%s379 + $0x58] sm:$0xff] %v3382
        %3447 = vst [vmem:[%s379 + $0x60] sm:$0xff] %v3383
        %3448 = vst [vmem:[%s379 + $0x68] sm:$0xff] %v3384
        %3449 = vst [vmem:[%s379 + $0x70] sm:$0xff] %v3385
        %3450 = vst [vmem:[%s379 + $0x78] sm:$0xff] %v3386
        %3451 = vst [vmem:[%s379 + $0x80] sm:$0xff] %v3387
        %3452 = vst [vmem:[%s379 + $0x88] sm:$0xff] %v3388
        %3453 = vst [vmem:[%s379 + $0x90] sm:$0xff] %v3389
        %3454 = vst [vmem:[%s379 + $0x98] sm:$0xff] %v3390
        %3455 = vst [vmem:[%s379 + $0xa0] sm:$0xff] %v3391
        %3456 = vst [vmem:[%s379 + $0xa8] sm:$0xff] %v3392
        %3457 = vst [vmem:[%s379 + $0xb0] sm:$0xff] %v3393
        %3458 = vst [vmem:[%s379 + $0xb8] sm:$0xff] %v3394
        %3459 = vst [vmem:[%s379 + $0xc0] sm:$0xff] %v3395
        %3460 = vst [vmem:[%s379 + $0xc8] sm:$0xff] %v3396
        %3461 = vst [vmem:[%s379 + $0xd0] sm:$0xff] %v3397
        %3462 = vst [vmem:[%s379 + $0xd8] sm:$0xff] %v3398
        %3463 = vst [vmem:[%s379 + $0xe0] sm:$0xff] %v3399
        %3464 = vst [vmem:[%s379 + $0xe8] sm:$0xff] %v3400
        %3465 = vst [vmem:[%s379 + $0xf0] sm:$0xff] %v3401
        %3466 = vst [vmem:[%s379 + $0xf8] sm:$0xff] %v3402
        %3467 = vst [vmem:[%s379 + $0x100] sm:$0xff] %v3403
        %3468 = vst [vmem:[%s379 + $0x108] sm:$0xff] %v3404
        %3469 = vst [vmem:[%s379 + $0x110] sm:$0xff] %v3405
        %3470 = vst [vmem:[%s379 + $0x118] sm:$0xff] %v3406
        %3471 = vst [vmem:[%s379 + $0x120] sm:$0xff] %v3407
        %3472 = vst [vmem:[%s379 + $0x128] sm:$0xff] %v3408
        %3473 = vst [vmem:[%s379 + $0x130] sm:$0xff] %v3409
        %3474 = vst [vmem:[%s379 + $0x138] sm:$0xff] %v3410
        %3475 = vst [vmem:[%s379 + $0x140] sm:$0xff] %v3411
        %3476 = vst [vmem:[%s379 + $0x148] sm:$0xff] %v3412
        %3477 = vst [vmem:[%s379 + $0x150] sm:$0xff] %v3413
        %3478 = vst [vmem:[%s379 + $0x158] sm:$0xff] %v3414
        %3479 = vst [vmem:[%s379 + $0x160] sm:$0xff] %v3415
        %3480 = vst [vmem:[%s379 + $0x168] sm:$0xff] %v3416
        %3481 = vst [vmem:[%s379 + $0x170] sm:$0xff] %v3417
        %3482 = vst [vmem:[%s379 + $0x178] sm:$0xff] %v3418
        %3483 = vst [vmem:[%s379 + $0x180] sm:$0xff] %v3419
        %3484 = vst [vmem:[%s379 + $0x188] sm:$0xff] %v3420
        %3485 = vst [vmem:[%s379 + $0x190] sm:$0xff] %v3421
        %3486 = vst [vmem:[%s379 + $0x198] sm:$0xff] %v3422
        %3487 = vst [vmem:[%s379 + $0x1a0] sm:$0xff] %v3423
        %3488 = vst [vmem:[%s379 + $0x1a8] sm:$0xff] %v3424
        %3489 = vst [vmem:[%s379 + $0x1b0] sm:$0xff] %v3425
        %3490 = vst [vmem:[%s379 + $0x1b8] sm:$0xff] %v3426
        %3491 = vst [vmem:[%s379 + $0x1c0] sm:$0xff] %v3427
        %3492 = vst [vmem:[%s379 + $0x1c8] sm:$0xff] %v3428
        %3493 = vst [vmem:[%s379 + $0x1d0] sm:$0xff] %v3429
        %3494 = vst [vmem:[%s379 + $0x1d8] sm:$0xff] %v3430
        %3495 = vst [vmem:[%s379 + $0x1e0] sm:$0xff] %v3431
        %3496 = vst [vmem:[%s379 + $0x1e8] sm:$0xff] %v3432
        %3497 = vst [vmem:[%s379 + $0x1f0] sm:$0xff] %v3433
        %3498 = vst [vmem:[%s379 + $0x1f8] sm:$0xff] %v3434
        %s3499 = sand.u32 %s229, 1
        %s3500 = scalar_lea.sflag [#allocation4], %s3499
        %s3501 = sand.u32 %s229, 1
        %s3502 = smul.addr %s3501, 512
        %s3503 = scalar_lea.vmem [#allocation8], %s3502
        // Predicated region
        $region69: #{tpu_custom_call.1} parent=55 // pred_check
          %p3504 = pneg %p239
        $region70: #{tpu_custom_call.1} parent=55 // pred_check_branch
          %3506 = sbr.rel (%p3504) target = $region72
        $region71: #{tpu_custom_call.1} parent=55 // pred_region
          %s3507 = smul.u32 64, %s27
          %s3509 = ssub.s32 8192, 8192
          %3510 = vsyncadd %s3500, %s3509
          %s3511 = smul.addr %s3507, 128
          %s3512 = scalar_lea.hbm %s9, %s3511
          %s3513 = sshll.u32 %s3503, 4
          %s3514 = int_to_ptr.vmem [resolvable:$true] %s3513
          %3519 = dma.vmem_to_hbm [thread:$0]  %s3514, 8192, %s3512, %s3500, 128, 128, 8
        $region72: #{tpu_custom_call.1} parent=55 // pred_fallthru
          _
      $region56: #{tpu_custom_call.1} parent=5 // pred_fallthru
        _
      %p3520 = scmp.le.s32.totalorder 2, %s22
      // Predicated region
      $region73: #{tpu_custom_call.1} parent=5 // pred_check
        %p3521 = pneg %p3520
      $region74: #{tpu_custom_call.1} parent=5 // pred_check_branch
        %3523 = sbr.rel (%p3521) target = $region76
      $region75: #{tpu_custom_call.1} parent=5 // pred_region
        %s3524 = ssub.s32 %s22, 2
        // Predicated region
        $region77: #{tpu_custom_call.1} parent=75 // pred_check
          %p3525 = pneg %p245
        $region78: #{tpu_custom_call.1} parent=75 // pred_check_branch
          %3527 = sbr.rel (%p3525) target = $region80
        $region79: #{tpu_custom_call.1} parent=75 // pred_region
          %s3528 = sand.u32 %s230, 1
          %s3529 = scalar_lea.sflag [#allocation4], %s3528
          %s3530 = sand.u32 %s230, 1
          %s3531 = smul.addr %s3530, 512
          %s3532 = scalar_lea.vmem [#allocation8], %s3531
          %3533 = dma.done %s3529, 8192
        $region80: #{tpu_custom_call.1} parent=75 // pred_fallthru
          _
      $region76: #{tpu_custom_call.1} parent=5 // pred_fallthru
        _
    $region6: #{tpu_custom_call.1} parent=1 // loop_footer
      %s26 = sadd.s32 1, %s22
    $region7: #{tpu_custom_call.1} parent=1 // loop_footer_branch
      %21 = sbr.rel target = $region3
    $region8: #{tpu_custom_call.1} parent=1 // loop_exit
      _
    %3534 = vsyncpa [#allocation3], 1
    %s3535 = scalar_lea.sflag [#allocation3], 1
    %3536 = vsyncpa %s3535, 1
    %3537 = vsyncpa [#allocation6], 1
    %3538 = vsyncpa [#allocation4], 1
    %s3539 = scalar_lea.sflag [#allocation4], 1
    %3540 = vsyncpa %s3539, 1

</llo_original>
